<compile_context>
chip_gen: v7x
topology: tpu7x:2x2x1
jax: 0.10.0
libtpu: 0.0.40
codegen_flags: <defaults>
</compile_context>

<pallas_src>
import functools

import jax
import jax.numpy as jnp
from jax.experimental import pallas as pl
from jax.experimental.pallas import tpu as pltpu


def nn_conv_upsampling_kernel(wdw_sref, wpw_sref, x_ref, selw_ref, selh_ref,
                              o_ref, colup_ref, *, kernel_size, up_size):
    """One batch group (Nb images, lane-concatenated) per grid step.

    wdw_sref : SMEM (Cin*K*K,)        depthwise weights, flattened
    wpw_sref : SMEM (Cout*Cin,)       pointwise weights, flattened
    x_ref    : (1, Cin, H, Nb*W)      input block, images concatenated on lanes
    selw_ref : (Nb*W, Nb*Wo)          block-diagonal 0/1 column-upsample matrix
    selh_ref : (Ho, H)                0/1 row-upsample matrix
    o_ref    : (1, Cout, upH, Wv)     output block, Wv = Nb*Wo - (K-1)
    colup_ref: VMEM (Cin, H, Nb*Wo)   scratch: column-upsampled activations
    """
    K = kernel_size
    upH, upW = up_size
    _, Cin, H, NbW = x_ref.shape
    NbWo = colup_ref.shape[-1]
    Wv = NbWo - (K - 1)
    Cout = o_ref.shape[1]
    f32 = jnp.float32

    # Width-direction NN upsample for all channels at once: a single MXU matmul
    # against the block-diagonal selection matrix, which also lays the Nb images
    # out contiguously along the lane axis (no in-kernel transposes).
    x2d = x_ref[0].reshape(Cin * H, NbW).astype(f32)
    colup_ref[...] = jnp.dot(x2d, selw_ref[...],
                             preferred_element_type=f32).reshape(Cin, H, NbWo)

    o_ref[...] = jnp.zeros_like(o_ref)
    sel_h = selh_ref[...]                                    # (Ho, H), hoisted

    def channel_body(c, carry):
        # Height-direction NN upsample for channel c: (Ho,H) @ (H, Nb*Wo), MXU.
        up_c = jnp.dot(sel_h, colup_ref[c], preferred_element_type=f32)  # (Ho, NbWo)

        # Depthwise KxK valid conv: K*K shifted-window VPU FMAs; per-tap weight
        # is an SMEM scalar read + splat.  Accumulator initialized by first tap.
        acc = None
        for dy in range(K):
            rows = up_c[dy:dy + upH, :]                      # one sublane shift per dy
            for dx in range(K):
                w = wdw_sref[c * (K * K) + dy * K + dx]
                tap = rows[:, dx:dx + Wv] * w
                acc = tap if acc is None else acc + tap

        # Pointwise 1x1 conv: accumulate this channel's contribution into the
        # lane-dense output block (VMEM); HBM writeback happens once per step.
        for co in range(Cout):
            o_ref[0, co] = o_ref[0, co] + acc * wpw_sref[co * Cin + c]
        return carry

    jax.lax.fori_loop(0, Cin, channel_body, 0)


def nn_conv_upsampling(x, w_dw, w_pw, *, kernel_size, up_size, batch_block=None):
    """x: (N, Cin, H, W).  PyTorch weight layouts:
       w_dw: (Cin, 1, K, K) depthwise,  w_pw: (Cout, Cin, 1, 1) pointwise."""
    N, Cin, H, W = x.shape
    Cout = w_pw.shape[0]
    K = int(kernel_size)
    upH, upW = int(up_size[0]), int(up_size[1])
    Ho, Wo = upH + K - 1, upW + K - 1

    # Batch group size: biggest block that still leaves >= 2 grid steps so the
    # "parallel" axis can use both v7x TensorCores, and a wide lane axis.
    if batch_block is None:
        Nb = N // 2 if N % 2 == 0 else N
    else:
        Nb = int(batch_block)
    assert N % Nb == 0, "batch must be divisible by batch_block"
    G = N // Nb
    NbW, NbWo = Nb * W, Nb * Wo
    Wv = NbWo - (K - 1)   # image n's valid output columns live at n*Wo + [0, upW)

    # PyTorch UpsamplingNearest2d(size=...): src index = floor(dst * in / out).
    rh = (jnp.arange(Ho, dtype=jnp.int32) * H) // Ho
    rw = (jnp.arange(Wo, dtype=jnp.int32) * W) // Wo
    sel_h = jax.nn.one_hot(rh, H, dtype=jnp.float32)                   # (Ho, H)
    sel_w_t = jax.nn.one_hot(rw, W, dtype=jnp.float32).T               # (W, Wo)
    selw_bd = jnp.kron(jnp.eye(Nb, dtype=jnp.float32), sel_w_t)        # (Nb*W, Nb*Wo)

    wdw_flat = w_dw[:, 0].astype(jnp.float32).reshape(Cin * K * K)     # -> SMEM
    wpw_flat = w_pw[:, :, 0, 0].astype(jnp.float32).reshape(Cout * Cin)

    # (G, Cin, H, Nb*W): the Nb images of each group concatenated along lanes.
    # (astype is a no-op for the f32 demo; for bf16 activations cast in-kernel.)
    x_r = (x.astype(jnp.float32)
             .reshape(G, Nb, Cin, H, W)
             .transpose(0, 2, 3, 1, 4)
             .reshape(G, Cin, H, NbW))

    flops = G * (2 * (Cin * H) * NbW * NbWo                  # column-upsample matmul
                 + Cin * 2 * Ho * H * NbWo                   # row-upsample matmuls
                 + Cin * K * K * 2 * upH * Wv                # depthwise taps
                 + Cin * Cout * 2 * upH * Wv)                # pointwise
    bytes_accessed = 4 * (x_r.size + selw_bd.size + sel_h.size + wdw_flat.size
                          + wpw_flat.size + G * Cout * upH * Wv)

    kernel = functools.partial(nn_conv_upsampling_kernel,
                               kernel_size=K, up_size=(upH, upW))

    out_pad = pl.pallas_call(
        kernel,
        out_shape=jax.ShapeDtypeStruct((G, Cout, upH, Wv), jnp.float32),
        grid_spec=pltpu.PrefetchScalarGridSpec(
            num_scalar_prefetch=2,                           # wdw_flat, wpw_flat -> SMEM
            grid=(G,),
            in_specs=[
                pl.BlockSpec((1, Cin, H, NbW), lambda g, wdw, wpw: (g, 0, 0, 0)),
                pl.BlockSpec((NbW, NbWo), lambda g, wdw, wpw: (0, 0)),
                pl.BlockSpec((Ho, H), lambda g, wdw, wpw: (0, 0)),
            ],
            out_specs=pl.BlockSpec((1, Cout, upH, Wv),
                                   lambda g, wdw, wpw: (g, 0, 0, 0)),
            scratch_shapes=[pltpu.VMEM((Cin, H, NbWo), jnp.float32)],
        ),
        compiler_params=pltpu.CompilerParams(
            dimension_semantics=("parallel",),
            vmem_limit_bytes=48 * 1024 * 1024),
        cost_estimate=pl.CostEstimate(flops=flops, transcendentals=0,
                                      bytes_accessed=bytes_accessed),
    )(wdw_flat, wpw_flat, x_r, selw_bd, sel_h)

    # Lane-dense padded output -> (N, Cout, upH, upW): layout plumbing on a small
    # tensor, done once in the wrapper.
    cols = (jnp.arange(Nb)[:, None] * Wo + jnp.arange(upW)[None, :]).reshape(-1)
    out = jnp.take(out_pad, cols, axis=3)                    # (G, Cout, upH, Nb*upW)
    out = out.reshape(G, Cout, upH, Nb, upW).transpose(0, 3, 1, 2, 4)
    return out.reshape(N, Cout, upH, upW)


def _reference(x, w_dw, w_pw, *, kernel_size, up_size):
    """Pure-JAX reference of NNConvUpsampling.forward (nearest + valid convs)."""
    K = kernel_size
    upH, upW = up_size
    N, Cin, H, W = x.shape
    Ho, Wo = upH + K - 1, upW + K - 1
    rh = (jnp.arange(Ho) * H) // Ho
    rw = (jnp.arange(Wo) * W) // Wo
    up = x[:, :, rh, :][:, :, :, rw]
    dw = jax.lax.conv_general_dilated(
        up, w_dw, window_strides=(1, 1), padding='VALID',
        feature_group_count=Cin,
        dimension_numbers=('NCHW', 'OIHW', 'NCHW'))
    return jax.lax.conv_general_dilated(
        dw, w_pw, window_strides=(1, 1), padding='VALID',
        dimension_numbers=('NCHW', 'OIHW', 'NCHW'))


if __name__ == "__main__":
    N, Cin, Cout, H, W, K = 16, 4, 8, 16, 16, 5
    up_size = (32, 32)   # 2x NN upsampling, as used in the StereoSpike decoder

    key = jax.random.PRNGKey(0)
    k1, k2, k3 = jax.random.split(key, 3)
    x = jax.random.normal(k1, (N, Cin, H, W), jnp.float32)
    w_dw = jax.random.normal(k2, (Cin, 1, K, K), jnp.float32) / (K * K) ** 0.5
    w_pw = jax.random.normal(k3, (Cout, Cin, 1, 1), jnp.float32) / Cin ** 0.5

    # batch_block=8: grid=(2,) "parallel" steps, per-step lane width 8*36 = 288.
    out = nn_conv_upsampling(x, w_dw, w_pw, kernel_size=K, up_size=up_size,
                             batch_block=8)
    out = jax.block_until_ready(out)
    assert out.shape == (N, Cout, up_size[0], up_size[1])
    assert out.dtype == jnp.float32

    ref = jax.block_until_ready(
        _reference(x, w_dw, w_pw, kernel_size=K, up_size=up_size))
    err = float(jnp.max(jnp.abs(out - ref)))
    assert jnp.allclose(out, ref, rtol=1e-3, atol=1e-3), err
    print("KERNEL_OK")
</pallas_src>

<mosaic_0001>
module attributes {stable_mosaic.version = 11 : i64} {
  func.func @nn_conv_upsampling_kernel(%arg0: i32, %arg1: memref<100xf32, #tpu.memory_space<smem>>, %arg2: memref<32xf32, #tpu.memory_space<smem>>, %arg3: memref<1x4x16x128xf32, #tpu.memory_space<vmem>>, %arg4: memref<128x288xf32, #tpu.memory_space<vmem>>, %arg5: memref<36x16xf32, #tpu.memory_space<vmem>>, %arg6: memref<1x8x32x284xf32, #tpu.memory_space<vmem>>, %arg7: memref<4x16x288xf32, #tpu.memory_space<vmem>>) attributes {dimension_semantics = [#tpu.dimension_semantics<parallel>], iteration_bounds = array<i64: 2>, scalar_prefetch = 2 : i64, scratch_operands = 1 : i64, tpu.core_type = #tpu.core_type<tc>, window_params = [{transform_indices = @transform_0, window_bounds = array<i64: 1, 4, 16, 128>}, {pipeline_mode = #tpu.pipeline_mode<synchronous>, transform_indices = @transform_1, window_bounds = array<i64: 128, 288>}, {pipeline_mode = #tpu.pipeline_mode<synchronous>, transform_indices = @transform_2, window_bounds = array<i64: 36, 16>}, {transform_indices = @transform_3, window_bounds = array<i64: 1, 8, 32, 284>}]} {
    %c0 = arith.constant 0 : index
    %c0_0 = arith.constant 0 : index
    %c0_1 = arith.constant 0 : index
    %c0_2 = arith.constant 0 : index
    %0 = vector.load %arg3[%c0, %c0_0, %c0_1, %c0_2] : memref<1x4x16x128xf32, #tpu.memory_space<vmem>>, vector<1x4x16x128xf32>
    %1 = vector.shape_cast %0 : vector<1x4x16x128xf32> to vector<4x16x128xf32>
    %2 = vector.shape_cast %1 : vector<4x16x128xf32> to vector<64x128xf32>
    %c0_3 = arith.constant 0 : index
    %c0_4 = arith.constant 0 : index
    %3 = vector.load %arg4[%c0_3, %c0_4] : memref<128x288xf32, #tpu.memory_space<vmem>>, vector<128x288xf32>
    %cst = arith.constant dense<0.000000e+00> : vector<64x288xf32>
    %4 = tpu.matmul %2, %3, %cst {dimension_numbers = #tpu.dot_dimension_numbers<[1], [0], [0], [1], [0, 0, 1, 1], [], []>} : vector<64x128xf32>, vector<128x288xf32>, vector<64x288xf32> -> vector<64x288xf32>
    %5 = vector.shape_cast %4 : vector<64x288xf32> to vector<4x16x288xf32>
    %c0_5 = arith.constant 0 : index
    %c0_6 = arith.constant 0 : index
    %c0_7 = arith.constant 0 : index
    %6 = vector.load %arg7[%c0_5, %c0_6, %c0_7] : memref<4x16x288xf32, #tpu.memory_space<vmem>>, vector<4x16x288xf32>
    tpu.vector_store %arg7[%c0_5, %c0_6, %c0_7], %5 {strides = array<i32>} : memref<4x16x288xf32, #tpu.memory_space<vmem>>, vector<4x16x288xf32>,
    %cst_8 = arith.constant 0.000000e+00 : f32
    %7 = vector.broadcast %cst_8 : f32 to vector<1x8x32x284xf32>
    %c0_9 = arith.constant 0 : index
    %c0_10 = arith.constant 0 : index
    %c0_11 = arith.constant 0 : index
    %c0_12 = arith.constant 0 : index
    %8 = vector.load %arg6[%c0_9, %c0_10, %c0_11, %c0_12] : memref<1x8x32x284xf32, #tpu.memory_space<vmem>>, vector<1x8x32x284xf32>
    tpu.vector_store %arg6[%c0_9, %c0_10, %c0_11, %c0_12], %7 {strides = array<i32>} : memref<1x8x32x284xf32, #tpu.memory_space<vmem>>, vector<1x8x32x284xf32>,
    %c0_13 = arith.constant 0 : index
    %c0_14 = arith.constant 0 : index
    %9 = vector.load %arg5[%c0_13, %c0_14] : memref<36x16xf32, #tpu.memory_space<vmem>>, vector<36x16xf32>
    %c0_i32 = arith.constant 0 : i32
    %c4_i32 = arith.constant 4 : i32
    %10 = arith.addi %c0_i32, %c4_i32 : i32
    %c1_i32 = arith.constant 1 : i32
    scf.for %arg8 = %c0_i32 to %10 step %c1_i32  : i32 {
      %11 = arith.index_cast %arg8 : i32 to index
      %c0_16 = arith.constant 0 : index
      %c0_17 = arith.constant 0 : index
      %12 = vector.load %arg7[%11, %c0_16, %c0_17] : memref<4x16x288xf32, #tpu.memory_space<vmem>>, vector<1x16x288xf32>
      %13 = vector.shape_cast %12 : vector<1x16x288xf32> to vector<16x288xf32>
      %cst_18 = arith.constant dense<0.000000e+00> : vector<36x288xf32>
      %14 = tpu.matmul %9, %13, %cst_18 {dimension_numbers = #tpu.dot_dimension_numbers<[1], [0], [0], [1], [0, 0, 1, 1], [], []>} : vector<36x16xf32>, vector<16x288xf32>, vector<36x288xf32> -> vector<36x288xf32>
      %15 = vector.extract_strided_slice %14 {offsets = [0, 0], sizes = [32, 288], strides = [1, 1]} : vector<36x288xf32> to vector<32x288xf32>
      %c25_i32 = arith.constant 25 : i32
      %16 = arith.muli %arg8, %c25_i32 : i32
      %c0_i32_19 = arith.constant 0 : i32
      %17 = arith.addi %16, %c0_i32_19 : i32
      %c0_i32_20 = arith.constant 0 : i32
      %18 = arith.addi %17, %c0_i32_20 : i32
      %19 = arith.index_cast %18 : i32 to index
      %20 = memref.load %arg1[%19] : memref<100xf32, #tpu.memory_space<smem>>
      %21 = vector.extract_strided_slice %15 {offsets = [0, 0], sizes = [32, 284], strides = [1, 1]} : vector<32x288xf32> to vector<32x284xf32>
      %22 = vector.broadcast %20 : f32 to vector<32x284xf32>
      %23 = arith.mulf %21, %22 : vector<32x284xf32>
      %c25_i32_21 = arith.constant 25 : i32
      %24 = arith.muli %arg8, %c25_i32_21 : i32
      %c0_i32_22 = arith.constant 0 : i32
      %25 = arith.addi %24, %c0_i32_22 : i32
      %c1_i32_23 = arith.constant 1 : i32
      %26 = arith.addi %25, %c1_i32_23 : i32
      %27 = arith.index_cast %26 : i32 to index
      %28 = memref.load %arg1[%27] : memref<100xf32, #tpu.memory_space<smem>>
      %29 = vector.extract_strided_slice %15 {offsets = [0, 1], sizes = [32, 284], strides = [1, 1]} : vector<32x288xf32> to vector<32x284xf32>
      %30 = vector.broadcast %28 : f32 to vector<32x284xf32>
      %31 = arith.mulf %29, %30 : vector<32x284xf32>
      %32 = arith.addf %23, %31 : vector<32x284xf32>
      %c25_i32_24 = arith.constant 25 : i32
      %33 = arith.muli %arg8, %c25_i32_24 : i32
      %c0_i32_25 = arith.constant 0 : i32
      %34 = arith.addi %33, %c0_i32_25 : i32
      %c2_i32 = arith.constant 2 : i32
      %35 = arith.addi %34, %c2_i32 : i32
      %36 = arith.index_cast %35 : i32 to index
      %37 = memref.load %arg1[%36] : memref<100xf32, #tpu.memory_space<smem>>
      %38 = vector.extract_strided_slice %15 {offsets = [0, 2], sizes = [32, 284], strides = [1, 1]} : vector<32x288xf32> to vector<32x284xf32>
      %39 = vector.broadcast %37 : f32 to vector<32x284xf32>
      %40 = arith.mulf %38, %39 : vector<32x284xf32>
      %41 = arith.addf %32, %40 : vector<32x284xf32>
      %c25_i32_26 = arith.constant 25 : i32
      %42 = arith.muli %arg8, %c25_i32_26 : i32
      %c0_i32_27 = arith.constant 0 : i32
      %43 = arith.addi %42, %c0_i32_27 : i32
      %c3_i32 = arith.constant 3 : i32
      %44 = arith.addi %43, %c3_i32 : i32
      %45 = arith.index_cast %44 : i32 to index
      %46 = memref.load %arg1[%45] : memref<100xf32, #tpu.memory_space<smem>>
      %47 = vector.extract_strided_slice %15 {offsets = [0, 3], sizes = [32, 284], strides = [1, 1]} : vector<32x288xf32> to vector<32x284xf32>
      %48 = vector.broadcast %46 : f32 to vector<32x284xf32>
      %49 = arith.mulf %47, %48 : vector<32x284xf32>
      %50 = arith.addf %41, %49 : vector<32x284xf32>
      %c25_i32_28 = arith.constant 25 : i32
      %51 = arith.muli %arg8, %c25_i32_28 : i32
      %c0_i32_29 = arith.constant 0 : i32
      %52 = arith.addi %51, %c0_i32_29 : i32
      %c4_i32_30 = arith.constant 4 : i32
      %53 = arith.addi %52, %c4_i32_30 : i32
      %54 = arith.index_cast %53 : i32 to index
      %55 = memref.load %arg1[%54] : memref<100xf32, #tpu.memory_space<smem>>
      %56 = vector.extract_strided_slice %15 {offsets = [0, 4], sizes = [32, 284], strides = [1, 1]} : vector<32x288xf32> to vector<32x284xf32>
      %57 = vector.broadcast %55 : f32 to vector<32x284xf32>
      %58 = arith.mulf %56, %57 : vector<32x284xf32>
      %59 = arith.addf %50, %58 : vector<32x284xf32>
      %60 = vector.extract_strided_slice %14 {offsets = [1, 0], sizes = [32, 288], strides = [1, 1]} : vector<36x288xf32> to vector<32x288xf32>
      %c25_i32_31 = arith.constant 25 : i32
      %61 = arith.muli %arg8, %c25_i32_31 : i32
      %c5_i32 = arith.constant 5 : i32
      %62 = arith.addi %61, %c5_i32 : i32
      %c0_i32_32 = arith.constant 0 : i32
      %63 = arith.addi %62, %c0_i32_32 : i32
      %64 = arith.index_cast %63 : i32 to index
      %65 = memref.load %arg1[%64] : memref<100xf32, #tpu.memory_space<smem>>
      %66 = vector.extract_strided_slice %60 {offsets = [0, 0], sizes = [32, 284], strides = [1, 1]} : vector<32x288xf32> to vector<32x284xf32>
      %67 = vector.broadcast %65 : f32 to vector<32x284xf32>
      %68 = arith.mulf %66, %67 : vector<32x284xf32>
      %69 = arith.addf %59, %68 : vector<32x284xf32>
      %c25_i32_33 = arith.constant 25 : i32
      %70 = arith.muli %arg8, %c25_i32_33 : i32
      %c5_i32_34 = arith.constant 5 : i32
      %71 = arith.addi %70, %c5_i32_34 : i32
      %c1_i32_35 = arith.constant 1 : i32
      %72 = arith.addi %71, %c1_i32_35 : i32
      %73 = arith.index_cast %72 : i32 to index
      %74 = memref.load %arg1[%73] : memref<100xf32, #tpu.memory_space<smem>>
      %75 = vector.extract_strided_slice %60 {offsets = [0, 1], sizes = [32, 284], strides = [1, 1]} : vector<32x288xf32> to vector<32x284xf32>
      %76 = vector.broadcast %74 : f32 to vector<32x284xf32>
      %77 = arith.mulf %75, %76 : vector<32x284xf32>
      %78 = arith.addf %69, %77 : vector<32x284xf32>
      %c25_i32_36 = arith.constant 25 : i32
      %79 = arith.muli %arg8, %c25_i32_36 : i32
      %c5_i32_37 = arith.constant 5 : i32
      %80 = arith.addi %79, %c5_i32_37 : i32
      %c2_i32_38 = arith.constant 2 : i32
      %81 = arith.addi %80, %c2_i32_38 : i32
      %82 = arith.index_cast %81 : i32 to index
      %83 = memref.load %arg1[%82] : memref<100xf32, #tpu.memory_space<smem>>
      %84 = vector.extract_strided_slice %60 {offsets = [0, 2], sizes = [32, 284], strides = [1, 1]} : vector<32x288xf32> to vector<32x284xf32>
      %85 = vector.broadcast %83 : f32 to vector<32x284xf32>
      %86 = arith.mulf %84, %85 : vector<32x284xf32>
      %87 = arith.addf %78, %86 : vector<32x284xf32>
      %c25_i32_39 = arith.constant 25 : i32
      %88 = arith.muli %arg8, %c25_i32_39 : i32
      %c5_i32_40 = arith.constant 5 : i32
      %89 = arith.addi %88, %c5_i32_40 : i32
      %c3_i32_41 = arith.constant 3 : i32
      %90 = arith.addi %89, %c3_i32_41 : i32
      %91 = arith.index_cast %90 : i32 to index
      %92 = memref.load %arg1[%91] : memref<100xf32, #tpu.memory_space<smem>>
      %93 = vector.extract_strided_slice %60 {offsets = [0, 3], sizes = [32, 284], strides = [1, 1]} : vector<32x288xf32> to vector<32x284xf32>
      %94 = vector.broadcast %92 : f32 to vector<32x284xf32>
      %95 = arith.mulf %93, %94 : vector<32x284xf32>
      %96 = arith.addf %87, %95 : vector<32x284xf32>
      %c25_i32_42 = arith.constant 25 : i32
      %97 = arith.muli %arg8, %c25_i32_42 : i32
      %c5_i32_43 = arith.constant 5 : i32
      %98 = arith.addi %97, %c5_i32_43 : i32
      %c4_i32_44 = arith.constant 4 : i32
      %99 = arith.addi %98, %c4_i32_44 : i32
      %100 = arith.index_cast %99 : i32 to index
      %101 = memref.load %arg1[%100] : memref<100xf32, #tpu.memory_space<smem>>
      %102 = vector.extract_strided_slice %60 {offsets = [0, 4], sizes = [32, 284], strides = [1, 1]} : vector<32x288xf32> to vector<32x284xf32>
      %103 = vector.broadcast %101 : f32 to vector<32x284xf32>
      %104 = arith.mulf %102, %103 : vector<32x284xf32>
      %105 = arith.addf %96, %104 : vector<32x284xf32>
      %106 = vector.extract_strided_slice %14 {offsets = [2, 0], sizes = [32, 288], strides = [1, 1]} : vector<36x288xf32> to vector<32x288xf32>
      %c25_i32_45 = arith.constant 25 : i32
      %107 = arith.muli %arg8, %c25_i32_45 : i32
      %c10_i32 = arith.constant 10 : i32
      %108 = arith.addi %107, %c10_i32 : i32
      %c0_i32_46 = arith.constant 0 : i32
      %109 = arith.addi %108, %c0_i32_46 : i32
      %110 = arith.index_cast %109 : i32 to index
      %111 = memref.load %arg1[%110] : memref<100xf32, #tpu.memory_space<smem>>
      %112 = vector.extract_strided_slice %106 {offsets = [0, 0], sizes = [32, 284], strides = [1, 1]} : vector<32x288xf32> to vector<32x284xf32>
      %113 = vector.broadcast %111 : f32 to vector<32x284xf32>
      %114 = arith.mulf %112, %113 : vector<32x284xf32>
      %115 = arith.addf %105, %114 : vector<32x284xf32>
      %c25_i32_47 = arith.constant 25 : i32
      %116 = arith.muli %arg8, %c25_i32_47 : i32
      %c10_i32_48 = arith.constant 10 : i32
      %117 = arith.addi %116, %c10_i32_48 : i32
      %c1_i32_49 = arith.constant 1 : i32
      %118 = arith.addi %117, %c1_i32_49 : i32
      %119 = arith.index_cast %118 : i32 to index
      %120 = memref.load %arg1[%119] : memref<100xf32, #tpu.memory_space<smem>>
      %121 = vector.extract_strided_slice %106 {offsets = [0, 1], sizes = [32, 284], strides = [1, 1]} : vector<32x288xf32> to vector<32x284xf32>
      %122 = vector.broadcast %120 : f32 to vector<32x284xf32>
      %123 = arith.mulf %121, %122 : vector<32x284xf32>
      %124 = arith.addf %115, %123 : vector<32x284xf32>
      %c25_i32_50 = arith.constant 25 : i32
      %125 = arith.muli %arg8, %c25_i32_50 : i32
      %c10_i32_51 = arith.constant 10 : i32
      %126 = arith.addi %125, %c10_i32_51 : i32
      %c2_i32_52 = arith.constant 2 : i32
      %127 = arith.addi %126, %c2_i32_52 : i32
      %128 = arith.index_cast %127 : i32 to index
      %129 = memref.load %arg1[%128] : memref<100xf32, #tpu.memory_space<smem>>
      %130 = vector.extract_strided_slice %106 {offsets = [0, 2], sizes = [32, 284], strides = [1, 1]} : vector<32x288xf32> to vector<32x284xf32>
      %131 = vector.broadcast %129 : f32 to vector<32x284xf32>
      %132 = arith.mulf %130, %131 : vector<32x284xf32>
      %133 = arith.addf %124, %132 : vector<32x284xf32>
      %c25_i32_53 = arith.constant 25 : i32
      %134 = arith.muli %arg8, %c25_i32_53 : i32
      %c10_i32_54 = arith.constant 10 : i32
      %135 = arith.addi %134, %c10_i32_54 : i32
      %c3_i32_55 = arith.constant 3 : i32
      %136 = arith.addi %135, %c3_i32_55 : i32
      %137 = arith.index_cast %136 : i32 to index
      %138 = memref.load %arg1[%137] : memref<100xf32, #tpu.memory_space<smem>>
      %139 = vector.extract_strided_slice %106 {offsets = [0, 3], sizes = [32, 284], strides = [1, 1]} : vector<32x288xf32> to vector<32x284xf32>
      %140 = vector.broadcast %138 : f32 to vector<32x284xf32>
      %141 = arith.mulf %139, %140 : vector<32x284xf32>
      %142 = arith.addf %133, %141 : vector<32x284xf32>
      %c25_i32_56 = arith.constant 25 : i32
      %143 = arith.muli %arg8, %c25_i32_56 : i32
      %c10_i32_57 = arith.constant 10 : i32
      %144 = arith.addi %143, %c10_i32_57 : i32
      %c4_i32_58 = arith.constant 4 : i32
      %145 = arith.addi %144, %c4_i32_58 : i32
      %146 = arith.index_cast %145 : i32 to index
      %147 = memref.load %arg1[%146] : memref<100xf32, #tpu.memory_space<smem>>
      %148 = vector.extract_strided_slice %106 {offsets = [0, 4], sizes = [32, 284], strides = [1, 1]} : vector<32x288xf32> to vector<32x284xf32>
      %149 = vector.broadcast %147 : f32 to vector<32x284xf32>
      %150 = arith.mulf %148, %149 : vector<32x284xf32>
      %151 = arith.addf %142, %150 : vector<32x284xf32>
      %152 = vector.extract_strided_slice %14 {offsets = [3, 0], sizes = [32, 288], strides = [1, 1]} : vector<36x288xf32> to vector<32x288xf32>
      %c25_i32_59 = arith.constant 25 : i32
      %153 = arith.muli %arg8, %c25_i32_59 : i32
      %c15_i32 = arith.constant 15 : i32
      %154 = arith.addi %153, %c15_i32 : i32
      %c0_i32_60 = arith.constant 0 : i32
      %155 = arith.addi %154, %c0_i32_60 : i32
      %156 = arith.index_cast %155 : i32 to index
      %157 = memref.load %arg1[%156] : memref<100xf32, #tpu.memory_space<smem>>
      %158 = vector.extract_strided_slice %152 {offsets = [0, 0], sizes = [32, 284], strides = [1, 1]} : vector<32x288xf32> to vector<32x284xf32>
      %159 = vector.broadcast %157 : f32 to vector<32x284xf32>
      %160 = arith.mulf %158, %159 : vector<32x284xf32>
      %161 = arith.addf %151, %160 : vector<32x284xf32>
      %c25_i32_61 = arith.constant 25 : i32
      %162 = arith.muli %arg8, %c25_i32_61 : i32
      %c15_i32_62 = arith.constant 15 : i32
      %163 = arith.addi %162, %c15_i32_62 : i32
      %c1_i32_63 = arith.constant 1 : i32
      %164 = arith.addi %163, %c1_i32_63 : i32
      %165 = arith.index_cast %164 : i32 to index
      %166 = memref.load %arg1[%165] : memref<100xf32, #tpu.memory_space<smem>>
      %167 = vector.extract_strided_slice %152 {offsets = [0, 1], sizes = [32, 284], strides = [1, 1]} : vector<32x288xf32> to vector<32x284xf32>
      %168 = vector.broadcast %166 : f32 to vector<32x284xf32>
      %169 = arith.mulf %167, %168 : vector<32x284xf32>
      %170 = arith.addf %161, %169 : vector<32x284xf32>
      %c25_i32_64 = arith.constant 25 : i32
      %171 = arith.muli %arg8, %c25_i32_64 : i32
      %c15_i32_65 = arith.constant 15 : i32
      %172 = arith.addi %171, %c15_i32_65 : i32
      %c2_i32_66 = arith.constant 2 : i32
      %173 = arith.addi %172, %c2_i32_66 : i32
      %174 = arith.index_cast %173 : i32 to index
      %175 = memref.load %arg1[%174] : memref<100xf32, #tpu.memory_space<smem>>
      %176 = vector.extract_strided_slice %152 {offsets = [0, 2], sizes = [32, 284], strides = [1, 1]} : vector<32x288xf32> to vector<32x284xf32>
      %177 = vector.broadcast %175 : f32 to vector<32x284xf32>
      %178 = arith.mulf %176, %177 : vector<32x284xf32>
      %179 = arith.addf %170, %178 : vector<32x284xf32>
      %c25_i32_67 = arith.constant 25 : i32
      %180 = arith.muli %arg8, %c25_i32_67 : i32
      %c15_i32_68 = arith.constant 15 : i32
      %181 = arith.addi %180, %c15_i32_68 : i32
      %c3_i32_69 = arith.constant 3 : i32
      %182 = arith.addi %181, %c3_i32_69 : i32
      %183 = arith.index_cast %182 : i32 to index
      %184 = memref.load %arg1[%183] : memref<100xf32, #tpu.memory_space<smem>>
      %185 = vector.extract_strided_slice %152 {offsets = [0, 3], sizes = [32, 284], strides = [1, 1]} : vector<32x288xf32> to vector<32x284xf32>
      %186 = vector.broadcast %184 : f32 to vector<32x284xf32>
      %187 = arith.mulf %185, %186 : vector<32x284xf32>
      %188 = arith.addf %179, %187 : vector<32x284xf32>
      %c25_i32_70 = arith.constant 25 : i32
      %189 = arith.muli %arg8, %c25_i32_70 : i32
      %c15_i32_71 = arith.constant 15 : i32
      %190 = arith.addi %189, %c15_i32_71 : i32
      %c4_i32_72 = arith.constant 4 : i32
      %191 = arith.addi %190, %c4_i32_72 : i32
      %192 = arith.index_cast %191 : i32 to index
      %193 = memref.load %arg1[%192] : memref<100xf32, #tpu.memory_space<smem>>
      %194 = vector.extract_strided_slice %152 {offsets = [0, 4], sizes = [32, 284], strides = [1, 1]} : vector<32x288xf32> to vector<32x284xf32>
      %195 = vector.broadcast %193 : f32 to vector<32x284xf32>
      %196 = arith.mulf %194, %195 : vector<32x284xf32>
      %197 = arith.addf %188, %196 : vector<32x284xf32>
      %198 = vector.extract_strided_slice %14 {offsets = [4, 0], sizes = [32, 288], strides = [1, 1]} : vector<36x288xf32> to vector<32x288xf32>
      %c25_i32_73 = arith.constant 25 : i32
      %199 = arith.muli %arg8, %c25_i32_73 : i32
      %c20_i32 = arith.constant 20 : i32
      %200 = arith.addi %199, %c20_i32 : i32
      %c0_i32_74 = arith.constant 0 : i32
      %201 = arith.addi %200, %c0_i32_74 : i32
      %202 = arith.index_cast %201 : i32 to index
      %203 = memref.load %arg1[%202] : memref<100xf32, #tpu.memory_space<smem>>
      %204 = vector.extract_strided_slice %198 {offsets = [0, 0], sizes = [32, 284], strides = [1, 1]} : vector<32x288xf32> to vector<32x284xf32>
      %205 = vector.broadcast %203 : f32 to vector<32x284xf32>
      %206 = arith.mulf %204, %205 : vector<32x284xf32>
      %207 = arith.addf %197, %206 : vector<32x284xf32>
      %c25_i32_75 = arith.constant 25 : i32
      %208 = arith.muli %arg8, %c25_i32_75 : i32
      %c20_i32_76 = arith.constant 20 : i32
      %209 = arith.addi %208, %c20_i32_76 : i32
      %c1_i32_77 = arith.constant 1 : i32
      %210 = arith.addi %209, %c1_i32_77 : i32
      %211 = arith.index_cast %210 : i32 to index
      %212 = memref.load %arg1[%211] : memref<100xf32, #tpu.memory_space<smem>>
      %213 = vector.extract_strided_slice %198 {offsets = [0, 1], sizes = [32, 284], strides = [1, 1]} : vector<32x288xf32> to vector<32x284xf32>
      %214 = vector.broadcast %212 : f32 to vector<32x284xf32>
      %215 = arith.mulf %213, %214 : vector<32x284xf32>
      %216 = arith.addf %207, %215 : vector<32x284xf32>
      %c25_i32_78 = arith.constant 25 : i32
      %217 = arith.muli %arg8, %c25_i32_78 : i32
      %c20_i32_79 = arith.constant 20 : i32
      %218 = arith.addi %217, %c20_i32_79 : i32
      %c2_i32_80 = arith.constant 2 : i32
      %219 = arith.addi %218, %c2_i32_80 : i32
      %220 = arith.index_cast %219 : i32 to index
      %221 = memref.load %arg1[%220] : memref<100xf32, #tpu.memory_space<smem>>
      %222 = vector.extract_strided_slice %198 {offsets = [0, 2], sizes = [32, 284], strides = [1, 1]} : vector<32x288xf32> to vector<32x284xf32>
      %223 = vector.broadcast %221 : f32 to vector<32x284xf32>
      %224 = arith.mulf %222, %223 : vector<32x284xf32>
      %225 = arith.addf %216, %224 : vector<32x284xf32>
      %c25_i32_81 = arith.constant 25 : i32
      %226 = arith.muli %arg8, %c25_i32_81 : i32
      %c20_i32_82 = arith.constant 20 : i32
      %227 = arith.addi %226, %c20_i32_82 : i32
      %c3_i32_83 = arith.constant 3 : i32
      %228 = arith.addi %227, %c3_i32_83 : i32
      %229 = arith.index_cast %228 : i32 to index
      %230 = memref.load %arg1[%229] : memref<100xf32, #tpu.memory_space<smem>>
      %231 = vector.extract_strided_slice %198 {offsets = [0, 3], sizes = [32, 284], strides = [1, 1]} : vector<32x288xf32> to vector<32x284xf32>
      %232 = vector.broadcast %230 : f32 to vector<32x284xf32>
      %233 = arith.mulf %231, %232 : vector<32x284xf32>
      %234 = arith.addf %225, %233 : vector<32x284xf32>
      %c25_i32_84 = arith.constant 25 : i32
      %235 = arith.muli %arg8, %c25_i32_84 : i32
      %c20_i32_85 = arith.constant 20 : i32
      %236 = arith.addi %235, %c20_i32_85 : i32
      %c4_i32_86 = arith.constant 4 : i32
      %237 = arith.addi %236, %c4_i32_86 : i32
      %238 = arith.index_cast %237 : i32 to index
      %239 = memref.load %arg1[%238] : memref<100xf32, #tpu.memory_space<smem>>
      %240 = vector.extract_strided_slice %198 {offsets = [0, 4], sizes = [32, 284], strides = [1, 1]} : vector<32x288xf32> to vector<32x284xf32>
      %241 = vector.broadcast %239 : f32 to vector<32x284xf32>
      %242 = arith.mulf %240, %241 : vector<32x284xf32>
      %243 = arith.addf %234, %242 : vector<32x284xf32>
      %c0_87 = arith.constant 0 : index
      %c0_88 = arith.constant 0 : index
      %c0_89 = arith.constant 0 : index
      %c0_90 = arith.constant 0 : index
      %244 = vector.load %arg6[%c0_87, %c0_88, %c0_89, %c0_90] : memref<1x8x32x284xf32, #tpu.memory_space<vmem>>, vector<1x1x32x284xf32>
      %245 = vector.shape_cast %244 : vector<1x1x32x284xf32> to vector<32x284xf32>
      %c0_i32_91 = arith.constant 0 : i32
      %246 = arith.addi %c0_i32_91, %arg8 : i32
      %247 = arith.index_cast %246 : i32 to index
      %248 = memref.load %arg2[%247] : memref<32xf32, #tpu.memory_space<smem>>
      %249 = vector.broadcast %248 : f32 to vector<32x284xf32>
      %250 = arith.mulf %243, %249 : vector<32x284xf32>
      %251 = arith.addf %245, %250 : vector<32x284xf32>
      %c0_92 = arith.constant 0 : index
      %c0_93 = arith.constant 0 : index
      %c0_94 = arith.constant 0 : index
      %c0_95 = arith.constant 0 : index
      %252 = vector.load %arg6[%c0_92, %c0_93, %c0_94, %c0_95] : memref<1x8x32x284xf32, #tpu.memory_space<vmem>>, vector<1x1x32x284xf32>
      %253 = vector.shape_cast %252 : vector<1x1x32x284xf32> to vector<32x284xf32>
      %254 = vector.shape_cast %251 : vector<32x284xf32> to vector<1x1x32x284xf32>
      tpu.vector_store %arg6[%c0_92, %c0_93, %c0_94, %c0_95], %254 {strides = array<i32>} : memref<1x8x32x284xf32, #tpu.memory_space<vmem>>, vector<1x1x32x284xf32>,
      %c0_96 = arith.constant 0 : index
      %c1 = arith.constant 1 : index
      %c0_97 = arith.constant 0 : index
      %c0_98 = arith.constant 0 : index
      %255 = vector.load %arg6[%c0_96, %c1, %c0_97, %c0_98] : memref<1x8x32x284xf32, #tpu.memory_space<vmem>>, vector<1x1x32x284xf32>
      %256 = vector.shape_cast %255 : vector<1x1x32x284xf32> to vector<32x284xf32>
      %c4_i32_99 = arith.constant 4 : i32
      %257 = arith.addi %c4_i32_99, %arg8 : i32
      %258 = arith.index_cast %257 : i32 to index
      %259 = memref.load %arg2[%258] : memref<32xf32, #tpu.memory_space<smem>>
      %260 = vector.broadcast %259 : f32 to vector<32x284xf32>
      %261 = arith.mulf %243, %260 : vector<32x284xf32>
      %262 = arith.addf %256, %261 : vector<32x284xf32>
      %c0_100 = arith.constant 0 : index
      %c1_101 = arith.constant 1 : index
      %c0_102 = arith.constant 0 : index
      %c0_103 = arith.constant 0 : index
      %263 = vector.load %arg6[%c0_100, %c1_101, %c0_102, %c0_103] : memref<1x8x32x284xf32, #tpu.memory_space<vmem>>, vector<1x1x32x284xf32>
      %264 = vector.shape_cast %263 : vector<1x1x32x284xf32> to vector<32x284xf32>
      %265 = vector.shape_cast %262 : vector<32x284xf32> to vector<1x1x32x284xf32>
      tpu.vector_store %arg6[%c0_100, %c1_101, %c0_102, %c0_103], %265 {strides = array<i32>} : memref<1x8x32x284xf32, #tpu.memory_space<vmem>>, vector<1x1x32x284xf32>,
      %c0_104 = arith.constant 0 : index
      %c2 = arith.constant 2 : index
      %c0_105 = arith.constant 0 : index
      %c0_106 = arith.constant 0 : index
      %266 = vector.load %arg6[%c0_104, %c2, %c0_105, %c0_106] : memref<1x8x32x284xf32, #tpu.memory_space<vmem>>, vector<1x1x32x284xf32>
      %267 = vector.shape_cast %266 : vector<1x1x32x284xf32> to vector<32x284xf32>
      %c8_i32 = arith.constant 8 : i32
      %268 = arith.addi %c8_i32, %arg8 : i32
      %269 = arith.index_cast %268 : i32 to index
      %270 = memref.load %arg2[%269] : memref<32xf32, #tpu.memory_space<smem>>
      %271 = vector.broadcast %270 : f32 to vector<32x284xf32>
      %272 = arith.mulf %243, %271 : vector<32x284xf32>
      %273 = arith.addf %267, %272 : vector<32x284xf32>
      %c0_107 = arith.constant 0 : index
      %c2_108 = arith.constant 2 : index
      %c0_109 = arith.constant 0 : index
      %c0_110 = arith.constant 0 : index
      %274 = vector.load %arg6[%c0_107, %c2_108, %c0_109, %c0_110] : memref<1x8x32x284xf32, #tpu.memory_space<vmem>>, vector<1x1x32x284xf32>
      %275 = vector.shape_cast %274 : vector<1x1x32x284xf32> to vector<32x284xf32>
      %276 = vector.shape_cast %273 : vector<32x284xf32> to vector<1x1x32x284xf32>
      tpu.vector_store %arg6[%c0_107, %c2_108, %c0_109, %c0_110], %276 {strides = array<i32>} : memref<1x8x32x284xf32, #tpu.memory_space<vmem>>, vector<1x1x32x284xf32>,
      %c0_111 = arith.constant 0 : index
      %c3 = arith.constant 3 : index
      %c0_112 = arith.constant 0 : index
      %c0_113 = arith.constant 0 : index
      %277 = vector.load %arg6[%c0_111, %c3, %c0_112, %c0_113] : memref<1x8x32x284xf32, #tpu.memory_space<vmem>>, vector<1x1x32x284xf32>
      %278 = vector.shape_cast %277 : vector<1x1x32x284xf32> to vector<32x284xf32>
      %c12_i32 = arith.constant 12 : i32
      %279 = arith.addi %c12_i32, %arg8 : i32
      %280 = arith.index_cast %279 : i32 to index
      %281 = memref.load %arg2[%280] : memref<32xf32, #tpu.memory_space<smem>>
      %282 = vector.broadcast %281 : f32 to vector<32x284xf32>
      %283 = arith.mulf %243, %282 : vector<32x284xf32>
      %284 = arith.addf %278, %283 : vector<32x284xf32>
      %c0_114 = arith.constant 0 : index
      %c3_115 = arith.constant 3 : index
      %c0_116 = arith.constant 0 : index
      %c0_117 = arith.constant 0 : index
      %285 = vector.load %arg6[%c0_114, %c3_115, %c0_116, %c0_117] : memref<1x8x32x284xf32, #tpu.memory_space<vmem>>, vector<1x1x32x284xf32>
      %286 = vector.shape_cast %285 : vector<1x1x32x284xf32> to vector<32x284xf32>
      %287 = vector.shape_cast %284 : vector<32x284xf32> to vector<1x1x32x284xf32>
      tpu.vector_store %arg6[%c0_114, %c3_115, %c0_116, %c0_117], %287 {strides = array<i32>} : memref<1x8x32x284xf32, #tpu.memory_space<vmem>>, vector<1x1x32x284xf32>,
      %c0_118 = arith.constant 0 : index
      %c4 = arith.constant 4 : index
      %c0_119 = arith.constant 0 : index
      %c0_120 = arith.constant 0 : index
      %288 = vector.load %arg6[%c0_118, %c4, %c0_119, %c0_120] : memref<1x8x32x284xf32, #tpu.memory_space<vmem>>, vector<1x1x32x284xf32>
      %289 = vector.shape_cast %288 : vector<1x1x32x284xf32> to vector<32x284xf32>
      %c16_i32 = arith.constant 16 : i32
      %290 = arith.addi %c16_i32, %arg8 : i32
      %291 = arith.index_cast %290 : i32 to index
      %292 = memref.load %arg2[%291] : memref<32xf32, #tpu.memory_space<smem>>
      %293 = vector.broadcast %292 : f32 to vector<32x284xf32>
      %294 = arith.mulf %243, %293 : vector<32x284xf32>
      %295 = arith.addf %289, %294 : vector<32x284xf32>
      %c0_121 = arith.constant 0 : index
      %c4_122 = arith.constant 4 : index
      %c0_123 = arith.constant 0 : index
      %c0_124 = arith.constant 0 : index
      %296 = vector.load %arg6[%c0_121, %c4_122, %c0_123, %c0_124] : memref<1x8x32x284xf32, #tpu.memory_space<vmem>>, vector<1x1x32x284xf32>
      %297 = vector.shape_cast %296 : vector<1x1x32x284xf32> to vector<32x284xf32>
      %298 = vector.shape_cast %295 : vector<32x284xf32> to vector<1x1x32x284xf32>
      tpu.vector_store %arg6[%c0_121, %c4_122, %c0_123, %c0_124], %298 {strides = array<i32>} : memref<1x8x32x284xf32, #tpu.memory_space<vmem>>, vector<1x1x32x284xf32>,
      %c0_125 = arith.constant 0 : index
      %c5 = arith.constant 5 : index
      %c0_126 = arith.constant 0 : index
      %c0_127 = arith.constant 0 : index
      %299 = vector.load %arg6[%c0_125, %c5, %c0_126, %c0_127] : memref<1x8x32x284xf32, #tpu.memory_space<vmem>>, vector<1x1x32x284xf32>
      %300 = vector.shape_cast %299 : vector<1x1x32x284xf32> to vector<32x284xf32>
      %c20_i32_128 = arith.constant 20 : i32
      %301 = arith.addi %c20_i32_128, %arg8 : i32
      %302 = arith.index_cast %301 : i32 to index
      %303 = memref.load %arg2[%302] : memref<32xf32, #tpu.memory_space<smem>>
      %304 = vector.broadcast %303 : f32 to vector<32x284xf32>
      %305 = arith.mulf %243, %304 : vector<32x284xf32>
      %306 = arith.addf %300, %305 : vector<32x284xf32>
      %c0_129 = arith.constant 0 : index
      %c5_130 = arith.constant 5 : index
      %c0_131 = arith.constant 0 : index
      %c0_132 = arith.constant 0 : index
      %307 = vector.load %arg6[%c0_129, %c5_130, %c0_131, %c0_132] : memref<1x8x32x284xf32, #tpu.memory_space<vmem>>, vector<1x1x32x284xf32>
      %308 = vector.shape_cast %307 : vector<1x1x32x284xf32> to vector<32x284xf32>
      %309 = vector.shape_cast %306 : vector<32x284xf32> to vector<1x1x32x284xf32>
      tpu.vector_store %arg6[%c0_129, %c5_130, %c0_131, %c0_132], %309 {strides = array<i32>} : memref<1x8x32x284xf32, #tpu.memory_space<vmem>>, vector<1x1x32x284xf32>,
      %c0_133 = arith.constant 0 : index
      %c6 = arith.constant 6 : index
      %c0_134 = arith.constant 0 : index
      %c0_135 = arith.constant 0 : index
      %310 = vector.load %arg6[%c0_133, %c6, %c0_134, %c0_135] : memref<1x8x32x284xf32, #tpu.memory_space<vmem>>, vector<1x1x32x284xf32>
      %311 = vector.shape_cast %310 : vector<1x1x32x284xf32> to vector<32x284xf32>
      %c24_i32 = arith.constant 24 : i32
      %312 = arith.addi %c24_i32, %arg8 : i32
      %313 = arith.index_cast %312 : i32 to index
      %314 = memref.load %arg2[%313] : memref<32xf32, #tpu.memory_space<smem>>
      %315 = vector.broadcast %314 : f32 to vector<32x284xf32>
      %316 = arith.mulf %243, %315 : vector<32x284xf32>
      %317 = arith.addf %311, %316 : vector<32x284xf32>
      %c0_136 = arith.constant 0 : index
      %c6_137 = arith.constant 6 : index
      %c0_138 = arith.constant 0 : index
      %c0_139 = arith.constant 0 : index
      %318 = vector.load %arg6[%c0_136, %c6_137, %c0_138, %c0_139] : memref<1x8x32x284xf32, #tpu.memory_space<vmem>>, vector<1x1x32x284xf32>
      %319 = vector.shape_cast %318 : vector<1x1x32x284xf32> to vector<32x284xf32>
      %320 = vector.shape_cast %317 : vector<32x284xf32> to vector<1x1x32x284xf32>
      tpu.vector_store %arg6[%c0_136, %c6_137, %c0_138, %c0_139], %320 {strides = array<i32>} : memref<1x8x32x284xf32, #tpu.memory_space<vmem>>, vector<1x1x32x284xf32>,
      %c0_140 = arith.constant 0 : index
      %c7 = arith.constant 7 : index
      %c0_141 = arith.constant 0 : index
      %c0_142 = arith.constant 0 : index
      %321 = vector.load %arg6[%c0_140, %c7, %c0_141, %c0_142] : memref<1x8x32x284xf32, #tpu.memory_space<vmem>>, vector<1x1x32x284xf32>
      %322 = vector.shape_cast %321 : vector<1x1x32x284xf32> to vector<32x284xf32>
      %c28_i32 = arith.constant 28 : i32
      %323 = arith.addi %c28_i32, %arg8 : i32
      %324 = arith.index_cast %323 : i32 to index
      %325 = memref.load %arg2[%324] : memref<32xf32, #tpu.memory_space<smem>>
      %326 = vector.broadcast %325 : f32 to vector<32x284xf32>
      %327 = arith.mulf %243, %326 : vector<32x284xf32>
      %328 = arith.addf %322, %327 : vector<32x284xf32>
      %c0_143 = arith.constant 0 : index
      %c7_144 = arith.constant 7 : index
      %c0_145 = arith.constant 0 : index
      %c0_146 = arith.constant 0 : index
      %329 = vector.load %arg6[%c0_143, %c7_144, %c0_145, %c0_146] : memref<1x8x32x284xf32, #tpu.memory_space<vmem>>, vector<1x1x32x284xf32>
      %330 = vector.shape_cast %329 : vector<1x1x32x284xf32> to vector<32x284xf32>
      %331 = vector.shape_cast %328 : vector<32x284xf32> to vector<1x1x32x284xf32>
      tpu.vector_store %arg6[%c0_143, %c7_144, %c0_145, %c0_146], %331 {strides = array<i32>} : memref<1x8x32x284xf32, #tpu.memory_space<vmem>>, vector<1x1x32x284xf32>,
    }
    %c4_i32_15 = arith.constant 4 : i32
    return
  }
  func.func @transform_0(%arg0: i32, %arg1: memref<100xf32, #tpu.memory_space<smem>>, %arg2: memref<32xf32, #tpu.memory_space<smem>>) -> (i32, i32, i32, i32) {
    %c0_i32 = arith.constant 0 : i32
    %c0_i32_0 = arith.constant 0 : i32
    %c0_i32_1 = arith.constant 0 : i32
    %c0_i32_2 = arith.constant 0 : i32
    return %arg0, %c0_i32, %c0_i32_0, %c0_i32_1 : i32, i32, i32, i32
  }
  func.func @transform_1(%arg0: i32, %arg1: memref<100xf32, #tpu.memory_space<smem>>, %arg2: memref<32xf32, #tpu.memory_space<smem>>) -> (i32, i32) {
    %c0_i32 = arith.constant 0 : i32
    %c0_i32_0 = arith.constant 0 : i32
    %c0_i32_1 = arith.constant 0 : i32
    return %c0_i32, %c0_i32_0 : i32, i32
  }
  func.func @transform_2(%arg0: i32, %arg1: memref<100xf32, #tpu.memory_space<smem>>, %arg2: memref<32xf32, #tpu.memory_space<smem>>) -> (i32, i32) {
    %c0_i32 = arith.constant 0 : i32
    %c0_i32_0 = arith.constant 0 : i32
    %c0_i32_1 = arith.constant 0 : i32
    return %c0_i32, %c0_i32_0 : i32, i32
  }
  func.func @transform_3(%arg0: i32, %arg1: memref<100xf32, #tpu.memory_space<smem>>, %arg2: memref<32xf32, #tpu.memory_space<smem>>) -> (i32, i32, i32, i32) {
    %c0_i32 = arith.constant 0 : i32
    %c0_i32_0 = arith.constant 0 : i32
    %c0_i32_1 = arith.constant 0 : i32
    %c0_i32_2 = arith.constant 0 : i32
    return %arg0, %c0_i32, %c0_i32_0, %c0_i32_1 : i32, i32, i32, i32
  }
}

</mosaic_0001>

<llo_original>
// kernel: tpu_custom_call.1
$region0: #{tpu_custom_call.1}
  #allocation0 [shape = 'u32[]', space=smem, size = 0x4, offset = 0x4, fixed_abs, tag = 'smem constant byte address 0x4 - core index']
  #allocation1 [shape = 'u32[144,128]{1,0:T(1,128)}', space=vmem, size = 0x12000, scoped, tag = 'internal scratch']
  #allocation2 [shape = 'f32[4,16,288]{2,1,0:T(8,128)}', space=vmem, size = 0x18000, scoped, tag = 'scratch operand']
  #allocation3 [shape = 's32[1]{0}', space=sflag, size = 0x4, scoped, tag = 'scoped memory for tpu_custom_call.1']
  #allocation4 [shape = 'u8[512]{0}', space=smem, size = 0x200, scoped, tag = 'prefetched SMEM operand 0']
  #allocation5 [shape = 'u8[512]{0}', space=smem, size = 0x200, scoped, tag = 'prefetched SMEM operand 1']
  %s0 = inlined_call_operand.vmem [shape: f32[100], index: 0, kind: input, shape index: {}]
  %s1 = inlined_call_operand.vmem [shape: f32[32], index: 1, kind: input, shape index: {}]
  %s2 = inlined_call_operand.vmem [shape: f32[2,4,16,128], index: 2, kind: input, shape index: {}]
  %s3 = inlined_call_operand.vmem [shape: f32[128,288], index: 3, kind: input, shape index: {}]
  %s4 = inlined_call_operand.vmem [shape: f32[36,16], index: 4, kind: input, shape index: {}]
  %s5 = inlined_call_operand.hbm [shape: f32[2,8,32,284], index: 5, kind: output, shape index: {}]
  %s6 = sld [smem:[#allocation0]]
  $region52: #{tpu_custom_call.1} parent=0
    _
  %s8 = ssub.s32 1, %s6
  %s9 = scalar_select 0, %s8, %s6
  %s10 = sshll.u32 %s0, 4
  %s11 = int_to_ptr.vmem [resolvable:$true] %s10
  %13 = dma.vmem_to_smem %s11, 16, [#allocation4], [#allocation3]
  %s14 = sshll.u32 %s1, 4
  %s15 = int_to_ptr.vmem [resolvable:$true] %s14
  %17 = dma.vmem_to_smem %s15, 16, [#allocation5], [#allocation3]
  %18 = dma.done [#allocation3], 32
  %19 = sfence
  $region1: #{tpu_custom_call.1} parent=0
    #allocation6 [shape = 'u8[786432]{0}', space=vmem, size = 0xc0000, scoped, tag = 'output window, operand 0']
    #allocation7 [shape = 's32[2]{0}', space=sflag, size = 0x8, scoped, tag = 'scoped memory for tpu_custom_call.1']
    %20 = vsyncpa [#allocation7], 0
    %s21 = scalar_lea.sflag [#allocation7], 1
    %22 = vsyncpa %s21, 0
    loop: start=0, step=1, limit=4
    $region2: #{tpu_custom_call.1} parent=1 // loop_pre_header
      _
    $region3: #{tpu_custom_call.1} parent=1 // loop_header
      %s24 = sphi 0, %s28
      %p25 = scmp.ge.s32.totalorder %s24, 4
      %s34 = sphi 0, %s36
      %s37 = sphi 0, %s34
      %s38 = sphi 0, %s37
      %s54 = sphi 0, %s38
      %s58 = sphi 0, %s58
      %s60 = sphi 0, %s58
      %s61 = sphi 0, %s60
      %s75 = sphi 0, %s61
      %s79 = sphi 0, %s79
      %s81 = sphi 0, %s79
      %s82 = sphi 0, %s81
      %s96 = sphi 0, %s82
      %s102 = sphi 0, %s104
      %s105 = sphi 0, %s102
      %s106 = sphi 0, %s105
      %s122 = sphi 0, %s106
    $region4: #{tpu_custom_call.1} parent=1 // loop_header_branch
      %27 = sbr.rel (%p25) target = $region8
    $region5: #{tpu_custom_call.1} parent=1 // loop_body
      %s29 = ssub.s32 %s24, 1
      %s30 = ssub.s32 %s24, 2
      %s31 = sadd.s32 %s24, 1
      %s32 = ssub.s32 %s24, %s31
      %p33 = scmp.eq.s32.totalorder %s32, 0
      %s35 = sadd.s32 %s34, 1
      %s36 = scalar_select %p33, %s34, %s35
      %p39 = pneg %p33
      %p40 = scmp.eq.s32.totalorder %s24, 1
      %p41 = por %p39, %p40
      %p42 = scmp.ne.s32.totalorder %s34, %s37
      %p43 = scmp.eq.s32.totalorder %s24, 0
      %p44 = por %p42, %p43
      %p45 = scmp.ne.s32.totalorder %s34, %s37
      %p46 = scmp.eq.s32.totalorder %s29, 1
      %p47 = por %p45, %p46
      %p48 = scmp.ne.s32.totalorder %s37, %s38
      %p49 = scmp.eq.s32.totalorder %s29, 0
      %p50 = por %p48, %p49
      %p51 = scmp.ne.s32.totalorder %s37, %s38
      %p52 = scmp.eq.s32.totalorder %s30, 1
      %p53 = por %p51, %p52
      %p55 = scmp.ne.s32.totalorder %s38, %s54
      %p56 = scmp.eq.s32.totalorder %s30, 0
      %p57 = por %p55, %p56
      %s59 = sadd.s32 %s58, 1
      %p62 = scmp.eq.s32.totalorder %s24, 1
      %p63 = scmp.ne.s32.totalorder %s58, %s60
      %p64 = scmp.eq.s32.totalorder %s24, 0
      %p65 = por %p63, %p64
      %p66 = scmp.ne.s32.totalorder %s58, %s60
      %p67 = scmp.eq.s32.totalorder %s29, 1
      %p68 = por %p66, %p67
      %p69 = scmp.ne.s32.totalorder %s60, %s61
      %p70 = scmp.eq.s32.totalorder %s29, 0
      %p71 = por %p69, %p70
      %p72 = scmp.ne.s32.totalorder %s60, %s61
      %p73 = scmp.eq.s32.totalorder %s30, 1
      %p74 = por %p72, %p73
      %p76 = scmp.ne.s32.totalorder %s61, %s75
      %p77 = scmp.eq.s32.totalorder %s30, 0
      %p78 = por %p76, %p77
      %s80 = sadd.s32 %s79, 1
      %p83 = scmp.eq.s32.totalorder %s24, 1
      %p84 = scmp.ne.s32.totalorder %s79, %s81
      %p85 = scmp.eq.s32.totalorder %s24, 0
      %p86 = por %p84, %p85
      %p87 = scmp.ne.s32.totalorder %s79, %s81
      %p88 = scmp.eq.s32.totalorder %s29, 1
      %p89 = por %p87, %p88
      %p90 = scmp.ne.s32.totalorder %s81, %s82
      %p91 = scmp.eq.s32.totalorder %s29, 0
      %p92 = por %p90, %p91
      %p93 = scmp.ne.s32.totalorder %s81, %s82
      %p94 = scmp.eq.s32.totalorder %s30, 1
      %p95 = por %p93, %p94
      %p97 = scmp.ne.s32.totalorder %s82, %s96
      %p98 = scmp.eq.s32.totalorder %s30, 0
      %p99 = por %p97, %p98
      %s100 = ssub.s32 %s24, %s31
      %p101 = scmp.eq.s32.totalorder %s100, 0
      %s103 = sadd.s32 %s102, 1
      %s104 = scalar_select %p101, %s102, %s103
      %p107 = pneg %p101
      %p108 = scmp.eq.s32.totalorder %s24, 1
      %p109 = por %p107, %p108
      %p110 = scmp.ne.s32.totalorder %s102, %s105
      %p111 = scmp.eq.s32.totalorder %s24, 0
      %p112 = por %p110, %p111
      %p113 = scmp.ne.s32.totalorder %s102, %s105
      %p114 = scmp.eq.s32.totalorder %s29, 1
      %p115 = por %p113, %p114
      %p116 = scmp.ne.s32.totalorder %s105, %s106
      %p117 = scmp.eq.s32.totalorder %s29, 0
      %p118 = por %p116, %p117
      %p119 = scmp.ne.s32.totalorder %s105, %s106
      %p120 = scmp.eq.s32.totalorder %s30, 1
      %p121 = por %p119, %p120
      %p123 = scmp.ne.s32.totalorder %s106, %s122
      %p124 = scmp.eq.s32.totalorder %s30, 0
      %p125 = por %p123, %p124
      %p126 = scmp.le.s32.totalorder 1, %s24
      %p127 = scmp.lt.s32.totalorder %s24, 3
      %p128 = pnand %p126, %p127
      %p129 = pneg %p128
      // Predicated region
      $region9: #{tpu_custom_call.1} parent=5 // pred_check
        _
      $region10: #{tpu_custom_call.1} parent=5 // pred_check_branch
        %131 = sbr.rel (%p128) target = $region12
      $region11: #{tpu_custom_call.1} parent=5 // pred_region
        %s132 = ssub.s32 %s24, 1
        // Predicated region
        $region13: #{tpu_custom_call.1} parent=11 // pred_check
          %p133 = pneg %p71
        $region14: #{tpu_custom_call.1} parent=11 // pred_check_branch
          %135 = sbr.rel (%p133) target = $region16
        $region15: #{tpu_custom_call.1} parent=11 // pred_region
          _
        $region16: #{tpu_custom_call.1} parent=11 // pred_fallthru
          _
        // Predicated region
        $region17: #{tpu_custom_call.1} parent=11 // pred_check
          %p136 = pneg %p92
        $region18: #{tpu_custom_call.1} parent=11 // pred_check_branch
          %138 = sbr.rel (%p136) target = $region20
        $region19: #{tpu_custom_call.1} parent=11 // pred_region
          _
        $region20: #{tpu_custom_call.1} parent=11 // pred_fallthru
          _
      $region12: #{tpu_custom_call.1} parent=5 // pred_fallthru
        _
      %p139 = scmp.lt.s32.totalorder %s24, 2
      // Predicated region
      $region21: #{tpu_custom_call.1} parent=5 // pred_check
        %p140 = pneg %p139
      $region22: #{tpu_custom_call.1} parent=5 // pred_check_branch
        %142 = sbr.rel (%p140) target = $region24
      $region23: #{tpu_custom_call.1} parent=5 // pred_region
        // Predicated region
        $region25: #{tpu_custom_call.1} parent=23 // pred_check
          %p143 = pneg %p44
        $region26: #{tpu_custom_call.1} parent=23 // pred_check_branch
          %145 = sbr.rel (%p143) target = $region28
        $region27: #{tpu_custom_call.1} parent=23 // pred_region
          %p146 = scmp.lt.s32.totalorder %s24, 1
          %s147 = scalar_select %p146, %s24, 1
          %s148 = smul.addr %s147, 8
          %s149 = smul.addr %s148, 8
          %s150 = scalar_lea.vmem %s2, %s149
        $region28: #{tpu_custom_call.1} parent=23 // pred_fallthru
          _
      $region24: #{tpu_custom_call.1} parent=5 // pred_fallthru
        _
      %p151 = scmp.le.s32.totalorder 1, %s24
      %p152 = scmp.lt.s32.totalorder %s24, 3
      %p153 = pnand %p151, %p152
      %p154 = pneg %p153
      // Predicated region
      $region29: #{tpu_custom_call.1} parent=5 // pred_check
        _
      $region30: #{tpu_custom_call.1} parent=5 // pred_check_branch
        %156 = sbr.rel (%p153) target = $region32
      $region31: #{tpu_custom_call.1} parent=5 // pred_region
        %s157 = ssub.s32 %s24, 1
        %p158 = scmp.lt.s32.totalorder %s29, 1
        %s159 = scalar_select %p158, %s29, 1
        %s160 = smul.addr %s159, 8
        %s161 = smul.addr %s160, 8
        %s162 = scalar_lea.vmem %s2, %s161
        %p163 = pneg %p50
        %p164 = pneg %p47
        %p165 = pneg %p71
        %p166 = pneg %p68
        %p167 = pneg %p92
        %p168 = pneg %p89
        %p169 = pneg %p118
        %p170 = pneg %p115
        %s171 = sand.u32 %s105, 1
        %s172 = scalar_lea.sflag [#allocation7], %s171
        %s173 = sand.u32 %s105, 1
        %s174 = smul.addr %s173, 768
        %s175 = scalar_lea.vmem [#allocation6], %s174
        %p176 = scmp.lt.s32.totalorder %s29, 1
        %s177 = scalar_select %p176, %s29, 1
        %s178 = smul.addr %s177, 8
        %s179 = smul.addr %s178, 8
        %s180 = scalar_lea.vmem %s2, %s179
        %v181 = vld [vmem:[%s180] sm:$0xff]
        %v182 = vld [vmem:[%s180 + $0x8] sm:$0xff]
        %v183 = vld [vmem:[%s180 + $0x10] sm:$0xff]
        %v184 = vld [vmem:[%s180 + $0x18] sm:$0xff]
        %v185 = vld [vmem:[%s180 + $0x20] sm:$0xff]
        %v186 = vld [vmem:[%s180 + $0x28] sm:$0xff]
        %v187 = vld [vmem:[%s180 + $0x30] sm:$0xff]
        %v188 = vld [vmem:[%s180 + $0x38] sm:$0xff]
        %v189 = vld [vmem:[%s3] sm:$0xff]
        %v190 = vld [vmem:[%s3 + $0x8] sm:$0xff]
        %v191 = vld [vmem:[%s3 + $0x10] sm:$0xff]
        %v192 = vld [vmem:[%s3 + $0x18] sm:$0xff]
        %v193 = vld [vmem:[%s3 + $0x20] sm:$0xff]
        %v194 = vld [vmem:[%s3 + $0x28] sm:$0xff]
        %v195 = vld [vmem:[%s3 + $0x30] sm:$0xff]
        %v196 = vld [vmem:[%s3 + $0x38] sm:$0xff]
        %v197 = vld [vmem:[%s3 + $0x40] sm:$0xff]
        %v198 = vld [vmem:[%s3 + $0x48] sm:$0xff]
        %v199 = vld [vmem:[%s3 + $0x50] sm:$0xff]
        %v200 = vld [vmem:[%s3 + $0x58] sm:$0xff]
        %v201 = vld [vmem:[%s3 + $0x60] sm:$0xff]
        %v202 = vld [vmem:[%s3 + $0x68] sm:$0xff]
        %v203 = vld [vmem:[%s3 + $0x70] sm:$0xff]
        %v204 = vld [vmem:[%s3 + $0x78] sm:$0xff]
        %v205 = vld [vmem:[%s3 + $0x80] sm:$0xff]
        %v206 = vld [vmem:[%s3 + $0x88] sm:$0xff]
        %v207 = vld [vmem:[%s3 + $0x90] sm:$0xff]
        %v208 = vld [vmem:[%s3 + $0x98] sm:$0xff]
        %v209 = vld [vmem:[%s3 + $0xa0] sm:$0xff]
        %v210 = vld [vmem:[%s3 + $0xa8] sm:$0xff]
        %v211 = vld [vmem:[%s3 + $0xb0] sm:$0xff]
        %v212 = vld [vmem:[%s3 + $0xb8] sm:$0xff]
        %v213 = vld [vmem:[%s3 + $0xc0] sm:$0xff]
        %v214 = vld [vmem:[%s3 + $0xc8] sm:$0xff]
        %v215 = vld [vmem:[%s3 + $0xd0] sm:$0xff]
        %v216 = vld [vmem:[%s3 + $0xd8] sm:$0xff]
        %v217 = vld [vmem:[%s3 + $0xe0] sm:$0xff]
        %v218 = vld [vmem:[%s3 + $0xe8] sm:$0xff]
        %v219 = vld [vmem:[%s3 + $0xf0] sm:$0xff]
        %v220 = vld [vmem:[%s3 + $0xf8] sm:$0xff]
        %v221 = vld [vmem:[%s3 + $0x100] sm:$0xff]
        %v222 = vld [vmem:[%s3 + $0x108] sm:$0xff]
        %v223 = vld [vmem:[%s3 + $0x110] sm:$0xff]
        %v224 = vld [vmem:[%s3 + $0x118] sm:$0xff]
        %v225 = vld [vmem:[%s3 + $0x120] sm:$0xff]
        %v226 = vld [vmem:[%s3 + $0x128] sm:$0xff]
        %v227 = vld [vmem:[%s3 + $0x130] sm:$0xff]
        %v228 = vld [vmem:[%s3 + $0x138] sm:$0xff]
        %v229 = vld [vmem:[%s3 + $0x140] sm:$0xff]
        %v230 = vld [vmem:[%s3 + $0x148] sm:$0xff]
        %v231 = vld [vmem:[%s3 + $0x150] sm:$0xff]
        %v232 = vld [vmem:[%s3 + $0x158] sm:$0xff]
        %v233 = vld [vmem:[%s3 + $0x160] sm:$0xff]
        %v234 = vld [vmem:[%s3 + $0x168] sm:$0xff]
        %v235 = vld [vmem:[%s3 + $0x170] sm:$0xff]
        %v236 = vld [vmem:[%s3 + $0x178] sm:$0xff]
        %237 = vmatprep.subr.mxu0 %v190
        %238 = vmatpush1.msra.mxu0 %v189
        %239 = vmatprep.subr.mxu0 %v193
        %240 = vmatpush1.msra.mxu0 %v192
        %241 = vmatprep.subr.mxu0 %v196
        %242 = vmatpush1.msra.mxu0 %v195
        %243 = vmatprep.subr.mxu0 %v199
        %244 = vmatpush1.msra.mxu0 %v198
        %245 = vmatprep.subr.mxu0 %v202
        %246 = vmatpush1.msra.mxu0 %v201
        %247 = vmatprep.subr.mxu0 %v205
        %248 = vmatpush1.msra.mxu0 %v204
        %249 = vmatprep.subr.mxu0 %v208
        %250 = vmatpush1.msra.mxu0 %v207
        %251 = vmatprep.subr.mxu0 %v211
        %252 = vmatpush1.msra.mxu0 %v210
        %253 = vmatprep.subr.mxu0 %v214
        %254 = vmatpush1.msra.mxu0 %v213
        %255 = vmatprep.subr.mxu0 %v217
        %256 = vmatpush1.msra.mxu0 %v216
        %257 = vmatprep.subr.mxu0 %v220
        %258 = vmatpush1.msra.mxu0 %v219
        %259 = vmatprep.subr.mxu0 %v223
        %260 = vmatpush1.msra.mxu0 %v222
        %261 = vmatprep.subr.mxu0 %v226
        %262 = vmatpush1.msra.mxu0 %v225
        %263 = vmatprep.subr.mxu0 %v229
        %264 = vmatpush1.msra.mxu0 %v228
        %265 = vmatprep.subr.mxu0 %v232
        %266 = vmatpush1.msra.mxu0 %v231
        %267 = vmatprep.subr.mxu0 %v235
        %268 = vmatpush1.msra.mxu0 %v234
        %269 = vmatprep.subr.mxu0 0.0
        %270 = vmatpush1.msra.mxu0 0.0
        %271 = vmatprep.subr.mxu0 0.0
        %272 = vmatpush1.msra.mxu0 0.0
        %273 = vmatprep.subr.mxu0 0.0
        %274 = vmatpush1.msra.mxu0 0.0
        %275 = vmatprep.subr.mxu0 0.0
        %276 = vmatpush1.msra.mxu0 0.0
        %277 = vmatprep.subr.mxu0 0.0
        %278 = vmatpush1.msra.mxu0 0.0
        %279 = vmatprep.subr.mxu0 0.0
        %280 = vmatpush1.msra.mxu0 0.0
        %281 = vmatprep.subr.mxu0 0.0
        %282 = vmatpush1.msra.mxu0 0.0
        %283 = vmatprep.subr.mxu0 0.0
        %284 = vmatpush1.msra.mxu0 0.0
        %285 = vmatprep.subr.mxu0 0.0
        %286 = vmatpush1.msra.mxu0 0.0
        %287 = vmatprep.subr.mxu0 0.0
        %288 = vmatpush1.msra.mxu0 0.0
        %289 = vmatprep.subr.mxu0 0.0
        %290 = vmatpush1.msra.mxu0 0.0
        %291 = vmatprep.subr.mxu0 0.0
        %292 = vmatpush1.msra.mxu0 0.0
        %293 = vmatprep.subr.mxu0 0.0
        %294 = vmatpush1.msra.mxu0 0.0
        %295 = vmatprep.subr.mxu0 0.0
        %296 = vmatpush1.msra.mxu0 0.0
        %297 = vmatprep.subr.mxu0 0.0
        %298 = vmatpush1.msra.mxu0 0.0
        %299 = vmatprep.subr.mxu0 0.0
        %300 = vmatpush1.msra.mxu0 0.0
        %301 = vmatprep.mubr.f32.mxu0 0.0
        %302 = vmatmul.mubr.f32.gmra.mrb[0].mxu0 %v181
        %v303 = vpop.f32.mrb[0].mxu0
        %v304 = vadd.f32 0.0, %v303
        %v305 = vpop.f32.mrb[0].mxu0
        %v306 = vadd.f32 0.0, %v305
        %307 = vmatprep.mubr.f32.mxu0 0.0
        %308 = vmatmul.mubr.f32.gmra.mrb[0].mxu0 %v182
        %v309 = vpop.f32.mrb[0].mxu0
        %v310 = vadd.f32 0.0, %v309
        %v311 = vpop.f32.mrb[0].mxu0
        %v312 = vadd.f32 0.0, %v311
        %313 = vmatprep.mubr.f32.mxu0 0.0
        %314 = vmatmul.mubr.f32.gmra.mrb[0].mxu0 %v183
        %v315 = vpop.f32.mrb[0].mxu0
        %v316 = vadd.f32 0.0, %v315
        %v317 = vpop.f32.mrb[0].mxu0
        %v318 = vadd.f32 0.0, %v317
        %319 = vmatprep.mubr.f32.mxu0 0.0
        %320 = vmatmul.mubr.f32.gmra.mrb[0].mxu0 %v184
        %v321 = vpop.f32.mrb[0].mxu0
        %v322 = vadd.f32 0.0, %v321
        %v323 = vpop.f32.mrb[0].mxu0
        %v324 = vadd.f32 0.0, %v323
        %325 = vmatprep.mubr.f32.mxu0 0.0
        %326 = vmatmul.mubr.f32.gmra.mrb[0].mxu0 %v185
        %v327 = vpop.f32.mrb[0].mxu0
        %v328 = vadd.f32 0.0, %v327
        %v329 = vpop.f32.mrb[0].mxu0
        %v330 = vadd.f32 0.0, %v329
        %331 = vmatprep.mubr.f32.mxu0 0.0
        %332 = vmatmul.mubr.f32.gmra.mrb[0].mxu0 %v186
        %v333 = vpop.f32.mrb[0].mxu0
        %v334 = vadd.f32 0.0, %v333
        %v335 = vpop.f32.mrb[0].mxu0
        %v336 = vadd.f32 0.0, %v335
        %337 = vmatprep.mubr.f32.mxu0 0.0
        %338 = vmatmul.mubr.f32.gmra.mrb[0].mxu0 %v187
        %v339 = vpop.f32.mrb[0].mxu0
        %v340 = vadd.f32 0.0, %v339
        %v341 = vpop.f32.mrb[0].mxu0
        %v342 = vadd.f32 0.0, %v341
        %343 = vmatprep.mubr.f32.mxu0 0.0
        %344 = vmatmul.mubr.f32.gmra.mrb[0].mxu0 %v188
        %v345 = vpop.f32.mrb[0].mxu0
        %v346 = vadd.f32 0.0, %v345
        %v347 = vpop.f32.mrb[0].mxu0
        %v348 = vadd.f32 0.0, %v347
        %349 = vdwg.mxu0
        %350 = vmatprep.subr.mxu0 0.0
        %351 = vmatpush1.msra.mxu0 %v191
        %352 = vmatprep.subr.mxu0 0.0
        %353 = vmatpush1.msra.mxu0 %v194
        %354 = vmatprep.subr.mxu0 0.0
        %355 = vmatpush1.msra.mxu0 %v197
        %356 = vmatprep.subr.mxu0 0.0
        %357 = vmatpush1.msra.mxu0 %v200
        %358 = vmatprep.subr.mxu0 0.0
        %359 = vmatpush1.msra.mxu0 %v203
        %360 = vmatprep.subr.mxu0 0.0
        %361 = vmatpush1.msra.mxu0 %v206
        %362 = vmatprep.subr.mxu0 0.0
        %363 = vmatpush1.msra.mxu0 %v209
        %364 = vmatprep.subr.mxu0 0.0
        %365 = vmatpush1.msra.mxu0 %v212
        %366 = vmatprep.subr.mxu0 0.0
        %367 = vmatpush1.msra.mxu0 %v215
        %368 = vmatprep.subr.mxu0 0.0
        %369 = vmatpush1.msra.mxu0 %v218
        %370 = vmatprep.subr.mxu0 0.0
        %371 = vmatpush1.msra.mxu0 %v221
        %372 = vmatprep.subr.mxu0 0.0
        %373 = vmatpush1.msra.mxu0 %v224
        %374 = vmatprep.subr.mxu0 0.0
        %375 = vmatpush1.msra.mxu0 %v227
        %376 = vmatprep.subr.mxu0 0.0
        %377 = vmatpush1.msra.mxu0 %v230
        %378 = vmatprep.subr.mxu0 0.0
        %379 = vmatpush1.msra.mxu0 %v233
        %380 = vmatprep.subr.mxu0 0.0
        %381 = vmatpush1.msra.mxu0 %v236
        %382 = vmatprep.subr.mxu0 0.0
        %383 = vmatpush1.msra.mxu0 0.0
        %384 = vmatprep.subr.mxu0 0.0
        %385 = vmatpush1.msra.mxu0 0.0
        %386 = vmatprep.subr.mxu0 0.0
        %387 = vmatpush1.msra.mxu0 0.0
        %388 = vmatprep.subr.mxu0 0.0
        %389 = vmatpush1.msra.mxu0 0.0
        %390 = vmatprep.subr.mxu0 0.0
        %391 = vmatpush1.msra.mxu0 0.0
        %392 = vmatprep.subr.mxu0 0.0
        %393 = vmatpush1.msra.mxu0 0.0
        %394 = vmatprep.subr.mxu0 0.0
        %395 = vmatpush1.msra.mxu0 0.0
        %396 = vmatprep.subr.mxu0 0.0
        %397 = vmatpush1.msra.mxu0 0.0
        %398 = vmatprep.subr.mxu0 0.0
        %399 = vmatpush1.msra.mxu0 0.0
        %400 = vmatprep.subr.mxu0 0.0
        %401 = vmatpush1.msra.mxu0 0.0
        %402 = vmatprep.subr.mxu0 0.0
        %403 = vmatpush1.msra.mxu0 0.0
        %404 = vmatprep.subr.mxu0 0.0
        %405 = vmatpush1.msra.mxu0 0.0
        %406 = vmatprep.subr.mxu0 0.0
        %407 = vmatpush1.msra.mxu0 0.0
        %408 = vmatprep.subr.mxu0 0.0
        %409 = vmatpush1.msra.mxu0 0.0
        %410 = vmatprep.subr.mxu0 0.0
        %411 = vmatpush1.msra.mxu0 0.0
        %412 = vmatprep.subr.mxu0 0.0
        %413 = vmatpush1.msra.mxu0 0.0
        %414 = vmatprep.mubr.f32.mxu0 0.0
        %415 = vmatmul.mubr.f32.gmra.mrb[0].mxu0 %v181
        %v416 = vpop.f32.mrb[0].mxu0
        %v417 = vadd.f32 0.0, %v416
        %v418 = vpop.f32.mrb[0].mxu0
        %419 = vmatprep.mubr.f32.mxu0 0.0
        %420 = vmatmul.mubr.f32.gmra.mrb[0].mxu0 %v182
        %v421 = vpop.f32.mrb[0].mxu0
        %v422 = vadd.f32 0.0, %v421
        %v423 = vpop.f32.mrb[0].mxu0
        %424 = vmatprep.mubr.f32.mxu0 0.0
        %425 = vmatmul.mubr.f32.gmra.mrb[0].mxu0 %v183
        %v426 = vpop.f32.mrb[0].mxu0
        %v427 = vadd.f32 0.0, %v426
        %v428 = vpop.f32.mrb[0].mxu0
        %429 = vmatprep.mubr.f32.mxu0 0.0
        %430 = vmatmul.mubr.f32.gmra.mrb[0].mxu0 %v184
        %v431 = vpop.f32.mrb[0].mxu0
        %v432 = vadd.f32 0.0, %v431
        %v433 = vpop.f32.mrb[0].mxu0
        %434 = vmatprep.mubr.f32.mxu0 0.0
        %435 = vmatmul.mubr.f32.gmra.mrb[0].mxu0 %v185
        %v436 = vpop.f32.mrb[0].mxu0
        %v437 = vadd.f32 0.0, %v436
        %v438 = vpop.f32.mrb[0].mxu0
        %439 = vmatprep.mubr.f32.mxu0 0.0
        %440 = vmatmul.mubr.f32.gmra.mrb[0].mxu0 %v186
        %v441 = vpop.f32.mrb[0].mxu0
        %v442 = vadd.f32 0.0, %v441
        %v443 = vpop.f32.mrb[0].mxu0
        %444 = vmatprep.mubr.f32.mxu0 0.0
        %445 = vmatmul.mubr.f32.gmra.mrb[0].mxu0 %v187
        %v446 = vpop.f32.mrb[0].mxu0
        %v447 = vadd.f32 0.0, %v446
        %v448 = vpop.f32.mrb[0].mxu0
        %449 = vmatprep.mubr.f32.mxu0 0.0
        %450 = vmatmul.mubr.f32.gmra.mrb[0].mxu0 %v188
        %v451 = vpop.f32.mrb[0].mxu0
        %v452 = vadd.f32 0.0, %v451
        %v453 = vpop.f32.mrb[0].mxu0
        %454 = vdwg.mxu0
        %455 = vst [vmem:[#allocation2] sm:$0xff] %v304
        %456 = vst [vmem:[#allocation2 + $0x8] sm:$0xff] %v306
        %vm457 = vcmask 261120
        %458 = vst.msk [vmem:[#allocation2 + $0x10] sm:$0xff] %vm457, %v417
        %459 = vst [vmem:[#allocation2 + $0x18] sm:$0xff] %v310
        %460 = vst [vmem:[#allocation2 + $0x20] sm:$0xff] %v312
        %461 = vst.msk [vmem:[#allocation2 + $0x28] sm:$0xff] %vm457, %v422
        %462 = vst [vmem:[#allocation2 + $0x30] sm:$0xff] %v316
        %463 = vst [vmem:[#allocation2 + $0x38] sm:$0xff] %v318
        %464 = vst.msk [vmem:[#allocation2 + $0x40] sm:$0xff] %vm457, %v427
        %465 = vst [vmem:[#allocation2 + $0x48] sm:$0xff] %v322
        %466 = vst [vmem:[#allocation2 + $0x50] sm:$0xff] %v324
        %467 = vst.msk [vmem:[#allocation2 + $0x58] sm:$0xff] %vm457, %v432
        %468 = vst [vmem:[#allocation2 + $0x60] sm:$0xff] %v328
        %469 = vst [vmem:[#allocation2 + $0x68] sm:$0xff] %v330
        %470 = vst.msk [vmem:[#allocation2 + $0x70] sm:$0xff] %vm457, %v437
        %471 = vst [vmem:[#allocation2 + $0x78] sm:$0xff] %v334
        %472 = vst [vmem:[#allocation2 + $0x80] sm:$0xff] %v336
        %473 = vst.msk [vmem:[#allocation2 + $0x88] sm:$0xff] %vm457, %v442
        %474 = vst [vmem:[#allocation2 + $0x90] sm:$0xff] %v340
        %475 = vst [vmem:[#allocation2 + $0x98] sm:$0xff] %v342
        %476 = vst.msk [vmem:[#allocation2 + $0xa0] sm:$0xff] %vm457, %v447
        %477 = vst [vmem:[#allocation2 + $0xa8] sm:$0xff] %v346
        %478 = vst [vmem:[#allocation2 + $0xb0] sm:$0xff] %v348
        %479 = vst.msk [vmem:[#allocation2 + $0xb8] sm:$0xff] %vm457, %v452
        %480 = vst [vmem:[%s175] sm:$0xff] 0.0
        %481 = vst [vmem:[%s175 + $0x8] sm:$0xff] 0.0
        %vm482 = vcmask 228352
        %483 = vst.msk [vmem:[%s175 + $0x10] sm:$0xff] %vm482, 0.0
        %484 = vst [vmem:[%s175 + $0x18] sm:$0xff] 0.0
        %485 = vst [vmem:[%s175 + $0x20] sm:$0xff] 0.0
        %486 = vst.msk [vmem:[%s175 + $0x28] sm:$0xff] %vm482, 0.0
        %487 = vst [vmem:[%s175 + $0x30] sm:$0xff] 0.0
        %488 = vst [vmem:[%s175 + $0x38] sm:$0xff] 0.0
        %489 = vst.msk [vmem:[%s175 + $0x40] sm:$0xff] %vm482, 0.0
        %490 = vst [vmem:[%s175 + $0x48] sm:$0xff] 0.0
        %491 = vst [vmem:[%s175 + $0x50] sm:$0xff] 0.0
        %492 = vst.msk [vmem:[%s175 + $0x58] sm:$0xff] %vm482, 0.0
        %493 = vst [vmem:[%s175 + $0x60] sm:$0xff] 0.0
        %494 = vst [vmem:[%s175 + $0x68] sm:$0xff] 0.0
        %495 = vst.msk [vmem:[%s175 + $0x70] sm:$0xff] %vm482, 0.0
        %496 = vst [vmem:[%s175 + $0x78] sm:$0xff] 0.0
        %497 = vst [vmem:[%s175 + $0x80] sm:$0xff] 0.0
        %498 = vst.msk [vmem:[%s175 + $0x88] sm:$0xff] %vm482, 0.0
        %499 = vst [vmem:[%s175 + $0x90] sm:$0xff] 0.0
        %500 = vst [vmem:[%s175 + $0x98] sm:$0xff] 0.0
        %501 = vst.msk [vmem:[%s175 + $0xa0] sm:$0xff] %vm482, 0.0
        %502 = vst [vmem:[%s175 + $0xa8] sm:$0xff] 0.0
        %503 = vst [vmem:[%s175 + $0xb0] sm:$0xff] 0.0
        %504 = vst.msk [vmem:[%s175 + $0xb8] sm:$0xff] %vm482, 0.0
        %505 = vst [vmem:[%s175 + $0xc0] sm:$0xff] 0.0
        %506 = vst [vmem:[%s175 + $0xc8] sm:$0xff] 0.0
        %507 = vst.msk [vmem:[%s175 + $0xd0] sm:$0xff] %vm482, 0.0
        %508 = vst [vmem:[%s175 + $0xd8] sm:$0xff] 0.0
        %509 = vst [vmem:[%s175 + $0xe0] sm:$0xff] 0.0
        %510 = vst.msk [vmem:[%s175 + $0xe8] sm:$0xff] %vm482, 0.0
        %511 = vst [vmem:[%s175 + $0xf0] sm:$0xff] 0.0
        %512 = vst [vmem:[%s175 + $0xf8] sm:$0xff] 0.0
        %513 = vst.msk [vmem:[%s175 + $0x100] sm:$0xff] %vm482, 0.0
        %514 = vst [vmem:[%s175 + $0x108] sm:$0xff] 0.0
        %515 = vst [vmem:[%s175 + $0x110] sm:$0xff] 0.0
        %516 = vst.msk [vmem:[%s175 + $0x118] sm:$0xff] %vm482, 0.0
        %517 = vst [vmem:[%s175 + $0x120] sm:$0xff] 0.0
        %518 = vst [vmem:[%s175 + $0x128] sm:$0xff] 0.0
        %519 = vst.msk [vmem:[%s175 + $0x130] sm:$0xff] %vm482, 0.0
        %520 = vst [vmem:[%s175 + $0x138] sm:$0xff] 0.0
        %521 = vst [vmem:[%s175 + $0x140] sm:$0xff] 0.0
        %522 = vst.msk [vmem:[%s175 + $0x148] sm:$0xff] %vm482, 0.0
        %523 = vst [vmem:[%s175 + $0x150] sm:$0xff] 0.0
        %524 = vst [vmem:[%s175 + $0x158] sm:$0xff] 0.0
        %525 = vst.msk [vmem:[%s175 + $0x160] sm:$0xff] %vm482, 0.0
        %526 = vst [vmem:[%s175 + $0x168] sm:$0xff] 0.0
        %527 = vst [vmem:[%s175 + $0x170] sm:$0xff] 0.0
        %528 = vst.msk [vmem:[%s175 + $0x178] sm:$0xff] %vm482, 0.0
        %529 = vst [vmem:[%s175 + $0x180] sm:$0xff] 0.0
        %530 = vst [vmem:[%s175 + $0x188] sm:$0xff] 0.0
        %531 = vst.msk [vmem:[%s175 + $0x190] sm:$0xff] %vm482, 0.0
        %532 = vst [vmem:[%s175 + $0x198] sm:$0xff] 0.0
        %533 = vst [vmem:[%s175 + $0x1a0] sm:$0xff] 0.0
        %534 = vst.msk [vmem:[%s175 + $0x1a8] sm:$0xff] %vm482, 0.0
        %535 = vst [vmem:[%s175 + $0x1b0] sm:$0xff] 0.0
        %536 = vst [vmem:[%s175 + $0x1b8] sm:$0xff] 0.0
        %537 = vst.msk [vmem:[%s175 + $0x1c0] sm:$0xff] %vm482, 0.0
        %538 = vst [vmem:[%s175 + $0x1c8] sm:$0xff] 0.0
        %539 = vst [vmem:[%s175 + $0x1d0] sm:$0xff] 0.0
        %540 = vst.msk [vmem:[%s175 + $0x1d8] sm:$0xff] %vm482, 0.0
        %541 = vst [vmem:[%s175 + $0x1e0] sm:$0xff] 0.0
        %542 = vst [vmem:[%s175 + $0x1e8] sm:$0xff] 0.0
        %543 = vst.msk [vmem:[%s175 + $0x1f0] sm:$0xff] %vm482, 0.0
        %544 = vst [vmem:[%s175 + $0x1f8] sm:$0xff] 0.0
        %545 = vst [vmem:[%s175 + $0x200] sm:$0xff] 0.0
        %546 = vst.msk [vmem:[%s175 + $0x208] sm:$0xff] %vm482, 0.0
        %547 = vst [vmem:[%s175 + $0x210] sm:$0xff] 0.0
        %548 = vst [vmem:[%s175 + $0x218] sm:$0xff] 0.0
        %549 = vst.msk [vmem:[%s175 + $0x220] sm:$0xff] %vm482, 0.0
        %550 = vst [vmem:[%s175 + $0x228] sm:$0xff] 0.0
        %551 = vst [vmem:[%s175 + $0x230] sm:$0xff] 0.0
        %552 = vst.msk [vmem:[%s175 + $0x238] sm:$0xff] %vm482, 0.0
        %553 = vst [vmem:[%s175 + $0x240] sm:$0xff] 0.0
        %554 = vst [vmem:[%s175 + $0x248] sm:$0xff] 0.0
        %555 = vst.msk [vmem:[%s175 + $0x250] sm:$0xff] %vm482, 0.0
        %556 = vst [vmem:[%s175 + $0x258] sm:$0xff] 0.0
        %557 = vst [vmem:[%s175 + $0x260] sm:$0xff] 0.0
        %558 = vst.msk [vmem:[%s175 + $0x268] sm:$0xff] %vm482, 0.0
        %559 = vst [vmem:[%s175 + $0x270] sm:$0xff] 0.0
        %560 = vst [vmem:[%s175 + $0x278] sm:$0xff] 0.0
        %561 = vst.msk [vmem:[%s175 + $0x280] sm:$0xff] %vm482, 0.0
        %562 = vst [vmem:[%s175 + $0x288] sm:$0xff] 0.0
        %563 = vst [vmem:[%s175 + $0x290] sm:$0xff] 0.0
        %564 = vst.msk [vmem:[%s175 + $0x298] sm:$0xff] %vm482, 0.0
        %565 = vst [vmem:[%s175 + $0x2a0] sm:$0xff] 0.0
        %566 = vst [vmem:[%s175 + $0x2a8] sm:$0xff] 0.0
        %567 = vst.msk [vmem:[%s175 + $0x2b0] sm:$0xff] %vm482, 0.0
        %568 = vst [vmem:[%s175 + $0x2b8] sm:$0xff] 0.0
        %569 = vst [vmem:[%s175 + $0x2c0] sm:$0xff] 0.0
        %570 = vst.msk [vmem:[%s175 + $0x2c8] sm:$0xff] %vm482, 0.0
        %571 = vst [vmem:[%s175 + $0x2d0] sm:$0xff] 0.0
        %572 = vst [vmem:[%s175 + $0x2d8] sm:$0xff] 0.0
        %573 = vst.msk [vmem:[%s175 + $0x2e0] sm:$0xff] %vm482, 0.0
        %574 = vst [vmem:[%s175 + $0x2e8] sm:$0xff] 0.0
        %575 = vst [vmem:[%s175 + $0x2f0] sm:$0xff] 0.0
        %576 = vst.msk [vmem:[%s175 + $0x2f8] sm:$0xff] %vm482, 0.0
        %v577 = vld [vmem:[%s4] sm:$0xff]
        %v578 = vld [vmem:[%s4 + $0x8] sm:$0xff]
        %v579 = vld [vmem:[%s4 + $0x10] sm:$0xff]
        %v580 = vld [vmem:[%s4 + $0x18] sm:$0xff]
        %v581 = vld [vmem:[%s4 + $0x20] sm:$0xf]
        loop: start=0, step=1, limit=4
        $region33: #{tpu_custom_call.1} parent=31 // loop_pre_header
          _
        $region34: #{tpu_custom_call.1} parent=31 // loop_header
          %s583 = sphi 0, %s587
          %p584 = scmp.ge.s32.totalorder %s583, 4
        $region35: #{tpu_custom_call.1} parent=31 // loop_header_branch
          %586 = sbr.rel (%p584) target = $region39
        $region36: #{tpu_custom_call.1} parent=31 // loop_body
          %s588 = smul.u32 %s583, 6
          %s589 = smul.addr %s588, 8
          %s590 = scalar_lea.vmem [#allocation2], %s589
          %v591 = vld [vmem:[%s590] sm:$0xff]
          %v592 = vld [vmem:[%s590 + $0x8] sm:$0xff]
          %v593 = vld [vmem:[%s590 + $0x10] sm:$0xff]
          %v594 = vld [vmem:[%s590 + $0x18] sm:$0xff]
          %v595 = vld [vmem:[%s590 + $0x20] sm:$0xff]
          %v596 = vld [vmem:[%s590 + $0x28] sm:$0xff]
          %vm597 = vcmask 130048
          %v599 = vsel %vm597, %v577, 0
          %v602 = vsel %vm597, %v578, 0
          %v605 = vsel %vm597, %v579, 0
          %v608 = vsel %vm597, %v580, 0
          %v611 = vsel %vm597, %v581, 0
          %613 = vmatprep.subr.mxu0 %v592
          %614 = vmatpush1.msra.mxu0 %v591
          %615 = vmatprep.subr.mxu0 %v595
          %616 = vmatpush1.msra.mxu0 %v594
          %617 = vmatprep.subr.mxu0 0.0
          %618 = vmatpush1.msra.mxu0 0.0
          %619 = vmatprep.subr.mxu0 0.0
          %620 = vmatpush1.msra.mxu0 0.0
          %621 = vmatprep.subr.mxu0 0.0
          %622 = vmatpush1.msra.mxu0 0.0
          %623 = vmatprep.subr.mxu0 0.0
          %624 = vmatpush1.msra.mxu0 0.0
          %625 = vmatprep.subr.mxu0 0.0
          %626 = vmatpush1.msra.mxu0 0.0
          %627 = vmatprep.subr.mxu0 0.0
          %628 = vmatpush1.msra.mxu0 0.0
          %629 = vmatprep.subr.mxu0 0.0
          %630 = vmatpush1.msra.mxu0 0.0
          %631 = vmatprep.subr.mxu0 0.0
          %632 = vmatpush1.msra.mxu0 0.0
          %633 = vmatprep.subr.mxu0 0.0
          %634 = vmatpush1.msra.mxu0 0.0
          %635 = vmatprep.subr.mxu0 0.0
          %636 = vmatpush1.msra.mxu0 0.0
          %637 = vmatprep.subr.mxu0 0.0
          %638 = vmatpush1.msra.mxu0 0.0
          %639 = vmatprep.subr.mxu0 0.0
          %640 = vmatpush1.msra.mxu0 0.0
          %641 = vmatprep.subr.mxu0 0.0
          %642 = vmatpush1.msra.mxu0 0.0
          %643 = vmatprep.subr.mxu0 0.0
          %644 = vmatpush1.msra.mxu0 0.0
          %645 = vmatprep.subr.mxu0 0.0
          %646 = vmatpush1.msra.mxu0 0.0
          %647 = vmatprep.subr.mxu0 0.0
          %648 = vmatpush1.msra.mxu0 0.0
          %649 = vmatprep.subr.mxu0 0.0
          %650 = vmatpush1.msra.mxu0 0.0
          %651 = vmatprep.subr.mxu0 0.0
          %652 = vmatpush1.msra.mxu0 0.0
          %653 = vmatprep.subr.mxu0 0.0
          %654 = vmatpush1.msra.mxu0 0.0
          %655 = vmatprep.subr.mxu0 0.0
          %656 = vmatpush1.msra.mxu0 0.0
          %657 = vmatprep.subr.mxu0 0.0
          %658 = vmatpush1.msra.mxu0 0.0
          %659 = vmatprep.subr.mxu0 0.0
          %660 = vmatpush1.msra.mxu0 0.0
          %661 = vmatprep.subr.mxu0 0.0
          %662 = vmatpush1.msra.mxu0 0.0
          %663 = vmatprep.subr.mxu0 0.0
          %664 = vmatpush1.msra.mxu0 0.0
          %665 = vmatprep.subr.mxu0 0.0
          %666 = vmatpush1.msra.mxu0 0.0
          %667 = vmatprep.subr.mxu0 0.0
          %668 = vmatpush1.msra.mxu0 0.0
          %669 = vmatprep.subr.mxu0 0.0
          %670 = vmatpush1.msra.mxu0 0.0
          %671 = vmatprep.subr.mxu0 0.0
          %672 = vmatpush1.msra.mxu0 0.0
          %673 = vmatprep.subr.mxu0 0.0
          %674 = vmatpush1.msra.mxu0 0.0
          %675 = vmatprep.subr.mxu0 0.0
          %676 = vmatpush1.msra.mxu0 0.0
          %677 = vmatprep.mubr.f32.mxu0 0.0
          %678 = vmatmul.mubr.f32.gmra.mrb[0].mxu0 %v599
          %v679 = vpop.f32.mrb[0].mxu0
          %v680 = vadd.f32 0.0, %v679
          %v681 = vpop.f32.mrb[0].mxu0
          %v682 = vadd.f32 0.0, %v681
          %683 = vmatprep.mubr.f32.mxu0 0.0
          %684 = vmatmul.mubr.f32.gmra.mrb[0].mxu0 %v602
          %v685 = vpop.f32.mrb[0].mxu0
          %v686 = vadd.f32 0.0, %v685
          %v687 = vpop.f32.mrb[0].mxu0
          %v688 = vadd.f32 0.0, %v687
          %689 = vmatprep.mubr.f32.mxu0 0.0
          %690 = vmatmul.mubr.f32.gmra.mrb[0].mxu0 %v605
          %v691 = vpop.f32.mrb[0].mxu0
          %v692 = vadd.f32 0.0, %v691
          %v693 = vpop.f32.mrb[0].mxu0
          %v694 = vadd.f32 0.0, %v693
          %695 = vmatprep.mubr.f32.mxu0 0.0
          %696 = vmatmul.mubr.f32.gmra.mrb[0].mxu0 %v608
          %v697 = vpop.f32.mrb[0].mxu0
          %v698 = vadd.f32 0.0, %v697
          %v699 = vpop.f32.mrb[0].mxu0
          %v700 = vadd.f32 0.0, %v699
          %701 = vmatprep.mubr.f32.mxu0 0.0
          %702 = vmatmul.mubr.f32.gmra.mrb[0].mxu0 %v611
          %v703 = vpop.f32.mrb[0].mxu0
          %v704 = vadd.f32 0.0, %v703
          %v705 = vpop.f32.mrb[0].mxu0
          %v706 = vadd.f32 0.0, %v705
          %707 = vdwg.mxu0
          %708 = vmatprep.subr.mxu0 0.0
          %709 = vmatpush1.msra.mxu0 %v593
          %710 = vmatprep.subr.mxu0 0.0
          %711 = vmatpush1.msra.mxu0 %v596
          %712 = vmatprep.subr.mxu0 0.0
          %713 = vmatpush1.msra.mxu0 0.0
          %714 = vmatprep.subr.mxu0 0.0
          %715 = vmatpush1.msra.mxu0 0.0
          %716 = vmatprep.subr.mxu0 0.0
          %717 = vmatpush1.msra.mxu0 0.0
          %718 = vmatprep.subr.mxu0 0.0
          %719 = vmatpush1.msra.mxu0 0.0
          %720 = vmatprep.subr.mxu0 0.0
          %721 = vmatpush1.msra.mxu0 0.0
          %722 = vmatprep.subr.mxu0 0.0
          %723 = vmatpush1.msra.mxu0 0.0
          %724 = vmatprep.subr.mxu0 0.0
          %725 = vmatpush1.msra.mxu0 0.0
          %726 = vmatprep.subr.mxu0 0.0
          %727 = vmatpush1.msra.mxu0 0.0
          %728 = vmatprep.subr.mxu0 0.0
          %729 = vmatpush1.msra.mxu0 0.0
          %730 = vmatprep.subr.mxu0 0.0
          %731 = vmatpush1.msra.mxu0 0.0
          %732 = vmatprep.subr.mxu0 0.0
          %733 = vmatpush1.msra.mxu0 0.0
          %734 = vmatprep.subr.mxu0 0.0
          %735 = vmatpush1.msra.mxu0 0.0
          %736 = vmatprep.subr.mxu0 0.0
          %737 = vmatpush1.msra.mxu0 0.0
          %738 = vmatprep.subr.mxu0 0.0
          %739 = vmatpush1.msra.mxu0 0.0
          %740 = vmatprep.subr.mxu0 0.0
          %741 = vmatpush1.msra.mxu0 0.0
          %742 = vmatprep.subr.mxu0 0.0
          %743 = vmatpush1.msra.mxu0 0.0
          %744 = vmatprep.subr.mxu0 0.0
          %745 = vmatpush1.msra.mxu0 0.0
          %746 = vmatprep.subr.mxu0 0.0
          %747 = vmatpush1.msra.mxu0 0.0
          %748 = vmatprep.subr.mxu0 0.0
          %749 = vmatpush1.msra.mxu0 0.0
          %750 = vmatprep.subr.mxu0 0.0
          %751 = vmatpush1.msra.mxu0 0.0
          %752 = vmatprep.subr.mxu0 0.0
          %753 = vmatpush1.msra.mxu0 0.0
          %754 = vmatprep.subr.mxu0 0.0
          %755 = vmatpush1.msra.mxu0 0.0
          %756 = vmatprep.subr.mxu0 0.0
          %757 = vmatpush1.msra.mxu0 0.0
          %758 = vmatprep.subr.mxu0 0.0
          %759 = vmatpush1.msra.mxu0 0.0
          %760 = vmatprep.subr.mxu0 0.0
          %761 = vmatpush1.msra.mxu0 0.0
          %762 = vmatprep.subr.mxu0 0.0
          %763 = vmatpush1.msra.mxu0 0.0
          %764 = vmatprep.subr.mxu0 0.0
          %765 = vmatpush1.msra.mxu0 0.0
          %766 = vmatprep.subr.mxu0 0.0
          %767 = vmatpush1.msra.mxu0 0.0
          %768 = vmatprep.subr.mxu0 0.0
          %769 = vmatpush1.msra.mxu0 0.0
          %770 = vmatprep.subr.mxu0 0.0
          %771 = vmatpush1.msra.mxu0 0.0
          %772 = vmatprep.mubr.f32.mxu0 0.0
          %773 = vmatmul.mubr.f32.gmra.mrb[0].mxu0 %v599
          %v774 = vpop.f32.mrb[0].mxu0
          %v775 = vadd.f32 0.0, %v774
          %v776 = vpop.f32.mrb[0].mxu0
          %777 = vmatprep.mubr.f32.mxu0 0.0
          %778 = vmatmul.mubr.f32.gmra.mrb[0].mxu0 %v602
          %v779 = vpop.f32.mrb[0].mxu0
          %v780 = vadd.f32 0.0, %v779
          %v781 = vpop.f32.mrb[0].mxu0
          %782 = vmatprep.mubr.f32.mxu0 0.0
          %783 = vmatmul.mubr.f32.gmra.mrb[0].mxu0 %v605
          %v784 = vpop.f32.mrb[0].mxu0
          %v785 = vadd.f32 0.0, %v784
          %v786 = vpop.f32.mrb[0].mxu0
          %787 = vmatprep.mubr.f32.mxu0 0.0
          %788 = vmatmul.mubr.f32.gmra.mrb[0].mxu0 %v608
          %v789 = vpop.f32.mrb[0].mxu0
          %v790 = vadd.f32 0.0, %v789
          %v791 = vpop.f32.mrb[0].mxu0
          %792 = vmatprep.mubr.f32.mxu0 0.0
          %793 = vmatmul.mubr.f32.gmra.mrb[0].mxu0 %v611
          %v794 = vpop.f32.mrb[0].mxu0
          %v795 = vadd.f32 0.0, %v794
          %v796 = vpop.f32.mrb[0].mxu0
          %797 = vdwg.mxu0
          %s798 = smul.u32 %s583, 25
          %s799 = sld [smem:[#allocation4 + %s798]]
          %v800 = vstv %s799
          %v801 = vmul.f32 %v680, %v800
          %v802 = vmul.f32 %v682, %v800
          %v803 = vmul.f32 %v775, %v800
          %v804 = vmul.f32 %v686, %v800
          %v805 = vmul.f32 %v688, %v800
          %v806 = vmul.f32 %v780, %v800
          %v807 = vmul.f32 %v692, %v800
          %v808 = vmul.f32 %v694, %v800
          %v809 = vmul.f32 %v785, %v800
          %v810 = vmul.f32 %v698, %v800
          %v811 = vmul.f32 %v700, %v800
          %v812 = vmul.f32 %v790, %v800
          %s813 = sadd.s32 %s798, 1
          %s814 = sld [smem:[#allocation4 + %s813]]
          %v815 = vstv %s814
          %v816 = vmul.f32 %v680, %v815
          %v817 = vmul.f32 %v682, %v815
          %v818 = vmul.f32 %v775, %v815
          %v819 = vmul.f32 %v686, %v815
          %v820 = vmul.f32 %v688, %v815
          %v821 = vmul.f32 %v780, %v815
          %v822 = vmul.f32 %v692, %v815
          %v823 = vmul.f32 %v694, %v815
          %v824 = vmul.f32 %v785, %v815
          %v825 = vmul.f32 %v698, %v815
          %v826 = vmul.f32 %v700, %v815
          %v827 = vmul.f32 %v790, %v815
          %840 = vrot.lane.b32.xlu0 %v816, 127
          %v841 = vpop.permute.xlu0 %840
          %842 = vrot.lane.b32.xlu0 %v817, 127
          %v843 = vpop.permute.xlu0 %842
          %844 = vrot.lane.b32.xlu0 %v818, 127
          %v845 = vpop.permute.xlu0 %844
          %846 = vrot.lane.b32.xlu0 %v819, 127
          %v847 = vpop.permute.xlu0 %846
          %848 = vrot.lane.b32.xlu0 %v820, 127
          %v849 = vpop.permute.xlu0 %848
          %850 = vrot.lane.b32.xlu0 %v821, 127
          %v851 = vpop.permute.xlu0 %850
          %852 = vrot.lane.b32.xlu0 %v822, 127
          %v853 = vpop.permute.xlu0 %852
          %854 = vrot.lane.b32.xlu0 %v823, 127
          %v855 = vpop.permute.xlu0 %854
          %856 = vrot.lane.b32.xlu0 %v824, 127
          %v857 = vpop.permute.xlu0 %856
          %858 = vrot.lane.b32.xlu0 %v825, 127
          %v859 = vpop.permute.xlu0 %858
          %860 = vrot.lane.b32.xlu0 %v826, 127
          %v861 = vpop.permute.xlu0 %860
          %862 = vrot.lane.b32.xlu0 %v827, 127
          %v863 = vpop.permute.xlu0 %862
          %vm864 = vcmask 1039360
          %v865 = vsel %vm864, %v841, %v843
          %v866 = vsel %vm864, %v843, %v845
          %v867 = vsel %vm864, %v847, %v849
          %v868 = vsel %vm864, %v849, %v851
          %v869 = vsel %vm864, %v853, %v855
          %v870 = vsel %vm864, %v855, %v857
          %v871 = vsel %vm864, %v859, %v861
          %v872 = vsel %vm864, %v861, %v863
          %v885 = vadd.f32 %v801, %v865
          %v886 = vadd.f32 %v802, %v866
          %v887 = vadd.f32 %v803, %v845
          %v888 = vadd.f32 %v804, %v867
          %v889 = vadd.f32 %v805, %v868
          %v890 = vadd.f32 %v806, %v851
          %v891 = vadd.f32 %v807, %v869
          %v892 = vadd.f32 %v808, %v870
          %v893 = vadd.f32 %v809, %v857
          %v894 = vadd.f32 %v810, %v871
          %v895 = vadd.f32 %v811, %v872
          %v896 = vadd.f32 %v812, %v863
          %s897 = sadd.s32 %s798, 2
          %s898 = sld [smem:[#allocation4 + %s897]]
          %v899 = vstv %s898
          %v900 = vmul.f32 %v680, %v899
          %v901 = vmul.f32 %v682, %v899
          %v902 = vmul.f32 %v775, %v899
          %v903 = vmul.f32 %v686, %v899
          %v904 = vmul.f32 %v688, %v899
          %v905 = vmul.f32 %v780, %v899
          %v906 = vmul.f32 %v692, %v899
          %v907 = vmul.f32 %v694, %v899
          %v908 = vmul.f32 %v785, %v899
          %v909 = vmul.f32 %v698, %v899
          %v910 = vmul.f32 %v700, %v899
          %v911 = vmul.f32 %v790, %v899
          %924 = vrot.lane.b32.xlu0 %v900, 126
          %v925 = vpop.permute.xlu0 %924
          %926 = vrot.lane.b32.xlu0 %v901, 126
          %v927 = vpop.permute.xlu0 %926
          %928 = vrot.lane.b32.xlu0 %v902, 126
          %v929 = vpop.permute.xlu0 %928
          %930 = vrot.lane.b32.xlu0 %v903, 126
          %v931 = vpop.permute.xlu0 %930
          %932 = vrot.lane.b32.xlu0 %v904, 126
          %v933 = vpop.permute.xlu0 %932
          %934 = vrot.lane.b32.xlu0 %v905, 126
          %v935 = vpop.permute.xlu0 %934
          %936 = vrot.lane.b32.xlu0 %v906, 126
          %v937 = vpop.permute.xlu0 %936
          %938 = vrot.lane.b32.xlu0 %v907, 126
          %v939 = vpop.permute.xlu0 %938
          %940 = vrot.lane.b32.xlu0 %v908, 126
          %v941 = vpop.permute.xlu0 %940
          %942 = vrot.lane.b32.xlu0 %v909, 126
          %v943 = vpop.permute.xlu0 %942
          %944 = vrot.lane.b32.xlu0 %v910, 126
          %v945 = vpop.permute.xlu0 %944
          %946 = vrot.lane.b32.xlu0 %v911, 126
          %v947 = vpop.permute.xlu0 %946
          %vm948 = vcmask 1031168
          %v949 = vsel %vm948, %v925, %v927
          %v950 = vsel %vm948, %v927, %v929
          %v951 = vsel %vm948, %v931, %v933
          %v952 = vsel %vm948, %v933, %v935
          %v953 = vsel %vm948, %v937, %v939
          %v954 = vsel %vm948, %v939, %v941
          %v955 = vsel %vm948, %v943, %v945
          %v956 = vsel %vm948, %v945, %v947
          %v969 = vadd.f32 %v885, %v949
          %v970 = vadd.f32 %v886, %v950
          %v971 = vadd.f32 %v887, %v929
          %v972 = vadd.f32 %v888, %v951
          %v973 = vadd.f32 %v889, %v952
          %v974 = vadd.f32 %v890, %v935
          %v975 = vadd.f32 %v891, %v953
          %v976 = vadd.f32 %v892, %v954
          %v977 = vadd.f32 %v893, %v941
          %v978 = vadd.f32 %v894, %v955
          %v979 = vadd.f32 %v895, %v956
          %v980 = vadd.f32 %v896, %v947
          %s981 = sadd.s32 %s798, 3
          %s982 = sld [smem:[#allocation4 + %s981]]
          %v983 = vstv %s982
          %v984 = vmul.f32 %v680, %v983
          %v985 = vmul.f32 %v682, %v983
          %v986 = vmul.f32 %v775, %v983
          %v987 = vmul.f32 %v686, %v983
          %v988 = vmul.f32 %v688, %v983
          %v989 = vmul.f32 %v780, %v983
          %v990 = vmul.f32 %v692, %v983
          %v991 = vmul.f32 %v694, %v983
          %v992 = vmul.f32 %v785, %v983
          %v993 = vmul.f32 %v698, %v983
          %v994 = vmul.f32 %v700, %v983
          %v995 = vmul.f32 %v790, %v983
          %1008 = vrot.lane.b32.xlu0 %v984, 125
          %v1009 = vpop.permute.xlu0 %1008
          %1010 = vrot.lane.b32.xlu0 %v985, 125
          %v1011 = vpop.permute.xlu0 %1010
          %1012 = vrot.lane.b32.xlu0 %v986, 125
          %v1013 = vpop.permute.xlu0 %1012
          %1014 = vrot.lane.b32.xlu0 %v987, 125
          %v1015 = vpop.permute.xlu0 %1014
          %1016 = vrot.lane.b32.xlu0 %v988, 125
          %v1017 = vpop.permute.xlu0 %1016
          %1018 = vrot.lane.b32.xlu0 %v989, 125
          %v1019 = vpop.permute.xlu0 %1018
          %1020 = vrot.lane.b32.xlu0 %v990, 125
          %v1021 = vpop.permute.xlu0 %1020
          %1022 = vrot.lane.b32.xlu0 %v991, 125
          %v1023 = vpop.permute.xlu0 %1022
          %1024 = vrot.lane.b32.xlu0 %v992, 125
          %v1025 = vpop.permute.xlu0 %1024
          %1026 = vrot.lane.b32.xlu0 %v993, 125
          %v1027 = vpop.permute.xlu0 %1026
          %1028 = vrot.lane.b32.xlu0 %v994, 125
          %v1029 = vpop.permute.xlu0 %1028
          %1030 = vrot.lane.b32.xlu0 %v995, 125
          %v1031 = vpop.permute.xlu0 %1030
          %vm1032 = vcmask 1022976
          %v1033 = vsel %vm1032, %v1009, %v1011
          %v1034 = vsel %vm1032, %v1011, %v1013
          %v1035 = vsel %vm1032, %v1015, %v1017
          %v1036 = vsel %vm1032, %v1017, %v1019
          %v1037 = vsel %vm1032, %v1021, %v1023
          %v1038 = vsel %vm1032, %v1023, %v1025
          %v1039 = vsel %vm1032, %v1027, %v1029
          %v1040 = vsel %vm1032, %v1029, %v1031
          %v1053 = vadd.f32 %v969, %v1033
          %v1054 = vadd.f32 %v970, %v1034
          %v1055 = vadd.f32 %v971, %v1013
          %v1056 = vadd.f32 %v972, %v1035
          %v1057 = vadd.f32 %v973, %v1036
          %v1058 = vadd.f32 %v974, %v1019
          %v1059 = vadd.f32 %v975, %v1037
          %v1060 = vadd.f32 %v976, %v1038
          %v1061 = vadd.f32 %v977, %v1025
          %v1062 = vadd.f32 %v978, %v1039
          %v1063 = vadd.f32 %v979, %v1040
          %v1064 = vadd.f32 %v980, %v1031
          %s1065 = sadd.s32 %s798, 4
          %s1066 = sld [smem:[#allocation4 + %s1065]]
          %v1067 = vstv %s1066
          %v1068 = vmul.f32 %v680, %v1067
          %v1069 = vmul.f32 %v682, %v1067
          %v1070 = vmul.f32 %v775, %v1067
          %v1071 = vmul.f32 %v686, %v1067
          %v1072 = vmul.f32 %v688, %v1067
          %v1073 = vmul.f32 %v780, %v1067
          %v1074 = vmul.f32 %v692, %v1067
          %v1075 = vmul.f32 %v694, %v1067
          %v1076 = vmul.f32 %v785, %v1067
          %v1077 = vmul.f32 %v698, %v1067
          %v1078 = vmul.f32 %v700, %v1067
          %v1079 = vmul.f32 %v790, %v1067
          %1092 = vrot.lane.b32.xlu0 %v1068, 124
          %v1093 = vpop.permute.xlu0 %1092
          %1094 = vrot.lane.b32.xlu0 %v1069, 124
          %v1095 = vpop.permute.xlu0 %1094
          %1096 = vrot.lane.b32.xlu0 %v1070, 124
          %v1097 = vpop.permute.xlu0 %1096
          %1098 = vrot.lane.b32.xlu0 %v1071, 124
          %v1099 = vpop.permute.xlu0 %1098
          %1100 = vrot.lane.b32.xlu0 %v1072, 124
          %v1101 = vpop.permute.xlu0 %1100
          %1102 = vrot.lane.b32.xlu0 %v1073, 124
          %v1103 = vpop.permute.xlu0 %1102
          %1104 = vrot.lane.b32.xlu0 %v1074, 124
          %v1105 = vpop.permute.xlu0 %1104
          %1106 = vrot.lane.b32.xlu0 %v1075, 124
          %v1107 = vpop.permute.xlu0 %1106
          %1108 = vrot.lane.b32.xlu0 %v1076, 124
          %v1109 = vpop.permute.xlu0 %1108
          %1110 = vrot.lane.b32.xlu0 %v1077, 124
          %v1111 = vpop.permute.xlu0 %1110
          %1112 = vrot.lane.b32.xlu0 %v1078, 124
          %v1113 = vpop.permute.xlu0 %1112
          %1114 = vrot.lane.b32.xlu0 %v1079, 124
          %v1115 = vpop.permute.xlu0 %1114
          %vm1116 = vcmask 1014784
          %v1117 = vsel %vm1116, %v1093, %v1095
          %v1118 = vsel %vm1116, %v1095, %v1097
          %v1119 = vsel %vm1116, %v1099, %v1101
          %v1120 = vsel %vm1116, %v1101, %v1103
          %v1121 = vsel %vm1116, %v1105, %v1107
          %v1122 = vsel %vm1116, %v1107, %v1109
          %v1123 = vsel %vm1116, %v1111, %v1113
          %v1124 = vsel %vm1116, %v1113, %v1115
          %v1137 = vadd.f32 %v1053, %v1117
          %v1138 = vadd.f32 %v1054, %v1118
          %v1139 = vadd.f32 %v1055, %v1097
          %v1140 = vadd.f32 %v1056, %v1119
          %v1141 = vadd.f32 %v1057, %v1120
          %v1142 = vadd.f32 %v1058, %v1103
          %v1143 = vadd.f32 %v1059, %v1121
          %v1144 = vadd.f32 %v1060, %v1122
          %v1145 = vadd.f32 %v1061, %v1109
          %v1146 = vadd.f32 %v1062, %v1123
          %v1147 = vadd.f32 %v1063, %v1124
          %v1148 = vadd.f32 %v1064, %v1115
          %s1149 = sadd.s32 %s798, 5
          %s1150 = sld [smem:[#allocation4 + %s1149]]
          %v1151 = vstv %s1150
          %v1152 = vmul.f32 %v680, %v1151
          %v1153 = vmul.f32 %v682, %v1151
          %v1154 = vmul.f32 %v775, %v1151
          %v1155 = vmul.f32 %v686, %v1151
          %v1156 = vmul.f32 %v688, %v1151
          %v1157 = vmul.f32 %v780, %v1151
          %v1158 = vmul.f32 %v692, %v1151
          %v1159 = vmul.f32 %v694, %v1151
          %v1160 = vmul.f32 %v785, %v1151
          %v1161 = vmul.f32 %v698, %v1151
          %v1162 = vmul.f32 %v700, %v1151
          %v1163 = vmul.f32 %v790, %v1151
          %v1164 = vmul.f32 %v704, %v1151
          %v1165 = vmul.f32 %v706, %v1151
          %v1166 = vmul.f32 %v795, %v1151
          %vm1182 = vcmask 1046528
          %v1183 = vrot.slane %v1152, 1
          %v1184 = vrot.slane %v1155, 1
          %v1185 = vsel %vm1182, %v1183, %v1184
          %v1186 = vrot.slane %v1153, 1
          %v1187 = vrot.slane %v1156, 1
          %v1188 = vsel %vm1182, %v1186, %v1187
          %v1189 = vrot.slane %v1154, 1
          %v1190 = vrot.slane %v1157, 1
          %v1191 = vsel %vm1182, %v1189, %v1190
          %v1192 = vrot.slane %v1158, 1
          %v1193 = vsel %vm1182, %v1184, %v1192
          %v1194 = vrot.slane %v1159, 1
          %v1195 = vsel %vm1182, %v1187, %v1194
          %v1196 = vrot.slane %v1160, 1
          %v1197 = vsel %vm1182, %v1190, %v1196
          %v1198 = vrot.slane %v1161, 1
          %v1199 = vsel %vm1182, %v1192, %v1198
          %v1200 = vrot.slane %v1162, 1
          %v1201 = vsel %vm1182, %v1194, %v1200
          %v1202 = vrot.slane %v1163, 1
          %v1203 = vsel %vm1182, %v1196, %v1202
          %v1204 = vrot.slane %v1164, 1
          %v1205 = vsel %vm1182, %v1198, %v1204
          %v1206 = vrot.slane %v1165, 1
          %v1207 = vsel %vm1182, %v1200, %v1206
          %v1208 = vrot.slane %v1166, 1
          %v1209 = vsel %vm1182, %v1202, %v1208
          %v1222 = vadd.f32 %v1137, %v1185
          %v1223 = vadd.f32 %v1138, %v1188
          %v1224 = vadd.f32 %v1139, %v1191
          %v1225 = vadd.f32 %v1140, %v1193
          %v1226 = vadd.f32 %v1141, %v1195
          %v1227 = vadd.f32 %v1142, %v1197
          %v1228 = vadd.f32 %v1143, %v1199
          %v1229 = vadd.f32 %v1144, %v1201
          %v1230 = vadd.f32 %v1145, %v1203
          %v1231 = vadd.f32 %v1146, %v1205
          %v1232 = vadd.f32 %v1147, %v1207
          %v1233 = vadd.f32 %v1148, %v1209
          %s1234 = sadd.s32 %s798, 6
          %s1235 = sld [smem:[#allocation4 + %s1234]]
          %v1236 = vstv %s1235
          %v1237 = vmul.f32 %v680, %v1236
          %v1238 = vmul.f32 %v682, %v1236
          %v1239 = vmul.f32 %v775, %v1236
          %v1240 = vmul.f32 %v686, %v1236
          %v1241 = vmul.f32 %v688, %v1236
          %v1242 = vmul.f32 %v780, %v1236
          %v1243 = vmul.f32 %v692, %v1236
          %v1244 = vmul.f32 %v694, %v1236
          %v1245 = vmul.f32 %v785, %v1236
          %v1246 = vmul.f32 %v698, %v1236
          %v1247 = vmul.f32 %v700, %v1236
          %v1248 = vmul.f32 %v790, %v1236
          %v1249 = vmul.f32 %v704, %v1236
          %v1250 = vmul.f32 %v706, %v1236
          %v1251 = vmul.f32 %v795, %v1236
          %v1267 = vrot.slane %v1237, 1
          %v1268 = vrot.slane %v1240, 1
          %v1269 = vsel %vm1182, %v1267, %v1268
          %v1270 = vrot.slane %v1238, 1
          %v1271 = vrot.slane %v1241, 1
          %v1272 = vsel %vm1182, %v1270, %v1271
          %v1273 = vrot.slane %v1239, 1
          %v1274 = vrot.slane %v1242, 1
          %v1275 = vsel %vm1182, %v1273, %v1274
          %v1276 = vrot.slane %v1243, 1
          %v1277 = vsel %vm1182, %v1268, %v1276
          %v1278 = vrot.slane %v1244, 1
          %v1279 = vsel %vm1182, %v1271, %v1278
          %v1280 = vrot.slane %v1245, 1
          %v1281 = vsel %vm1182, %v1274, %v1280
          %v1282 = vrot.slane %v1246, 1
          %v1283 = vsel %vm1182, %v1276, %v1282
          %v1284 = vrot.slane %v1247, 1
          %v1285 = vsel %vm1182, %v1278, %v1284
          %v1286 = vrot.slane %v1248, 1
          %v1287 = vsel %vm1182, %v1280, %v1286
          %v1288 = vrot.slane %v1249, 1
          %v1289 = vsel %vm1182, %v1282, %v1288
          %v1290 = vrot.slane %v1250, 1
          %v1291 = vsel %vm1182, %v1284, %v1290
          %v1292 = vrot.slane %v1251, 1
          %v1293 = vsel %vm1182, %v1286, %v1292
          %1294 = vrot.lane.b32.xlu0 %v1269, 127
          %v1295 = vpop.permute.xlu0 %1294
          %1296 = vrot.lane.b32.xlu0 %v1272, 127
          %v1297 = vpop.permute.xlu0 %1296
          %1298 = vrot.lane.b32.xlu0 %v1275, 127
          %v1299 = vpop.permute.xlu0 %1298
          %1300 = vrot.lane.b32.xlu0 %v1277, 127
          %v1301 = vpop.permute.xlu0 %1300
          %1302 = vrot.lane.b32.xlu0 %v1279, 127
          %v1303 = vpop.permute.xlu0 %1302
          %1304 = vrot.lane.b32.xlu0 %v1281, 127
          %v1305 = vpop.permute.xlu0 %1304
          %1306 = vrot.lane.b32.xlu0 %v1283, 127
          %v1307 = vpop.permute.xlu0 %1306
          %1308 = vrot.lane.b32.xlu0 %v1285, 127
          %v1309 = vpop.permute.xlu0 %1308
          %1310 = vrot.lane.b32.xlu0 %v1287, 127
          %v1311 = vpop.permute.xlu0 %1310
          %1312 = vrot.lane.b32.xlu0 %v1289, 127
          %v1313 = vpop.permute.xlu0 %1312
          %1314 = vrot.lane.b32.xlu0 %v1291, 127
          %v1315 = vpop.permute.xlu0 %1314
          %1316 = vrot.lane.b32.xlu0 %v1293, 127
          %v1317 = vpop.permute.xlu0 %1316
          %v1318 = vsel %vm864, %v1295, %v1297
          %v1319 = vsel %vm864, %v1297, %v1299
          %v1320 = vsel %vm864, %v1301, %v1303
          %v1321 = vsel %vm864, %v1303, %v1305
          %v1322 = vsel %vm864, %v1307, %v1309
          %v1323 = vsel %vm864, %v1309, %v1311
          %v1324 = vsel %vm864, %v1313, %v1315
          %v1325 = vsel %vm864, %v1315, %v1317
          %v1338 = vadd.f32 %v1222, %v1318
          %v1339 = vadd.f32 %v1223, %v1319
          %v1340 = vadd.f32 %v1224, %v1299
          %v1341 = vadd.f32 %v1225, %v1320
          %v1342 = vadd.f32 %v1226, %v1321
          %v1343 = vadd.f32 %v1227, %v1305
          %v1344 = vadd.f32 %v1228, %v1322
          %v1345 = vadd.f32 %v1229, %v1323
          %v1346 = vadd.f32 %v1230, %v1311
          %v1347 = vadd.f32 %v1231, %v1324
          %v1348 = vadd.f32 %v1232, %v1325
          %v1349 = vadd.f32 %v1233, %v1317
          %s1350 = sadd.s32 %s798, 7
          %s1351 = sld [smem:[#allocation4 + %s1350]]
          %v1352 = vstv %s1351
          %v1353 = vmul.f32 %v680, %v1352
          %v1354 = vmul.f32 %v682, %v1352
          %v1355 = vmul.f32 %v775, %v1352
          %v1356 = vmul.f32 %v686, %v1352
          %v1357 = vmul.f32 %v688, %v1352
          %v1358 = vmul.f32 %v780, %v1352
          %v1359 = vmul.f32 %v692, %v1352
          %v1360 = vmul.f32 %v694, %v1352
          %v1361 = vmul.f32 %v785, %v1352
          %v1362 = vmul.f32 %v698, %v1352
          %v1363 = vmul.f32 %v700, %v1352
          %v1364 = vmul.f32 %v790, %v1352
          %v1365 = vmul.f32 %v704, %v1352
          %v1366 = vmul.f32 %v706, %v1352
          %v1367 = vmul.f32 %v795, %v1352
          %v1383 = vrot.slane %v1353, 1
          %v1384 = vrot.slane %v1356, 1
          %v1385 = vsel %vm1182, %v1383, %v1384
          %v1386 = vrot.slane %v1354, 1
          %v1387 = vrot.slane %v1357, 1
          %v1388 = vsel %vm1182, %v1386, %v1387
          %v1389 = vrot.slane %v1355, 1
          %v1390 = vrot.slane %v1358, 1
          %v1391 = vsel %vm1182, %v1389, %v1390
          %v1392 = vrot.slane %v1359, 1
          %v1393 = vsel %vm1182, %v1384, %v1392
          %v1394 = vrot.slane %v1360, 1
          %v1395 = vsel %vm1182, %v1387, %v1394
          %v1396 = vrot.slane %v1361, 1
          %v1397 = vsel %vm1182, %v1390, %v1396
          %v1398 = vrot.slane %v1362, 1
          %v1399 = vsel %vm1182, %v1392, %v1398
          %v1400 = vrot.slane %v1363, 1
          %v1401 = vsel %vm1182, %v1394, %v1400
          %v1402 = vrot.slane %v1364, 1
          %v1403 = vsel %vm1182, %v1396, %v1402
          %v1404 = vrot.slane %v1365, 1
          %v1405 = vsel %vm1182, %v1398, %v1404
          %v1406 = vrot.slane %v1366, 1
          %v1407 = vsel %vm1182, %v1400, %v1406
          %v1408 = vrot.slane %v1367, 1
          %v1409 = vsel %vm1182, %v1402, %v1408
          %1410 = vrot.lane.b32.xlu0 %v1385, 126
          %v1411 = vpop.permute.xlu0 %1410
          %1412 = vrot.lane.b32.xlu0 %v1388, 126
          %v1413 = vpop.permute.xlu0 %1412
          %1414 = vrot.lane.b32.xlu0 %v1391, 126
          %v1415 = vpop.permute.xlu0 %1414
          %1416 = vrot.lane.b32.xlu0 %v1393, 126
          %v1417 = vpop.permute.xlu0 %1416
          %1418 = vrot.lane.b32.xlu0 %v1395, 126
          %v1419 = vpop.permute.xlu0 %1418
          %1420 = vrot.lane.b32.xlu0 %v1397, 126
          %v1421 = vpop.permute.xlu0 %1420
          %1422 = vrot.lane.b32.xlu0 %v1399, 126
          %v1423 = vpop.permute.xlu0 %1422
          %1424 = vrot.lane.b32.xlu0 %v1401, 126
          %v1425 = vpop.permute.xlu0 %1424
          %1426 = vrot.lane.b32.xlu0 %v1403, 126
          %v1427 = vpop.permute.xlu0 %1426
          %1428 = vrot.lane.b32.xlu0 %v1405, 126
          %v1429 = vpop.permute.xlu0 %1428
          %1430 = vrot.lane.b32.xlu0 %v1407, 126
          %v1431 = vpop.permute.xlu0 %1430
          %1432 = vrot.lane.b32.xlu0 %v1409, 126
          %v1433 = vpop.permute.xlu0 %1432
          %v1434 = vsel %vm948, %v1411, %v1413
          %v1435 = vsel %vm948, %v1413, %v1415
          %v1436 = vsel %vm948, %v1417, %v1419
          %v1437 = vsel %vm948, %v1419, %v1421
          %v1438 = vsel %vm948, %v1423, %v1425
          %v1439 = vsel %vm948, %v1425, %v1427
          %v1440 = vsel %vm948, %v1429, %v1431
          %v1441 = vsel %vm948, %v1431, %v1433
          %v1454 = vadd.f32 %v1338, %v1434
          %v1455 = vadd.f32 %v1339, %v1435
          %v1456 = vadd.f32 %v1340, %v1415
          %v1457 = vadd.f32 %v1341, %v1436
          %v1458 = vadd.f32 %v1342, %v1437
          %v1459 = vadd.f32 %v1343, %v1421
          %v1460 = vadd.f32 %v1344, %v1438
          %v1461 = vadd.f32 %v1345, %v1439
          %v1462 = vadd.f32 %v1346, %v1427
          %v1463 = vadd.f32 %v1347, %v1440
          %v1464 = vadd.f32 %v1348, %v1441
          %v1465 = vadd.f32 %v1349, %v1433
          %s1466 = sadd.s32 %s798, 8
          %s1467 = sld [smem:[#allocation4 + %s1466]]
          %v1468 = vstv %s1467
          %v1469 = vmul.f32 %v680, %v1468
          %v1470 = vmul.f32 %v682, %v1468
          %v1471 = vmul.f32 %v775, %v1468
          %v1472 = vmul.f32 %v686, %v1468
          %v1473 = vmul.f32 %v688, %v1468
          %v1474 = vmul.f32 %v780, %v1468
          %v1475 = vmul.f32 %v692, %v1468
          %v1476 = vmul.f32 %v694, %v1468
          %v1477 = vmul.f32 %v785, %v1468
          %v1478 = vmul.f32 %v698, %v1468
          %v1479 = vmul.f32 %v700, %v1468
          %v1480 = vmul.f32 %v790, %v1468
          %v1481 = vmul.f32 %v704, %v1468
          %v1482 = vmul.f32 %v706, %v1468
          %v1483 = vmul.f32 %v795, %v1468
          %v1499 = vrot.slane %v1469, 1
          %v1500 = vrot.slane %v1472, 1
          %v1501 = vsel %vm1182, %v1499, %v1500
          %v1502 = vrot.slane %v1470, 1
          %v1503 = vrot.slane %v1473, 1
          %v1504 = vsel %vm1182, %v1502, %v1503
          %v1505 = vrot.slane %v1471, 1
          %v1506 = vrot.slane %v1474, 1
          %v1507 = vsel %vm1182, %v1505, %v1506
          %v1508 = vrot.slane %v1475, 1
          %v1509 = vsel %vm1182, %v1500, %v1508
          %v1510 = vrot.slane %v1476, 1
          %v1511 = vsel %vm1182, %v1503, %v1510
          %v1512 = vrot.slane %v1477, 1
          %v1513 = vsel %vm1182, %v1506, %v1512
          %v1514 = vrot.slane %v1478, 1
          %v1515 = vsel %vm1182, %v1508, %v1514
          %v1516 = vrot.slane %v1479, 1
          %v1517 = vsel %vm1182, %v1510, %v1516
          %v1518 = vrot.slane %v1480, 1
          %v1519 = vsel %vm1182, %v1512, %v1518
          %v1520 = vrot.slane %v1481, 1
          %v1521 = vsel %vm1182, %v1514, %v1520
          %v1522 = vrot.slane %v1482, 1
          %v1523 = vsel %vm1182, %v1516, %v1522
          %v1524 = vrot.slane %v1483, 1
          %v1525 = vsel %vm1182, %v1518, %v1524
          %1526 = vrot.lane.b32.xlu0 %v1501, 125
          %v1527 = vpop.permute.xlu0 %1526
          %1528 = vrot.lane.b32.xlu0 %v1504, 125
          %v1529 = vpop.permute.xlu0 %1528
          %1530 = vrot.lane.b32.xlu0 %v1507, 125
          %v1531 = vpop.permute.xlu0 %1530
          %1532 = vrot.lane.b32.xlu0 %v1509, 125
          %v1533 = vpop.permute.xlu0 %1532
          %1534 = vrot.lane.b32.xlu0 %v1511, 125
          %v1535 = vpop.permute.xlu0 %1534
          %1536 = vrot.lane.b32.xlu0 %v1513, 125
          %v1537 = vpop.permute.xlu0 %1536
          %1538 = vrot.lane.b32.xlu0 %v1515, 125
          %v1539 = vpop.permute.xlu0 %1538
          %1540 = vrot.lane.b32.xlu0 %v1517, 125
          %v1541 = vpop.permute.xlu0 %1540
          %1542 = vrot.lane.b32.xlu0 %v1519, 125
          %v1543 = vpop.permute.xlu0 %1542
          %1544 = vrot.lane.b32.xlu0 %v1521, 125
          %v1545 = vpop.permute.xlu0 %1544
          %1546 = vrot.lane.b32.xlu0 %v1523, 125
          %v1547 = vpop.permute.xlu0 %1546
          %1548 = vrot.lane.b32.xlu0 %v1525, 125
          %v1549 = vpop.permute.xlu0 %1548
          %v1550 = vsel %vm1032, %v1527, %v1529
          %v1551 = vsel %vm1032, %v1529, %v1531
          %v1552 = vsel %vm1032, %v1533, %v1535
          %v1553 = vsel %vm1032, %v1535, %v1537
          %v1554 = vsel %vm1032, %v1539, %v1541
          %v1555 = vsel %vm1032, %v1541, %v1543
          %v1556 = vsel %vm1032, %v1545, %v1547
          %v1557 = vsel %vm1032, %v1547, %v1549
          %v1570 = vadd.f32 %v1454, %v1550
          %v1571 = vadd.f32 %v1455, %v1551
          %v1572 = vadd.f32 %v1456, %v1531
          %v1573 = vadd.f32 %v1457, %v1552
          %v1574 = vadd.f32 %v1458, %v1553
          %v1575 = vadd.f32 %v1459, %v1537
          %v1576 = vadd.f32 %v1460, %v1554
          %v1577 = vadd.f32 %v1461, %v1555
          %v1578 = vadd.f32 %v1462, %v1543
          %v1579 = vadd.f32 %v1463, %v1556
          %v1580 = vadd.f32 %v1464, %v1557
          %v1581 = vadd.f32 %v1465, %v1549
          %s1582 = sadd.s32 %s798, 9
          %s1583 = sld [smem:[#allocation4 + %s1582]]
          %v1584 = vstv %s1583
          %v1585 = vmul.f32 %v680, %v1584
          %v1586 = vmul.f32 %v682, %v1584
          %v1587 = vmul.f32 %v775, %v1584
          %v1588 = vmul.f32 %v686, %v1584
          %v1589 = vmul.f32 %v688, %v1584
          %v1590 = vmul.f32 %v780, %v1584
          %v1591 = vmul.f32 %v692, %v1584
          %v1592 = vmul.f32 %v694, %v1584
          %v1593 = vmul.f32 %v785, %v1584
          %v1594 = vmul.f32 %v698, %v1584
          %v1595 = vmul.f32 %v700, %v1584
          %v1596 = vmul.f32 %v790, %v1584
          %v1597 = vmul.f32 %v704, %v1584
          %v1598 = vmul.f32 %v706, %v1584
          %v1599 = vmul.f32 %v795, %v1584
          %v1615 = vrot.slane %v1585, 1
          %v1616 = vrot.slane %v1588, 1
          %v1617 = vsel %vm1182, %v1615, %v1616
          %v1618 = vrot.slane %v1586, 1
          %v1619 = vrot.slane %v1589, 1
          %v1620 = vsel %vm1182, %v1618, %v1619
          %v1621 = vrot.slane %v1587, 1
          %v1622 = vrot.slane %v1590, 1
          %v1623 = vsel %vm1182, %v1621, %v1622
          %v1624 = vrot.slane %v1591, 1
          %v1625 = vsel %vm1182, %v1616, %v1624
          %v1626 = vrot.slane %v1592, 1
          %v1627 = vsel %vm1182, %v1619, %v1626
          %v1628 = vrot.slane %v1593, 1
          %v1629 = vsel %vm1182, %v1622, %v1628
          %v1630 = vrot.slane %v1594, 1
          %v1631 = vsel %vm1182, %v1624, %v1630
          %v1632 = vrot.slane %v1595, 1
          %v1633 = vsel %vm1182, %v1626, %v1632
          %v1634 = vrot.slane %v1596, 1
          %v1635 = vsel %vm1182, %v1628, %v1634
          %v1636 = vrot.slane %v1597, 1
          %v1637 = vsel %vm1182, %v1630, %v1636
          %v1638 = vrot.slane %v1598, 1
          %v1639 = vsel %vm1182, %v1632, %v1638
          %v1640 = vrot.slane %v1599, 1
          %v1641 = vsel %vm1182, %v1634, %v1640
          %1642 = vrot.lane.b32.xlu0 %v1617, 124
          %v1643 = vpop.permute.xlu0 %1642
          %1644 = vrot.lane.b32.xlu0 %v1620, 124
          %v1645 = vpop.permute.xlu0 %1644
          %1646 = vrot.lane.b32.xlu0 %v1623, 124
          %v1647 = vpop.permute.xlu0 %1646
          %1648 = vrot.lane.b32.xlu0 %v1625, 124
          %v1649 = vpop.permute.xlu0 %1648
          %1650 = vrot.lane.b32.xlu0 %v1627, 124
          %v1651 = vpop.permute.xlu0 %1650
          %1652 = vrot.lane.b32.xlu0 %v1629, 124
          %v1653 = vpop.permute.xlu0 %1652
          %1654 = vrot.lane.b32.xlu0 %v1631, 124
          %v1655 = vpop.permute.xlu0 %1654
          %1656 = vrot.lane.b32.xlu0 %v1633, 124
          %v1657 = vpop.permute.xlu0 %1656
          %1658 = vrot.lane.b32.xlu0 %v1635, 124
          %v1659 = vpop.permute.xlu0 %1658
          %1660 = vrot.lane.b32.xlu0 %v1637, 124
          %v1661 = vpop.permute.xlu0 %1660
          %1662 = vrot.lane.b32.xlu0 %v1639, 124
          %v1663 = vpop.permute.xlu0 %1662
          %1664 = vrot.lane.b32.xlu0 %v1641, 124
          %v1665 = vpop.permute.xlu0 %1664
          %v1666 = vsel %vm1116, %v1643, %v1645
          %v1667 = vsel %vm1116, %v1645, %v1647
          %v1668 = vsel %vm1116, %v1649, %v1651
          %v1669 = vsel %vm1116, %v1651, %v1653
          %v1670 = vsel %vm1116, %v1655, %v1657
          %v1671 = vsel %vm1116, %v1657, %v1659
          %v1672 = vsel %vm1116, %v1661, %v1663
          %v1673 = vsel %vm1116, %v1663, %v1665
          %v1686 = vadd.f32 %v1570, %v1666
          %v1687 = vadd.f32 %v1571, %v1667
          %v1688 = vadd.f32 %v1572, %v1647
          %v1689 = vadd.f32 %v1573, %v1668
          %v1690 = vadd.f32 %v1574, %v1669
          %v1691 = vadd.f32 %v1575, %v1653
          %v1692 = vadd.f32 %v1576, %v1670
          %v1693 = vadd.f32 %v1577, %v1671
          %v1694 = vadd.f32 %v1578, %v1659
          %v1695 = vadd.f32 %v1579, %v1672
          %v1696 = vadd.f32 %v1580, %v1673
          %v1697 = vadd.f32 %v1581, %v1665
          %s1698 = sadd.s32 %s798, 10
          %s1699 = sld [smem:[#allocation4 + %s1698]]
          %v1700 = vstv %s1699
          %v1701 = vmul.f32 %v680, %v1700
          %v1702 = vmul.f32 %v682, %v1700
          %v1703 = vmul.f32 %v775, %v1700
          %v1704 = vmul.f32 %v686, %v1700
          %v1705 = vmul.f32 %v688, %v1700
          %v1706 = vmul.f32 %v780, %v1700
          %v1707 = vmul.f32 %v692, %v1700
          %v1708 = vmul.f32 %v694, %v1700
          %v1709 = vmul.f32 %v785, %v1700
          %v1710 = vmul.f32 %v698, %v1700
          %v1711 = vmul.f32 %v700, %v1700
          %v1712 = vmul.f32 %v790, %v1700
          %v1713 = vmul.f32 %v704, %v1700
          %v1714 = vmul.f32 %v706, %v1700
          %v1715 = vmul.f32 %v795, %v1700
          %vm1731 = vcmask 1045504
          %v1732 = vrot.slane %v1701, 2
          %v1733 = vrot.slane %v1704, 2
          %v1734 = vsel %vm1731, %v1732, %v1733
          %v1735 = vrot.slane %v1702, 2
          %v1736 = vrot.slane %v1705, 2
          %v1737 = vsel %vm1731, %v1735, %v1736
          %v1738 = vrot.slane %v1703, 2
          %v1739 = vrot.slane %v1706, 2
          %v1740 = vsel %vm1731, %v1738, %v1739
          %v1741 = vrot.slane %v1707, 2
          %v1742 = vsel %vm1731, %v1733, %v1741
          %v1743 = vrot.slane %v1708, 2
          %v1744 = vsel %vm1731, %v1736, %v1743
          %v1745 = vrot.slane %v1709, 2
          %v1746 = vsel %vm1731, %v1739, %v1745
          %v1747 = vrot.slane %v1710, 2
          %v1748 = vsel %vm1731, %v1741, %v1747
          %v1749 = vrot.slane %v1711, 2
          %v1750 = vsel %vm1731, %v1743, %v1749
          %v1751 = vrot.slane %v1712, 2
          %v1752 = vsel %vm1731, %v1745, %v1751
          %v1753 = vrot.slane %v1713, 2
          %v1754 = vsel %vm1731, %v1747, %v1753
          %v1755 = vrot.slane %v1714, 2
          %v1756 = vsel %vm1731, %v1749, %v1755
          %v1757 = vrot.slane %v1715, 2
          %v1758 = vsel %vm1731, %v1751, %v1757
          %v1771 = vadd.f32 %v1686, %v1734
          %v1772 = vadd.f32 %v1687, %v1737
          %v1773 = vadd.f32 %v1688, %v1740
          %v1774 = vadd.f32 %v1689, %v1742
          %v1775 = vadd.f32 %v1690, %v1744
          %v1776 = vadd.f32 %v1691, %v1746
          %v1777 = vadd.f32 %v1692, %v1748
          %v1778 = vadd.f32 %v1693, %v1750
          %v1779 = vadd.f32 %v1694, %v1752
          %v1780 = vadd.f32 %v1695, %v1754
          %v1781 = vadd.f32 %v1696, %v1756
          %v1782 = vadd.f32 %v1697, %v1758
          %s1783 = sadd.s32 %s798, 11
          %s1784 = sld [smem:[#allocation4 + %s1783]]
          %v1785 = vstv %s1784
          %v1786 = vmul.f32 %v680, %v1785
          %v1787 = vmul.f32 %v682, %v1785
          %v1788 = vmul.f32 %v775, %v1785
          %v1789 = vmul.f32 %v686, %v1785
          %v1790 = vmul.f32 %v688, %v1785
          %v1791 = vmul.f32 %v780, %v1785
          %v1792 = vmul.f32 %v692, %v1785
          %v1793 = vmul.f32 %v694, %v1785
          %v1794 = vmul.f32 %v785, %v1785
          %v1795 = vmul.f32 %v698, %v1785
          %v1796 = vmul.f32 %v700, %v1785
          %v1797 = vmul.f32 %v790, %v1785
          %v1798 = vmul.f32 %v704, %v1785
          %v1799 = vmul.f32 %v706, %v1785
          %v1800 = vmul.f32 %v795, %v1785
          %v1816 = vrot.slane %v1786, 2
          %v1817 = vrot.slane %v1789, 2
          %v1818 = vsel %vm1731, %v1816, %v1817
          %v1819 = vrot.slane %v1787, 2
          %v1820 = vrot.slane %v1790, 2
          %v1821 = vsel %vm1731, %v1819, %v1820
          %v1822 = vrot.slane %v1788, 2
          %v1823 = vrot.slane %v1791, 2
          %v1824 = vsel %vm1731, %v1822, %v1823
          %v1825 = vrot.slane %v1792, 2
          %v1826 = vsel %vm1731, %v1817, %v1825
          %v1827 = vrot.slane %v1793, 2
          %v1828 = vsel %vm1731, %v1820, %v1827
          %v1829 = vrot.slane %v1794, 2
          %v1830 = vsel %vm1731, %v1823, %v1829
          %v1831 = vrot.slane %v1795, 2
          %v1832 = vsel %vm1731, %v1825, %v1831
          %v1833 = vrot.slane %v1796, 2
          %v1834 = vsel %vm1731, %v1827, %v1833
          %v1835 = vrot.slane %v1797, 2
          %v1836 = vsel %vm1731, %v1829, %v1835
          %v1837 = vrot.slane %v1798, 2
          %v1838 = vsel %vm1731, %v1831, %v1837
          %v1839 = vrot.slane %v1799, 2
          %v1840 = vsel %vm1731, %v1833, %v1839
          %v1841 = vrot.slane %v1800, 2
          %v1842 = vsel %vm1731, %v1835, %v1841
          %1843 = vrot.lane.b32.xlu0 %v1818, 127
          %v1844 = vpop.permute.xlu0 %1843
          %1845 = vrot.lane.b32.xlu0 %v1821, 127
          %v1846 = vpop.permute.xlu0 %1845
          %1847 = vrot.lane.b32.xlu0 %v1824, 127
          %v1848 = vpop.permute.xlu0 %1847
          %1849 = vrot.lane.b32.xlu0 %v1826, 127
          %v1850 = vpop.permute.xlu0 %1849
          %1851 = vrot.lane.b32.xlu0 %v1828, 127
          %v1852 = vpop.permute.xlu0 %1851
          %1853 = vrot.lane.b32.xlu0 %v1830, 127
          %v1854 = vpop.permute.xlu0 %1853
          %1855 = vrot.lane.b32.xlu0 %v1832, 127
          %v1856 = vpop.permute.xlu0 %1855
          %1857 = vrot.lane.b32.xlu0 %v1834, 127
          %v1858 = vpop.permute.xlu0 %1857
          %1859 = vrot.lane.b32.xlu0 %v1836, 127
          %v1860 = vpop.permute.xlu0 %1859
          %1861 = vrot.lane.b32.xlu0 %v1838, 127
          %v1862 = vpop.permute.xlu0 %1861
          %1863 = vrot.lane.b32.xlu0 %v1840, 127
          %v1864 = vpop.permute.xlu0 %1863
          %1865 = vrot.lane.b32.xlu0 %v1842, 127
          %v1866 = vpop.permute.xlu0 %1865
          %v1867 = vsel %vm864, %v1844, %v1846
          %v1868 = vsel %vm864, %v1846, %v1848
          %v1869 = vsel %vm864, %v1850, %v1852
          %v1870 = vsel %vm864, %v1852, %v1854
          %v1871 = vsel %vm864, %v1856, %v1858
          %v1872 = vsel %vm864, %v1858, %v1860
          %v1873 = vsel %vm864, %v1862, %v1864
          %v1874 = vsel %vm864, %v1864, %v1866
          %v1887 = vadd.f32 %v1771, %v1867
          %v1888 = vadd.f32 %v1772, %v1868
          %v1889 = vadd.f32 %v1773, %v1848
          %v1890 = vadd.f32 %v1774, %v1869
          %v1891 = vadd.f32 %v1775, %v1870
          %v1892 = vadd.f32 %v1776, %v1854
          %v1893 = vadd.f32 %v1777, %v1871
          %v1894 = vadd.f32 %v1778, %v1872
          %v1895 = vadd.f32 %v1779, %v1860
          %v1896 = vadd.f32 %v1780, %v1873
          %v1897 = vadd.f32 %v1781, %v1874
          %v1898 = vadd.f32 %v1782, %v1866
          %s1899 = sadd.s32 %s798, 12
          %s1900 = sld [smem:[#allocation4 + %s1899]]
          %v1901 = vstv %s1900
          %v1902 = vmul.f32 %v680, %v1901
          %v1903 = vmul.f32 %v682, %v1901
          %v1904 = vmul.f32 %v775, %v1901
          %v1905 = vmul.f32 %v686, %v1901
          %v1906 = vmul.f32 %v688, %v1901
          %v1907 = vmul.f32 %v780, %v1901
          %v1908 = vmul.f32 %v692, %v1901
          %v1909 = vmul.f32 %v694, %v1901
          %v1910 = vmul.f32 %v785, %v1901
          %v1911 = vmul.f32 %v698, %v1901
          %v1912 = vmul.f32 %v700, %v1901
          %v1913 = vmul.f32 %v790, %v1901
          %v1914 = vmul.f32 %v704, %v1901
          %v1915 = vmul.f32 %v706, %v1901
          %v1916 = vmul.f32 %v795, %v1901
          %v1932 = vrot.slane %v1902, 2
          %v1933 = vrot.slane %v1905, 2
          %v1934 = vsel %vm1731, %v1932, %v1933
          %v1935 = vrot.slane %v1903, 2
          %v1936 = vrot.slane %v1906, 2
          %v1937 = vsel %vm1731, %v1935, %v1936
          %v1938 = vrot.slane %v1904, 2
          %v1939 = vrot.slane %v1907, 2
          %v1940 = vsel %vm1731, %v1938, %v1939
          %v1941 = vrot.slane %v1908, 2
          %v1942 = vsel %vm1731, %v1933, %v1941
          %v1943 = vrot.slane %v1909, 2
          %v1944 = vsel %vm1731, %v1936, %v1943
          %v1945 = vrot.slane %v1910, 2
          %v1946 = vsel %vm1731, %v1939, %v1945
          %v1947 = vrot.slane %v1911, 2
          %v1948 = vsel %vm1731, %v1941, %v1947
          %v1949 = vrot.slane %v1912, 2
          %v1950 = vsel %vm1731, %v1943, %v1949
          %v1951 = vrot.slane %v1913, 2
          %v1952 = vsel %vm1731, %v1945, %v1951
          %v1953 = vrot.slane %v1914, 2
          %v1954 = vsel %vm1731, %v1947, %v1953
          %v1955 = vrot.slane %v1915, 2
          %v1956 = vsel %vm1731, %v1949, %v1955
          %v1957 = vrot.slane %v1916, 2
          %v1958 = vsel %vm1731, %v1951, %v1957
          %1959 = vrot.lane.b32.xlu0 %v1934, 126
          %v1960 = vpop.permute.xlu0 %1959
          %1961 = vrot.lane.b32.xlu0 %v1937, 126
          %v1962 = vpop.permute.xlu0 %1961
          %1963 = vrot.lane.b32.xlu0 %v1940, 126
          %v1964 = vpop.permute.xlu0 %1963
          %1965 = vrot.lane.b32.xlu0 %v1942, 126
          %v1966 = vpop.permute.xlu0 %1965
          %1967 = vrot.lane.b32.xlu0 %v1944, 126
          %v1968 = vpop.permute.xlu0 %1967
          %1969 = vrot.lane.b32.xlu0 %v1946, 126
          %v1970 = vpop.permute.xlu0 %1969
          %1971 = vrot.lane.b32.xlu0 %v1948, 126
          %v1972 = vpop.permute.xlu0 %1971
          %1973 = vrot.lane.b32.xlu0 %v1950, 126
          %v1974 = vpop.permute.xlu0 %1973
          %1975 = vrot.lane.b32.xlu0 %v1952, 126
          %v1976 = vpop.permute.xlu0 %1975
          %1977 = vrot.lane.b32.xlu0 %v1954, 126
          %v1978 = vpop.permute.xlu0 %1977
          %1979 = vrot.lane.b32.xlu0 %v1956, 126
          %v1980 = vpop.permute.xlu0 %1979
          %1981 = vrot.lane.b32.xlu0 %v1958, 126
          %v1982 = vpop.permute.xlu0 %1981
          %v1983 = vsel %vm948, %v1960, %v1962
          %v1984 = vsel %vm948, %v1962, %v1964
          %v1985 = vsel %vm948, %v1966, %v1968
          %v1986 = vsel %vm948, %v1968, %v1970
          %v1987 = vsel %vm948, %v1972, %v1974
          %v1988 = vsel %vm948, %v1974, %v1976
          %v1989 = vsel %vm948, %v1978, %v1980
          %v1990 = vsel %vm948, %v1980, %v1982
          %v2003 = vadd.f32 %v1887, %v1983
          %v2004 = vadd.f32 %v1888, %v1984
          %v2005 = vadd.f32 %v1889, %v1964
          %v2006 = vadd.f32 %v1890, %v1985
          %v2007 = vadd.f32 %v1891, %v1986
          %v2008 = vadd.f32 %v1892, %v1970
          %v2009 = vadd.f32 %v1893, %v1987
          %v2010 = vadd.f32 %v1894, %v1988
          %v2011 = vadd.f32 %v1895, %v1976
          %v2012 = vadd.f32 %v1896, %v1989
          %v2013 = vadd.f32 %v1897, %v1990
          %v2014 = vadd.f32 %v1898, %v1982
          %s2015 = sadd.s32 %s798, 13
          %s2016 = sld [smem:[#allocation4 + %s2015]]
          %v2017 = vstv %s2016
          %v2018 = vmul.f32 %v680, %v2017
          %v2019 = vmul.f32 %v682, %v2017
          %v2020 = vmul.f32 %v775, %v2017
          %v2021 = vmul.f32 %v686, %v2017
          %v2022 = vmul.f32 %v688, %v2017
          %v2023 = vmul.f32 %v780, %v2017
          %v2024 = vmul.f32 %v692, %v2017
          %v2025 = vmul.f32 %v694, %v2017
          %v2026 = vmul.f32 %v785, %v2017
          %v2027 = vmul.f32 %v698, %v2017
          %v2028 = vmul.f32 %v700, %v2017
          %v2029 = vmul.f32 %v790, %v2017
          %v2030 = vmul.f32 %v704, %v2017
          %v2031 = vmul.f32 %v706, %v2017
          %v2032 = vmul.f32 %v795, %v2017
          %v2048 = vrot.slane %v2018, 2
          %v2049 = vrot.slane %v2021, 2
          %v2050 = vsel %vm1731, %v2048, %v2049
          %v2051 = vrot.slane %v2019, 2
          %v2052 = vrot.slane %v2022, 2
          %v2053 = vsel %vm1731, %v2051, %v2052
          %v2054 = vrot.slane %v2020, 2
          %v2055 = vrot.slane %v2023, 2
          %v2056 = vsel %vm1731, %v2054, %v2055
          %v2057 = vrot.slane %v2024, 2
          %v2058 = vsel %vm1731, %v2049, %v2057
          %v2059 = vrot.slane %v2025, 2
          %v2060 = vsel %vm1731, %v2052, %v2059
          %v2061 = vrot.slane %v2026, 2
          %v2062 = vsel %vm1731, %v2055, %v2061
          %v2063 = vrot.slane %v2027, 2
          %v2064 = vsel %vm1731, %v2057, %v2063
          %v2065 = vrot.slane %v2028, 2
          %v2066 = vsel %vm1731, %v2059, %v2065
          %v2067 = vrot.slane %v2029, 2
          %v2068 = vsel %vm1731, %v2061, %v2067
          %v2069 = vrot.slane %v2030, 2
          %v2070 = vsel %vm1731, %v2063, %v2069
          %v2071 = vrot.slane %v2031, 2
          %v2072 = vsel %vm1731, %v2065, %v2071
          %v2073 = vrot.slane %v2032, 2
          %v2074 = vsel %vm1731, %v2067, %v2073
          %2075 = vrot.lane.b32.xlu0 %v2050, 125
          %v2076 = vpop.permute.xlu0 %2075
          %2077 = vrot.lane.b32.xlu0 %v2053, 125
          %v2078 = vpop.permute.xlu0 %2077
          %2079 = vrot.lane.b32.xlu0 %v2056, 125
          %v2080 = vpop.permute.xlu0 %2079
          %2081 = vrot.lane.b32.xlu0 %v2058, 125
          %v2082 = vpop.permute.xlu0 %2081
          %2083 = vrot.lane.b32.xlu0 %v2060, 125
          %v2084 = vpop.permute.xlu0 %2083
          %2085 = vrot.lane.b32.xlu0 %v2062, 125
          %v2086 = vpop.permute.xlu0 %2085
          %2087 = vrot.lane.b32.xlu0 %v2064, 125
          %v2088 = vpop.permute.xlu0 %2087
          %2089 = vrot.lane.b32.xlu0 %v2066, 125
          %v2090 = vpop.permute.xlu0 %2089
          %2091 = vrot.lane.b32.xlu0 %v2068, 125
          %v2092 = vpop.permute.xlu0 %2091
          %2093 = vrot.lane.b32.xlu0 %v2070, 125
          %v2094 = vpop.permute.xlu0 %2093
          %2095 = vrot.lane.b32.xlu0 %v2072, 125
          %v2096 = vpop.permute.xlu0 %2095
          %2097 = vrot.lane.b32.xlu0 %v2074, 125
          %v2098 = vpop.permute.xlu0 %2097
          %v2099 = vsel %vm1032, %v2076, %v2078
          %v2100 = vsel %vm1032, %v2078, %v2080
          %v2101 = vsel %vm1032, %v2082, %v2084
          %v2102 = vsel %vm1032, %v2084, %v2086
          %v2103 = vsel %vm1032, %v2088, %v2090
          %v2104 = vsel %vm1032, %v2090, %v2092
          %v2105 = vsel %vm1032, %v2094, %v2096
          %v2106 = vsel %vm1032, %v2096, %v2098
          %v2119 = vadd.f32 %v2003, %v2099
          %v2120 = vadd.f32 %v2004, %v2100
          %v2121 = vadd.f32 %v2005, %v2080
          %v2122 = vadd.f32 %v2006, %v2101
          %v2123 = vadd.f32 %v2007, %v2102
          %v2124 = vadd.f32 %v2008, %v2086
          %v2125 = vadd.f32 %v2009, %v2103
          %v2126 = vadd.f32 %v2010, %v2104
          %v2127 = vadd.f32 %v2011, %v2092
          %v2128 = vadd.f32 %v2012, %v2105
          %v2129 = vadd.f32 %v2013, %v2106
          %v2130 = vadd.f32 %v2014, %v2098
          %s2131 = sadd.s32 %s798, 14
          %s2132 = sld [smem:[#allocation4 + %s2131]]
          %v2133 = vstv %s2132
          %v2134 = vmul.f32 %v680, %v2133
          %v2135 = vmul.f32 %v682, %v2133
          %v2136 = vmul.f32 %v775, %v2133
          %v2137 = vmul.f32 %v686, %v2133
          %v2138 = vmul.f32 %v688, %v2133
          %v2139 = vmul.f32 %v780, %v2133
          %v2140 = vmul.f32 %v692, %v2133
          %v2141 = vmul.f32 %v694, %v2133
          %v2142 = vmul.f32 %v785, %v2133
          %v2143 = vmul.f32 %v698, %v2133
          %v2144 = vmul.f32 %v700, %v2133
          %v2145 = vmul.f32 %v790, %v2133
          %v2146 = vmul.f32 %v704, %v2133
          %v2147 = vmul.f32 %v706, %v2133
          %v2148 = vmul.f32 %v795, %v2133
          %v2164 = vrot.slane %v2134, 2
          %v2165 = vrot.slane %v2137, 2
          %v2166 = vsel %vm1731, %v2164, %v2165
          %v2167 = vrot.slane %v2135, 2
          %v2168 = vrot.slane %v2138, 2
          %v2169 = vsel %vm1731, %v2167, %v2168
          %v2170 = vrot.slane %v2136, 2
          %v2171 = vrot.slane %v2139, 2
          %v2172 = vsel %vm1731, %v2170, %v2171
          %v2173 = vrot.slane %v2140, 2
          %v2174 = vsel %vm1731, %v2165, %v2173
          %v2175 = vrot.slane %v2141, 2
          %v2176 = vsel %vm1731, %v2168, %v2175
          %v2177 = vrot.slane %v2142, 2
          %v2178 = vsel %vm1731, %v2171, %v2177
          %v2179 = vrot.slane %v2143, 2
          %v2180 = vsel %vm1731, %v2173, %v2179
          %v2181 = vrot.slane %v2144, 2
          %v2182 = vsel %vm1731, %v2175, %v2181
          %v2183 = vrot.slane %v2145, 2
          %v2184 = vsel %vm1731, %v2177, %v2183
          %v2185 = vrot.slane %v2146, 2
          %v2186 = vsel %vm1731, %v2179, %v2185
          %v2187 = vrot.slane %v2147, 2
          %v2188 = vsel %vm1731, %v2181, %v2187
          %v2189 = vrot.slane %v2148, 2
          %v2190 = vsel %vm1731, %v2183, %v2189
          %2191 = vrot.lane.b32.xlu0 %v2166, 124
          %v2192 = vpop.permute.xlu0 %2191
          %2193 = vrot.lane.b32.xlu0 %v2169, 124
          %v2194 = vpop.permute.xlu0 %2193
          %2195 = vrot.lane.b32.xlu0 %v2172, 124
          %v2196 = vpop.permute.xlu0 %2195
          %2197 = vrot.lane.b32.xlu0 %v2174, 124
          %v2198 = vpop.permute.xlu0 %2197
          %2199 = vrot.lane.b32.xlu0 %v2176, 124
          %v2200 = vpop.permute.xlu0 %2199
          %2201 = vrot.lane.b32.xlu0 %v2178, 124
          %v2202 = vpop.permute.xlu0 %2201
          %2203 = vrot.lane.b32.xlu0 %v2180, 124
          %v2204 = vpop.permute.xlu0 %2203
          %2205 = vrot.lane.b32.xlu0 %v2182, 124
          %v2206 = vpop.permute.xlu0 %2205
          %2207 = vrot.lane.b32.xlu0 %v2184, 124
          %v2208 = vpop.permute.xlu0 %2207
          %2209 = vrot.lane.b32.xlu0 %v2186, 124
          %v2210 = vpop.permute.xlu0 %2209
          %2211 = vrot.lane.b32.xlu0 %v2188, 124
          %v2212 = vpop.permute.xlu0 %2211
          %2213 = vrot.lane.b32.xlu0 %v2190, 124
          %v2214 = vpop.permute.xlu0 %2213
          %v2215 = vsel %vm1116, %v2192, %v2194
          %v2216 = vsel %vm1116, %v2194, %v2196
          %v2217 = vsel %vm1116, %v2198, %v2200
          %v2218 = vsel %vm1116, %v2200, %v2202
          %v2219 = vsel %vm1116, %v2204, %v2206
          %v2220 = vsel %vm1116, %v2206, %v2208
          %v2221 = vsel %vm1116, %v2210, %v2212
          %v2222 = vsel %vm1116, %v2212, %v2214
          %v2235 = vadd.f32 %v2119, %v2215
          %v2236 = vadd.f32 %v2120, %v2216
          %v2237 = vadd.f32 %v2121, %v2196
          %v2238 = vadd.f32 %v2122, %v2217
          %v2239 = vadd.f32 %v2123, %v2218
          %v2240 = vadd.f32 %v2124, %v2202
          %v2241 = vadd.f32 %v2125, %v2219
          %v2242 = vadd.f32 %v2126, %v2220
          %v2243 = vadd.f32 %v2127, %v2208
          %v2244 = vadd.f32 %v2128, %v2221
          %v2245 = vadd.f32 %v2129, %v2222
          %v2246 = vadd.f32 %v2130, %v2214
          %s2247 = sadd.s32 %s798, 15
          %s2248 = sld [smem:[#allocation4 + %s2247]]
          %v2249 = vstv %s2248
          %v2250 = vmul.f32 %v680, %v2249
          %v2251 = vmul.f32 %v682, %v2249
          %v2252 = vmul.f32 %v775, %v2249
          %v2253 = vmul.f32 %v686, %v2249
          %v2254 = vmul.f32 %v688, %v2249
          %v2255 = vmul.f32 %v780, %v2249
          %v2256 = vmul.f32 %v692, %v2249
          %v2257 = vmul.f32 %v694, %v2249
          %v2258 = vmul.f32 %v785, %v2249
          %v2259 = vmul.f32 %v698, %v2249
          %v2260 = vmul.f32 %v700, %v2249
          %v2261 = vmul.f32 %v790, %v2249
          %v2262 = vmul.f32 %v704, %v2249
          %v2263 = vmul.f32 %v706, %v2249
          %v2264 = vmul.f32 %v795, %v2249
          %vm2280 = vcmask 1044480
          %v2281 = vrot.slane %v2250, 3
          %v2282 = vrot.slane %v2253, 3
          %v2283 = vsel %vm2280, %v2281, %v2282
          %v2284 = vrot.slane %v2251, 3
          %v2285 = vrot.slane %v2254, 3
          %v2286 = vsel %vm2280, %v2284, %v2285
          %v2287 = vrot.slane %v2252, 3
          %v2288 = vrot.slane %v2255, 3
          %v2289 = vsel %vm2280, %v2287, %v2288
          %v2290 = vrot.slane %v2256, 3
          %v2291 = vsel %vm2280, %v2282, %v2290
          %v2292 = vrot.slane %v2257, 3
          %v2293 = vsel %vm2280, %v2285, %v2292
          %v2294 = vrot.slane %v2258, 3
          %v2295 = vsel %vm2280, %v2288, %v2294
          %v2296 = vrot.slane %v2259, 3
          %v2297 = vsel %vm2280, %v2290, %v2296
          %v2298 = vrot.slane %v2260, 3
          %v2299 = vsel %vm2280, %v2292, %v2298
          %v2300 = vrot.slane %v2261, 3
          %v2301 = vsel %vm2280, %v2294, %v2300
          %v2302 = vrot.slane %v2262, 3
          %v2303 = vsel %vm2280, %v2296, %v2302
          %v2304 = vrot.slane %v2263, 3
          %v2305 = vsel %vm2280, %v2298, %v2304
          %v2306 = vrot.slane %v2264, 3
          %v2307 = vsel %vm2280, %v2300, %v2306
          %v2320 = vadd.f32 %v2235, %v2283
          %v2321 = vadd.f32 %v2236, %v2286
          %v2322 = vadd.f32 %v2237, %v2289
          %v2323 = vadd.f32 %v2238, %v2291
          %v2324 = vadd.f32 %v2239, %v2293
          %v2325 = vadd.f32 %v2240, %v2295
          %v2326 = vadd.f32 %v2241, %v2297
          %v2327 = vadd.f32 %v2242, %v2299
          %v2328 = vadd.f32 %v2243, %v2301
          %v2329 = vadd.f32 %v2244, %v2303
          %v2330 = vadd.f32 %v2245, %v2305
          %v2331 = vadd.f32 %v2246, %v2307
          %s2332 = sadd.s32 %s798, 16
          %s2333 = sld [smem:[#allocation4 + %s2332]]
          %v2334 = vstv %s2333
          %v2335 = vmul.f32 %v680, %v2334
          %v2336 = vmul.f32 %v682, %v2334
          %v2337 = vmul.f32 %v775, %v2334
          %v2338 = vmul.f32 %v686, %v2334
          %v2339 = vmul.f32 %v688, %v2334
          %v2340 = vmul.f32 %v780, %v2334
          %v2341 = vmul.f32 %v692, %v2334
          %v2342 = vmul.f32 %v694, %v2334
          %v2343 = vmul.f32 %v785, %v2334
          %v2344 = vmul.f32 %v698, %v2334
          %v2345 = vmul.f32 %v700, %v2334
          %v2346 = vmul.f32 %v790, %v2334
          %v2347 = vmul.f32 %v704, %v2334
          %v2348 = vmul.f32 %v706, %v2334
          %v2349 = vmul.f32 %v795, %v2334
          %v2365 = vrot.slane %v2335, 3
          %v2366 = vrot.slane %v2338, 3
          %v2367 = vsel %vm2280, %v2365, %v2366
          %v2368 = vrot.slane %v2336, 3
          %v2369 = vrot.slane %v2339, 3
          %v2370 = vsel %vm2280, %v2368, %v2369
          %v2371 = vrot.slane %v2337, 3
          %v2372 = vrot.slane %v2340, 3
          %v2373 = vsel %vm2280, %v2371, %v2372
          %v2374 = vrot.slane %v2341, 3
          %v2375 = vsel %vm2280, %v2366, %v2374
          %v2376 = vrot.slane %v2342, 3
          %v2377 = vsel %vm2280, %v2369, %v2376
          %v2378 = vrot.slane %v2343, 3
          %v2379 = vsel %vm2280, %v2372, %v2378
          %v2380 = vrot.slane %v2344, 3
          %v2381 = vsel %vm2280, %v2374, %v2380
          %v2382 = vrot.slane %v2345, 3
          %v2383 = vsel %vm2280, %v2376, %v2382
          %v2384 = vrot.slane %v2346, 3
          %v2385 = vsel %vm2280, %v2378, %v2384
          %v2386 = vrot.slane %v2347, 3
          %v2387 = vsel %vm2280, %v2380, %v2386
          %v2388 = vrot.slane %v2348, 3
          %v2389 = vsel %vm2280, %v2382, %v2388
          %v2390 = vrot.slane %v2349, 3
          %v2391 = vsel %vm2280, %v2384, %v2390
          %2392 = vrot.lane.b32.xlu0 %v2367, 127
          %v2393 = vpop.permute.xlu0 %2392
          %2394 = vrot.lane.b32.xlu0 %v2370, 127
          %v2395 = vpop.permute.xlu0 %2394
          %2396 = vrot.lane.b32.xlu0 %v2373, 127
          %v2397 = vpop.permute.xlu0 %2396
          %2398 = vrot.lane.b32.xlu0 %v2375, 127
          %v2399 = vpop.permute.xlu0 %2398
          %2400 = vrot.lane.b32.xlu0 %v2377, 127
          %v2401 = vpop.permute.xlu0 %2400
          %2402 = vrot.lane.b32.xlu0 %v2379, 127
          %v2403 = vpop.permute.xlu0 %2402
          %2404 = vrot.lane.b32.xlu0 %v2381, 127
          %v2405 = vpop.permute.xlu0 %2404
          %2406 = vrot.lane.b32.xlu0 %v2383, 127
          %v2407 = vpop.permute.xlu0 %2406
          %2408 = vrot.lane.b32.xlu0 %v2385, 127
          %v2409 = vpop.permute.xlu0 %2408
          %2410 = vrot.lane.b32.xlu0 %v2387, 127
          %v2411 = vpop.permute.xlu0 %2410
          %2412 = vrot.lane.b32.xlu0 %v2389, 127
          %v2413 = vpop.permute.xlu0 %2412
          %2414 = vrot.lane.b32.xlu0 %v2391, 127
          %v2415 = vpop.permute.xlu0 %2414
          %v2416 = vsel %vm864, %v2393, %v2395
          %v2417 = vsel %vm864, %v2395, %v2397
          %v2418 = vsel %vm864, %v2399, %v2401
          %v2419 = vsel %vm864, %v2401, %v2403
          %v2420 = vsel %vm864, %v2405, %v2407
          %v2421 = vsel %vm864, %v2407, %v2409
          %v2422 = vsel %vm864, %v2411, %v2413
          %v2423 = vsel %vm864, %v2413, %v2415
          %v2436 = vadd.f32 %v2320, %v2416
          %v2437 = vadd.f32 %v2321, %v2417
          %v2438 = vadd.f32 %v2322, %v2397
          %v2439 = vadd.f32 %v2323, %v2418
          %v2440 = vadd.f32 %v2324, %v2419
          %v2441 = vadd.f32 %v2325, %v2403
          %v2442 = vadd.f32 %v2326, %v2420
          %v2443 = vadd.f32 %v2327, %v2421
          %v2444 = vadd.f32 %v2328, %v2409
          %v2445 = vadd.f32 %v2329, %v2422
          %v2446 = vadd.f32 %v2330, %v2423
          %v2447 = vadd.f32 %v2331, %v2415
          %s2448 = sadd.s32 %s798, 17
          %s2449 = sld [smem:[#allocation4 + %s2448]]
          %v2450 = vstv %s2449
          %v2451 = vmul.f32 %v680, %v2450
          %v2452 = vmul.f32 %v682, %v2450
          %v2453 = vmul.f32 %v775, %v2450
          %v2454 = vmul.f32 %v686, %v2450
          %v2455 = vmul.f32 %v688, %v2450
          %v2456 = vmul.f32 %v780, %v2450
          %v2457 = vmul.f32 %v692, %v2450
          %v2458 = vmul.f32 %v694, %v2450
          %v2459 = vmul.f32 %v785, %v2450
          %v2460 = vmul.f32 %v698, %v2450
          %v2461 = vmul.f32 %v700, %v2450
          %v2462 = vmul.f32 %v790, %v2450
          %v2463 = vmul.f32 %v704, %v2450
          %v2464 = vmul.f32 %v706, %v2450
          %v2465 = vmul.f32 %v795, %v2450
          %v2481 = vrot.slane %v2451, 3
          %v2482 = vrot.slane %v2454, 3
          %v2483 = vsel %vm2280, %v2481, %v2482
          %v2484 = vrot.slane %v2452, 3
          %v2485 = vrot.slane %v2455, 3
          %v2486 = vsel %vm2280, %v2484, %v2485
          %v2487 = vrot.slane %v2453, 3
          %v2488 = vrot.slane %v2456, 3
          %v2489 = vsel %vm2280, %v2487, %v2488
          %v2490 = vrot.slane %v2457, 3
          %v2491 = vsel %vm2280, %v2482, %v2490
          %v2492 = vrot.slane %v2458, 3
          %v2493 = vsel %vm2280, %v2485, %v2492
          %v2494 = vrot.slane %v2459, 3
          %v2495 = vsel %vm2280, %v2488, %v2494
          %v2496 = vrot.slane %v2460, 3
          %v2497 = vsel %vm2280, %v2490, %v2496
          %v2498 = vrot.slane %v2461, 3
          %v2499 = vsel %vm2280, %v2492, %v2498
          %v2500 = vrot.slane %v2462, 3
          %v2501 = vsel %vm2280, %v2494, %v2500
          %v2502 = vrot.slane %v2463, 3
          %v2503 = vsel %vm2280, %v2496, %v2502
          %v2504 = vrot.slane %v2464, 3
          %v2505 = vsel %vm2280, %v2498, %v2504
          %v2506 = vrot.slane %v2465, 3
          %v2507 = vsel %vm2280, %v2500, %v2506
          %2508 = vrot.lane.b32.xlu0 %v2483, 126
          %v2509 = vpop.permute.xlu0 %2508
          %2510 = vrot.lane.b32.xlu0 %v2486, 126
          %v2511 = vpop.permute.xlu0 %2510
          %2512 = vrot.lane.b32.xlu0 %v2489, 126
          %v2513 = vpop.permute.xlu0 %2512
          %2514 = vrot.lane.b32.xlu0 %v2491, 126
          %v2515 = vpop.permute.xlu0 %2514
          %2516 = vrot.lane.b32.xlu0 %v2493, 126
          %v2517 = vpop.permute.xlu0 %2516
          %2518 = vrot.lane.b32.xlu0 %v2495, 126
          %v2519 = vpop.permute.xlu0 %2518
          %2520 = vrot.lane.b32.xlu0 %v2497, 126
          %v2521 = vpop.permute.xlu0 %2520
          %2522 = vrot.lane.b32.xlu0 %v2499, 126
          %v2523 = vpop.permute.xlu0 %2522
          %2524 = vrot.lane.b32.xlu0 %v2501, 126
          %v2525 = vpop.permute.xlu0 %2524
          %2526 = vrot.lane.b32.xlu0 %v2503, 126
          %v2527 = vpop.permute.xlu0 %2526
          %2528 = vrot.lane.b32.xlu0 %v2505, 126
          %v2529 = vpop.permute.xlu0 %2528
          %2530 = vrot.lane.b32.xlu0 %v2507, 126
          %v2531 = vpop.permute.xlu0 %2530
          %v2532 = vsel %vm948, %v2509, %v2511
          %v2533 = vsel %vm948, %v2511, %v2513
          %v2534 = vsel %vm948, %v2515, %v2517
          %v2535 = vsel %vm948, %v2517, %v2519
          %v2536 = vsel %vm948, %v2521, %v2523
          %v2537 = vsel %vm948, %v2523, %v2525
          %v2538 = vsel %vm948, %v2527, %v2529
          %v2539 = vsel %vm948, %v2529, %v2531
          %v2552 = vadd.f32 %v2436, %v2532
          %v2553 = vadd.f32 %v2437, %v2533
          %v2554 = vadd.f32 %v2438, %v2513
          %v2555 = vadd.f32 %v2439, %v2534
          %v2556 = vadd.f32 %v2440, %v2535
          %v2557 = vadd.f32 %v2441, %v2519
          %v2558 = vadd.f32 %v2442, %v2536
          %v2559 = vadd.f32 %v2443, %v2537
          %v2560 = vadd.f32 %v2444, %v2525
          %v2561 = vadd.f32 %v2445, %v2538
          %v2562 = vadd.f32 %v2446, %v2539
          %v2563 = vadd.f32 %v2447, %v2531
          %s2564 = sadd.s32 %s798, 18
          %s2565 = sld [smem:[#allocation4 + %s2564]]
          %v2566 = vstv %s2565
          %v2567 = vmul.f32 %v680, %v2566
          %v2568 = vmul.f32 %v682, %v2566
          %v2569 = vmul.f32 %v775, %v2566
          %v2570 = vmul.f32 %v686, %v2566
          %v2571 = vmul.f32 %v688, %v2566
          %v2572 = vmul.f32 %v780, %v2566
          %v2573 = vmul.f32 %v692, %v2566
          %v2574 = vmul.f32 %v694, %v2566
          %v2575 = vmul.f32 %v785, %v2566
          %v2576 = vmul.f32 %v698, %v2566
          %v2577 = vmul.f32 %v700, %v2566
          %v2578 = vmul.f32 %v790, %v2566
          %v2579 = vmul.f32 %v704, %v2566
          %v2580 = vmul.f32 %v706, %v2566
          %v2581 = vmul.f32 %v795, %v2566
          %v2597 = vrot.slane %v2567, 3
          %v2598 = vrot.slane %v2570, 3
          %v2599 = vsel %vm2280, %v2597, %v2598
          %v2600 = vrot.slane %v2568, 3
          %v2601 = vrot.slane %v2571, 3
          %v2602 = vsel %vm2280, %v2600, %v2601
          %v2603 = vrot.slane %v2569, 3
          %v2604 = vrot.slane %v2572, 3
          %v2605 = vsel %vm2280, %v2603, %v2604
          %v2606 = vrot.slane %v2573, 3
          %v2607 = vsel %vm2280, %v2598, %v2606
          %v2608 = vrot.slane %v2574, 3
          %v2609 = vsel %vm2280, %v2601, %v2608
          %v2610 = vrot.slane %v2575, 3
          %v2611 = vsel %vm2280, %v2604, %v2610
          %v2612 = vrot.slane %v2576, 3
          %v2613 = vsel %vm2280, %v2606, %v2612
          %v2614 = vrot.slane %v2577, 3
          %v2615 = vsel %vm2280, %v2608, %v2614
          %v2616 = vrot.slane %v2578, 3
          %v2617 = vsel %vm2280, %v2610, %v2616
          %v2618 = vrot.slane %v2579, 3
          %v2619 = vsel %vm2280, %v2612, %v2618
          %v2620 = vrot.slane %v2580, 3
          %v2621 = vsel %vm2280, %v2614, %v2620
          %v2622 = vrot.slane %v2581, 3
          %v2623 = vsel %vm2280, %v2616, %v2622
          %2624 = vrot.lane.b32.xlu0 %v2599, 125
          %v2625 = vpop.permute.xlu0 %2624
          %2626 = vrot.lane.b32.xlu0 %v2602, 125
          %v2627 = vpop.permute.xlu0 %2626
          %2628 = vrot.lane.b32.xlu0 %v2605, 125
          %v2629 = vpop.permute.xlu0 %2628
          %2630 = vrot.lane.b32.xlu0 %v2607, 125
          %v2631 = vpop.permute.xlu0 %2630
          %2632 = vrot.lane.b32.xlu0 %v2609, 125
          %v2633 = vpop.permute.xlu0 %2632
          %2634 = vrot.lane.b32.xlu0 %v2611, 125
          %v2635 = vpop.permute.xlu0 %2634
          %2636 = vrot.lane.b32.xlu0 %v2613, 125
          %v2637 = vpop.permute.xlu0 %2636
          %2638 = vrot.lane.b32.xlu0 %v2615, 125
          %v2639 = vpop.permute.xlu0 %2638
          %2640 = vrot.lane.b32.xlu0 %v2617, 125
          %v2641 = vpop.permute.xlu0 %2640
          %2642 = vrot.lane.b32.xlu0 %v2619, 125
          %v2643 = vpop.permute.xlu0 %2642
          %2644 = vrot.lane.b32.xlu0 %v2621, 125
          %v2645 = vpop.permute.xlu0 %2644
          %2646 = vrot.lane.b32.xlu0 %v2623, 125
          %v2647 = vpop.permute.xlu0 %2646
          %v2648 = vsel %vm1032, %v2625, %v2627
          %v2649 = vsel %vm1032, %v2627, %v2629
          %v2650 = vsel %vm1032, %v2631, %v2633
          %v2651 = vsel %vm1032, %v2633, %v2635
          %v2652 = vsel %vm1032, %v2637, %v2639
          %v2653 = vsel %vm1032, %v2639, %v2641
          %v2654 = vsel %vm1032, %v2643, %v2645
          %v2655 = vsel %vm1032, %v2645, %v2647
          %v2668 = vadd.f32 %v2552, %v2648
          %v2669 = vadd.f32 %v2553, %v2649
          %v2670 = vadd.f32 %v2554, %v2629
          %v2671 = vadd.f32 %v2555, %v2650
          %v2672 = vadd.f32 %v2556, %v2651
          %v2673 = vadd.f32 %v2557, %v2635
          %v2674 = vadd.f32 %v2558, %v2652
          %v2675 = vadd.f32 %v2559, %v2653
          %v2676 = vadd.f32 %v2560, %v2641
          %v2677 = vadd.f32 %v2561, %v2654
          %v2678 = vadd.f32 %v2562, %v2655
          %v2679 = vadd.f32 %v2563, %v2647
          %s2680 = sadd.s32 %s798, 19
          %s2681 = sld [smem:[#allocation4 + %s2680]]
          %v2682 = vstv %s2681
          %v2683 = vmul.f32 %v680, %v2682
          %v2684 = vmul.f32 %v682, %v2682
          %v2685 = vmul.f32 %v775, %v2682
          %v2686 = vmul.f32 %v686, %v2682
          %v2687 = vmul.f32 %v688, %v2682
          %v2688 = vmul.f32 %v780, %v2682
          %v2689 = vmul.f32 %v692, %v2682
          %v2690 = vmul.f32 %v694, %v2682
          %v2691 = vmul.f32 %v785, %v2682
          %v2692 = vmul.f32 %v698, %v2682
          %v2693 = vmul.f32 %v700, %v2682
          %v2694 = vmul.f32 %v790, %v2682
          %v2695 = vmul.f32 %v704, %v2682
          %v2696 = vmul.f32 %v706, %v2682
          %v2697 = vmul.f32 %v795, %v2682
          %v2713 = vrot.slane %v2683, 3
          %v2714 = vrot.slane %v2686, 3
          %v2715 = vsel %vm2280, %v2713, %v2714
          %v2716 = vrot.slane %v2684, 3
          %v2717 = vrot.slane %v2687, 3
          %v2718 = vsel %vm2280, %v2716, %v2717
          %v2719 = vrot.slane %v2685, 3
          %v2720 = vrot.slane %v2688, 3
          %v2721 = vsel %vm2280, %v2719, %v2720
          %v2722 = vrot.slane %v2689, 3
          %v2723 = vsel %vm2280, %v2714, %v2722
          %v2724 = vrot.slane %v2690, 3
          %v2725 = vsel %vm2280, %v2717, %v2724
          %v2726 = vrot.slane %v2691, 3
          %v2727 = vsel %vm2280, %v2720, %v2726
          %v2728 = vrot.slane %v2692, 3
          %v2729 = vsel %vm2280, %v2722, %v2728
          %v2730 = vrot.slane %v2693, 3
          %v2731 = vsel %vm2280, %v2724, %v2730
          %v2732 = vrot.slane %v2694, 3
          %v2733 = vsel %vm2280, %v2726, %v2732
          %v2734 = vrot.slane %v2695, 3
          %v2735 = vsel %vm2280, %v2728, %v2734
          %v2736 = vrot.slane %v2696, 3
          %v2737 = vsel %vm2280, %v2730, %v2736
          %v2738 = vrot.slane %v2697, 3
          %v2739 = vsel %vm2280, %v2732, %v2738
          %2740 = vrot.lane.b32.xlu0 %v2715, 124
          %v2741 = vpop.permute.xlu0 %2740
          %2742 = vrot.lane.b32.xlu0 %v2718, 124
          %v2743 = vpop.permute.xlu0 %2742
          %2744 = vrot.lane.b32.xlu0 %v2721, 124
          %v2745 = vpop.permute.xlu0 %2744
          %2746 = vrot.lane.b32.xlu0 %v2723, 124
          %v2747 = vpop.permute.xlu0 %2746
          %2748 = vrot.lane.b32.xlu0 %v2725, 124
          %v2749 = vpop.permute.xlu0 %2748
          %2750 = vrot.lane.b32.xlu0 %v2727, 124
          %v2751 = vpop.permute.xlu0 %2750
          %2752 = vrot.lane.b32.xlu0 %v2729, 124
          %v2753 = vpop.permute.xlu0 %2752
          %2754 = vrot.lane.b32.xlu0 %v2731, 124
          %v2755 = vpop.permute.xlu0 %2754
          %2756 = vrot.lane.b32.xlu0 %v2733, 124
          %v2757 = vpop.permute.xlu0 %2756
          %2758 = vrot.lane.b32.xlu0 %v2735, 124
          %v2759 = vpop.permute.xlu0 %2758
          %2760 = vrot.lane.b32.xlu0 %v2737, 124
          %v2761 = vpop.permute.xlu0 %2760
          %2762 = vrot.lane.b32.xlu0 %v2739, 124
          %v2763 = vpop.permute.xlu0 %2762
          %v2764 = vsel %vm1116, %v2741, %v2743
          %v2765 = vsel %vm1116, %v2743, %v2745
          %v2766 = vsel %vm1116, %v2747, %v2749
          %v2767 = vsel %vm1116, %v2749, %v2751
          %v2768 = vsel %vm1116, %v2753, %v2755
          %v2769 = vsel %vm1116, %v2755, %v2757
          %v2770 = vsel %vm1116, %v2759, %v2761
          %v2771 = vsel %vm1116, %v2761, %v2763
          %v2784 = vadd.f32 %v2668, %v2764
          %v2785 = vadd.f32 %v2669, %v2765
          %v2786 = vadd.f32 %v2670, %v2745
          %v2787 = vadd.f32 %v2671, %v2766
          %v2788 = vadd.f32 %v2672, %v2767
          %v2789 = vadd.f32 %v2673, %v2751
          %v2790 = vadd.f32 %v2674, %v2768
          %v2791 = vadd.f32 %v2675, %v2769
          %v2792 = vadd.f32 %v2676, %v2757
          %v2793 = vadd.f32 %v2677, %v2770
          %v2794 = vadd.f32 %v2678, %v2771
          %v2795 = vadd.f32 %v2679, %v2763
          %s2796 = sadd.s32 %s798, 20
          %s2797 = sld [smem:[#allocation4 + %s2796]]
          %v2798 = vstv %s2797
          %v2799 = vmul.f32 %v680, %v2798
          %v2800 = vmul.f32 %v682, %v2798
          %v2801 = vmul.f32 %v775, %v2798
          %v2802 = vmul.f32 %v686, %v2798
          %v2803 = vmul.f32 %v688, %v2798
          %v2804 = vmul.f32 %v780, %v2798
          %v2805 = vmul.f32 %v692, %v2798
          %v2806 = vmul.f32 %v694, %v2798
          %v2807 = vmul.f32 %v785, %v2798
          %v2808 = vmul.f32 %v698, %v2798
          %v2809 = vmul.f32 %v700, %v2798
          %v2810 = vmul.f32 %v790, %v2798
          %v2811 = vmul.f32 %v704, %v2798
          %v2812 = vmul.f32 %v706, %v2798
          %v2813 = vmul.f32 %v795, %v2798
          %vm2829 = vcmask 1043456
          %v2830 = vrot.slane %v2799, 4
          %v2831 = vrot.slane %v2802, 4
          %v2832 = vsel %vm2829, %v2830, %v2831
          %v2833 = vrot.slane %v2800, 4
          %v2834 = vrot.slane %v2803, 4
          %v2835 = vsel %vm2829, %v2833, %v2834
          %v2836 = vrot.slane %v2801, 4
          %v2837 = vrot.slane %v2804, 4
          %v2838 = vsel %vm2829, %v2836, %v2837
          %v2839 = vrot.slane %v2805, 4
          %v2840 = vsel %vm2829, %v2831, %v2839
          %v2841 = vrot.slane %v2806, 4
          %v2842 = vsel %vm2829, %v2834, %v2841
          %v2843 = vrot.slane %v2807, 4
          %v2844 = vsel %vm2829, %v2837, %v2843
          %v2845 = vrot.slane %v2808, 4
          %v2846 = vsel %vm2829, %v2839, %v2845
          %v2847 = vrot.slane %v2809, 4
          %v2848 = vsel %vm2829, %v2841, %v2847
          %v2849 = vrot.slane %v2810, 4
          %v2850 = vsel %vm2829, %v2843, %v2849
          %v2851 = vrot.slane %v2811, 4
          %v2852 = vsel %vm2829, %v2845, %v2851
          %v2853 = vrot.slane %v2812, 4
          %v2854 = vsel %vm2829, %v2847, %v2853
          %v2855 = vrot.slane %v2813, 4
          %v2856 = vsel %vm2829, %v2849, %v2855
          %v2869 = vadd.f32 %v2784, %v2832
          %v2870 = vadd.f32 %v2785, %v2835
          %v2871 = vadd.f32 %v2786, %v2838
          %v2872 = vadd.f32 %v2787, %v2840
          %v2873 = vadd.f32 %v2788, %v2842
          %v2874 = vadd.f32 %v2789, %v2844
          %v2875 = vadd.f32 %v2790, %v2846
          %v2876 = vadd.f32 %v2791, %v2848
          %v2877 = vadd.f32 %v2792, %v2850
          %v2878 = vadd.f32 %v2793, %v2852
          %v2879 = vadd.f32 %v2794, %v2854
          %v2880 = vadd.f32 %v2795, %v2856
          %s2881 = sadd.s32 %s798, 21
          %s2882 = sld [smem:[#allocation4 + %s2881]]
          %v2883 = vstv %s2882
          %v2884 = vmul.f32 %v680, %v2883
          %v2885 = vmul.f32 %v682, %v2883
          %v2886 = vmul.f32 %v775, %v2883
          %v2887 = vmul.f32 %v686, %v2883
          %v2888 = vmul.f32 %v688, %v2883
          %v2889 = vmul.f32 %v780, %v2883
          %v2890 = vmul.f32 %v692, %v2883
          %v2891 = vmul.f32 %v694, %v2883
          %v2892 = vmul.f32 %v785, %v2883
          %v2893 = vmul.f32 %v698, %v2883
          %v2894 = vmul.f32 %v700, %v2883
          %v2895 = vmul.f32 %v790, %v2883
          %v2896 = vmul.f32 %v704, %v2883
          %v2897 = vmul.f32 %v706, %v2883
          %v2898 = vmul.f32 %v795, %v2883
          %v2914 = vrot.slane %v2884, 4
          %v2915 = vrot.slane %v2887, 4
          %v2916 = vsel %vm2829, %v2914, %v2915
          %v2917 = vrot.slane %v2885, 4
          %v2918 = vrot.slane %v2888, 4
          %v2919 = vsel %vm2829, %v2917, %v2918
          %v2920 = vrot.slane %v2886, 4
          %v2921 = vrot.slane %v2889, 4
          %v2922 = vsel %vm2829, %v2920, %v2921
          %v2923 = vrot.slane %v2890, 4
          %v2924 = vsel %vm2829, %v2915, %v2923
          %v2925 = vrot.slane %v2891, 4
          %v2926 = vsel %vm2829, %v2918, %v2925
          %v2927 = vrot.slane %v2892, 4
          %v2928 = vsel %vm2829, %v2921, %v2927
          %v2929 = vrot.slane %v2893, 4
          %v2930 = vsel %vm2829, %v2923, %v2929
          %v2931 = vrot.slane %v2894, 4
          %v2932 = vsel %vm2829, %v2925, %v2931
          %v2933 = vrot.slane %v2895, 4
          %v2934 = vsel %vm2829, %v2927, %v2933
          %v2935 = vrot.slane %v2896, 4
          %v2936 = vsel %vm2829, %v2929, %v2935
          %v2937 = vrot.slane %v2897, 4
          %v2938 = vsel %vm2829, %v2931, %v2937
          %v2939 = vrot.slane %v2898, 4
          %v2940 = vsel %vm2829, %v2933, %v2939
          %2941 = vrot.lane.b32.xlu0 %v2916, 127
          %v2942 = vpop.permute.xlu0 %2941
          %2943 = vrot.lane.b32.xlu0 %v2919, 127
          %v2944 = vpop.permute.xlu0 %2943
          %2945 = vrot.lane.b32.xlu0 %v2922, 127
          %v2946 = vpop.permute.xlu0 %2945
          %2947 = vrot.lane.b32.xlu0 %v2924, 127
          %v2948 = vpop.permute.xlu0 %2947
          %2949 = vrot.lane.b32.xlu0 %v2926, 127
          %v2950 = vpop.permute.xlu0 %2949
          %2951 = vrot.lane.b32.xlu0 %v2928, 127
          %v2952 = vpop.permute.xlu0 %2951
          %2953 = vrot.lane.b32.xlu0 %v2930, 127
          %v2954 = vpop.permute.xlu0 %2953
          %2955 = vrot.lane.b32.xlu0 %v2932, 127
          %v2956 = vpop.permute.xlu0 %2955
          %2957 = vrot.lane.b32.xlu0 %v2934, 127
          %v2958 = vpop.permute.xlu0 %2957
          %2959 = vrot.lane.b32.xlu0 %v2936, 127
          %v2960 = vpop.permute.xlu0 %2959
          %2961 = vrot.lane.b32.xlu0 %v2938, 127
          %v2962 = vpop.permute.xlu0 %2961
          %2963 = vrot.lane.b32.xlu0 %v2940, 127
          %v2964 = vpop.permute.xlu0 %2963
          %v2965 = vsel %vm864, %v2942, %v2944
          %v2966 = vsel %vm864, %v2944, %v2946
          %v2967 = vsel %vm864, %v2948, %v2950
          %v2968 = vsel %vm864, %v2950, %v2952
          %v2969 = vsel %vm864, %v2954, %v2956
          %v2970 = vsel %vm864, %v2956, %v2958
          %v2971 = vsel %vm864, %v2960, %v2962
          %v2972 = vsel %vm864, %v2962, %v2964
          %v2985 = vadd.f32 %v2869, %v2965
          %v2986 = vadd.f32 %v2870, %v2966
          %v2987 = vadd.f32 %v2871, %v2946
          %v2988 = vadd.f32 %v2872, %v2967
          %v2989 = vadd.f32 %v2873, %v2968
          %v2990 = vadd.f32 %v2874, %v2952
          %v2991 = vadd.f32 %v2875, %v2969
          %v2992 = vadd.f32 %v2876, %v2970
          %v2993 = vadd.f32 %v2877, %v2958
          %v2994 = vadd.f32 %v2878, %v2971
          %v2995 = vadd.f32 %v2879, %v2972
          %v2996 = vadd.f32 %v2880, %v2964
          %s2997 = sadd.s32 %s798, 22
          %s2998 = sld [smem:[#allocation4 + %s2997]]
          %v2999 = vstv %s2998
          %v3000 = vmul.f32 %v680, %v2999
          %v3001 = vmul.f32 %v682, %v2999
          %v3002 = vmul.f32 %v775, %v2999
          %v3003 = vmul.f32 %v686, %v2999
          %v3004 = vmul.f32 %v688, %v2999
          %v3005 = vmul.f32 %v780, %v2999
          %v3006 = vmul.f32 %v692, %v2999
          %v3007 = vmul.f32 %v694, %v2999
          %v3008 = vmul.f32 %v785, %v2999
          %v3009 = vmul.f32 %v698, %v2999
          %v3010 = vmul.f32 %v700, %v2999
          %v3011 = vmul.f32 %v790, %v2999
          %v3012 = vmul.f32 %v704, %v2999
          %v3013 = vmul.f32 %v706, %v2999
          %v3014 = vmul.f32 %v795, %v2999
          %v3030 = vrot.slane %v3000, 4
          %v3031 = vrot.slane %v3003, 4
          %v3032 = vsel %vm2829, %v3030, %v3031
          %v3033 = vrot.slane %v3001, 4
          %v3034 = vrot.slane %v3004, 4
          %v3035 = vsel %vm2829, %v3033, %v3034
          %v3036 = vrot.slane %v3002, 4
          %v3037 = vrot.slane %v3005, 4
          %v3038 = vsel %vm2829, %v3036, %v3037
          %v3039 = vrot.slane %v3006, 4
          %v3040 = vsel %vm2829, %v3031, %v3039
          %v3041 = vrot.slane %v3007, 4
          %v3042 = vsel %vm2829, %v3034, %v3041
          %v3043 = vrot.slane %v3008, 4
          %v3044 = vsel %vm2829, %v3037, %v3043
          %v3045 = vrot.slane %v3009, 4
          %v3046 = vsel %vm2829, %v3039, %v3045
          %v3047 = vrot.slane %v3010, 4
          %v3048 = vsel %vm2829, %v3041, %v3047
          %v3049 = vrot.slane %v3011, 4
          %v3050 = vsel %vm2829, %v3043, %v3049
          %v3051 = vrot.slane %v3012, 4
          %v3052 = vsel %vm2829, %v3045, %v3051
          %v3053 = vrot.slane %v3013, 4
          %v3054 = vsel %vm2829, %v3047, %v3053
          %v3055 = vrot.slane %v3014, 4
          %v3056 = vsel %vm2829, %v3049, %v3055
          %3057 = vrot.lane.b32.xlu0 %v3032, 126
          %v3058 = vpop.permute.xlu0 %3057
          %3059 = vrot.lane.b32.xlu0 %v3035, 126
          %v3060 = vpop.permute.xlu0 %3059
          %3061 = vrot.lane.b32.xlu0 %v3038, 126
          %v3062 = vpop.permute.xlu0 %3061
          %3063 = vrot.lane.b32.xlu0 %v3040, 126
          %v3064 = vpop.permute.xlu0 %3063
          %3065 = vrot.lane.b32.xlu0 %v3042, 126
          %v3066 = vpop.permute.xlu0 %3065
          %3067 = vrot.lane.b32.xlu0 %v3044, 126
          %v3068 = vpop.permute.xlu0 %3067
          %3069 = vrot.lane.b32.xlu0 %v3046, 126
          %v3070 = vpop.permute.xlu0 %3069
          %3071 = vrot.lane.b32.xlu0 %v3048, 126
          %v3072 = vpop.permute.xlu0 %3071
          %3073 = vrot.lane.b32.xlu0 %v3050, 126
          %v3074 = vpop.permute.xlu0 %3073
          %3075 = vrot.lane.b32.xlu0 %v3052, 126
          %v3076 = vpop.permute.xlu0 %3075
          %3077 = vrot.lane.b32.xlu0 %v3054, 126
          %v3078 = vpop.permute.xlu0 %3077
          %3079 = vrot.lane.b32.xlu0 %v3056, 126
          %v3080 = vpop.permute.xlu0 %3079
          %v3081 = vsel %vm948, %v3058, %v3060
          %v3082 = vsel %vm948, %v3060, %v3062
          %v3083 = vsel %vm948, %v3064, %v3066
          %v3084 = vsel %vm948, %v3066, %v3068
          %v3085 = vsel %vm948, %v3070, %v3072
          %v3086 = vsel %vm948, %v3072, %v3074
          %v3087 = vsel %vm948, %v3076, %v3078
          %v3088 = vsel %vm948, %v3078, %v3080
          %v3101 = vadd.f32 %v2985, %v3081
          %v3102 = vadd.f32 %v2986, %v3082
          %v3103 = vadd.f32 %v2987, %v3062
          %v3104 = vadd.f32 %v2988, %v3083
          %v3105 = vadd.f32 %v2989, %v3084
          %v3106 = vadd.f32 %v2990, %v3068
          %v3107 = vadd.f32 %v2991, %v3085
          %v3108 = vadd.f32 %v2992, %v3086
          %v3109 = vadd.f32 %v2993, %v3074
          %v3110 = vadd.f32 %v2994, %v3087
          %v3111 = vadd.f32 %v2995, %v3088
          %v3112 = vadd.f32 %v2996, %v3080
          %s3113 = sadd.s32 %s798, 23
          %s3114 = sld [smem:[#allocation4 + %s3113]]
          %v3115 = vstv %s3114
          %v3116 = vmul.f32 %v680, %v3115
          %v3117 = vmul.f32 %v682, %v3115
          %v3118 = vmul.f32 %v775, %v3115
          %v3119 = vmul.f32 %v686, %v3115
          %v3120 = vmul.f32 %v688, %v3115
          %v3121 = vmul.f32 %v780, %v3115
          %v3122 = vmul.f32 %v692, %v3115
          %v3123 = vmul.f32 %v694, %v3115
          %v3124 = vmul.f32 %v785, %v3115
          %v3125 = vmul.f32 %v698, %v3115
          %v3126 = vmul.f32 %v700, %v3115
          %v3127 = vmul.f32 %v790, %v3115
          %v3128 = vmul.f32 %v704, %v3115
          %v3129 = vmul.f32 %v706, %v3115
          %v3130 = vmul.f32 %v795, %v3115
          %v3146 = vrot.slane %v3116, 4
          %v3147 = vrot.slane %v3119, 4
          %v3148 = vsel %vm2829, %v3146, %v3147
          %v3149 = vrot.slane %v3117, 4
          %v3150 = vrot.slane %v3120, 4
          %v3151 = vsel %vm2829, %v3149, %v3150
          %v3152 = vrot.slane %v3118, 4
          %v3153 = vrot.slane %v3121, 4
          %v3154 = vsel %vm2829, %v3152, %v3153
          %v3155 = vrot.slane %v3122, 4
          %v3156 = vsel %vm2829, %v3147, %v3155
          %v3157 = vrot.slane %v3123, 4
          %v3158 = vsel %vm2829, %v3150, %v3157
          %v3159 = vrot.slane %v3124, 4
          %v3160 = vsel %vm2829, %v3153, %v3159
          %v3161 = vrot.slane %v3125, 4
          %v3162 = vsel %vm2829, %v3155, %v3161
          %v3163 = vrot.slane %v3126, 4
          %v3164 = vsel %vm2829, %v3157, %v3163
          %v3165 = vrot.slane %v3127, 4
          %v3166 = vsel %vm2829, %v3159, %v3165
          %v3167 = vrot.slane %v3128, 4
          %v3168 = vsel %vm2829, %v3161, %v3167
          %v3169 = vrot.slane %v3129, 4
          %v3170 = vsel %vm2829, %v3163, %v3169
          %v3171 = vrot.slane %v3130, 4
          %v3172 = vsel %vm2829, %v3165, %v3171
          %3173 = vrot.lane.b32.xlu0 %v3148, 125
          %v3174 = vpop.permute.xlu0 %3173
          %3175 = vrot.lane.b32.xlu0 %v3151, 125
          %v3176 = vpop.permute.xlu0 %3175
          %3177 = vrot.lane.b32.xlu0 %v3154, 125
          %v3178 = vpop.permute.xlu0 %3177
          %3179 = vrot.lane.b32.xlu0 %v3156, 125
          %v3180 = vpop.permute.xlu0 %3179
          %3181 = vrot.lane.b32.xlu0 %v3158, 125
          %v3182 = vpop.permute.xlu0 %3181
          %3183 = vrot.lane.b32.xlu0 %v3160, 125
          %v3184 = vpop.permute.xlu0 %3183
          %3185 = vrot.lane.b32.xlu0 %v3162, 125
          %v3186 = vpop.permute.xlu0 %3185
          %3187 = vrot.lane.b32.xlu0 %v3164, 125
          %v3188 = vpop.permute.xlu0 %3187
          %3189 = vrot.lane.b32.xlu0 %v3166, 125
          %v3190 = vpop.permute.xlu0 %3189
          %3191 = vrot.lane.b32.xlu0 %v3168, 125
          %v3192 = vpop.permute.xlu0 %3191
          %3193 = vrot.lane.b32.xlu0 %v3170, 125
          %v3194 = vpop.permute.xlu0 %3193
          %3195 = vrot.lane.b32.xlu0 %v3172, 125
          %v3196 = vpop.permute.xlu0 %3195
          %v3197 = vsel %vm1032, %v3174, %v3176
          %v3198 = vsel %vm1032, %v3176, %v3178
          %v3199 = vsel %vm1032, %v3180, %v3182
          %v3200 = vsel %vm1032, %v3182, %v3184
          %v3201 = vsel %vm1032, %v3186, %v3188
          %v3202 = vsel %vm1032, %v3188, %v3190
          %v3203 = vsel %vm1032, %v3192, %v3194
          %v3204 = vsel %vm1032, %v3194, %v3196
          %v3217 = vadd.f32 %v3101, %v3197
          %v3218 = vadd.f32 %v3102, %v3198
          %v3219 = vadd.f32 %v3103, %v3178
          %v3220 = vadd.f32 %v3104, %v3199
          %v3221 = vadd.f32 %v3105, %v3200
          %v3222 = vadd.f32 %v3106, %v3184
          %v3223 = vadd.f32 %v3107, %v3201
          %v3224 = vadd.f32 %v3108, %v3202
          %v3225 = vadd.f32 %v3109, %v3190
          %v3226 = vadd.f32 %v3110, %v3203
          %v3227 = vadd.f32 %v3111, %v3204
          %v3228 = vadd.f32 %v3112, %v3196
          %s3229 = sadd.s32 %s798, 24
          %s3230 = sld [smem:[#allocation4 + %s3229]]
          %v3231 = vstv %s3230
          %v3232 = vmul.f32 %v680, %v3231
          %v3233 = vmul.f32 %v682, %v3231
          %v3234 = vmul.f32 %v775, %v3231
          %v3235 = vmul.f32 %v686, %v3231
          %v3236 = vmul.f32 %v688, %v3231
          %v3237 = vmul.f32 %v780, %v3231
          %v3238 = vmul.f32 %v692, %v3231
          %v3239 = vmul.f32 %v694, %v3231
          %v3240 = vmul.f32 %v785, %v3231
          %v3241 = vmul.f32 %v698, %v3231
          %v3242 = vmul.f32 %v700, %v3231
          %v3243 = vmul.f32 %v790, %v3231
          %v3244 = vmul.f32 %v704, %v3231
          %v3245 = vmul.f32 %v706, %v3231
          %v3246 = vmul.f32 %v795, %v3231
          %v3262 = vrot.slane %v3232, 4
          %v3263 = vrot.slane %v3235, 4
          %v3264 = vsel %vm2829, %v3262, %v3263
          %v3265 = vrot.slane %v3233, 4
          %v3266 = vrot.slane %v3236, 4
          %v3267 = vsel %vm2829, %v3265, %v3266
          %v3268 = vrot.slane %v3234, 4
          %v3269 = vrot.slane %v3237, 4
          %v3270 = vsel %vm2829, %v3268, %v3269
          %v3271 = vrot.slane %v3238, 4
          %v3272 = vsel %vm2829, %v3263, %v3271
          %v3273 = vrot.slane %v3239, 4
          %v3274 = vsel %vm2829, %v3266, %v3273
          %v3275 = vrot.slane %v3240, 4
          %v3276 = vsel %vm2829, %v3269, %v3275
          %v3277 = vrot.slane %v3241, 4
          %v3278 = vsel %vm2829, %v3271, %v3277
          %v3279 = vrot.slane %v3242, 4
          %v3280 = vsel %vm2829, %v3273, %v3279
          %v3281 = vrot.slane %v3243, 4
          %v3282 = vsel %vm2829, %v3275, %v3281
          %v3283 = vrot.slane %v3244, 4
          %v3284 = vsel %vm2829, %v3277, %v3283
          %v3285 = vrot.slane %v3245, 4
          %v3286 = vsel %vm2829, %v3279, %v3285
          %v3287 = vrot.slane %v3246, 4
          %v3288 = vsel %vm2829, %v3281, %v3287
          %3289 = vrot.lane.b32.xlu0 %v3264, 124
          %v3290 = vpop.permute.xlu0 %3289
          %3291 = vrot.lane.b32.xlu0 %v3267, 124
          %v3292 = vpop.permute.xlu0 %3291
          %3293 = vrot.lane.b32.xlu0 %v3270, 124
          %v3294 = vpop.permute.xlu0 %3293
          %3295 = vrot.lane.b32.xlu0 %v3272, 124
          %v3296 = vpop.permute.xlu0 %3295
          %3297 = vrot.lane.b32.xlu0 %v3274, 124
          %v3298 = vpop.permute.xlu0 %3297
          %3299 = vrot.lane.b32.xlu0 %v3276, 124
          %v3300 = vpop.permute.xlu0 %3299
          %3301 = vrot.lane.b32.xlu0 %v3278, 124
          %v3302 = vpop.permute.xlu0 %3301
          %3303 = vrot.lane.b32.xlu0 %v3280, 124
          %v3304 = vpop.permute.xlu0 %3303
          %3305 = vrot.lane.b32.xlu0 %v3282, 124
          %v3306 = vpop.permute.xlu0 %3305
          %3307 = vrot.lane.b32.xlu0 %v3284, 124
          %v3308 = vpop.permute.xlu0 %3307
          %3309 = vrot.lane.b32.xlu0 %v3286, 124
          %v3310 = vpop.permute.xlu0 %3309
          %3311 = vrot.lane.b32.xlu0 %v3288, 124
          %v3312 = vpop.permute.xlu0 %3311
          %v3313 = vsel %vm1116, %v3290, %v3292
          %v3314 = vsel %vm1116, %v3292, %v3294
          %v3315 = vsel %vm1116, %v3296, %v3298
          %v3316 = vsel %vm1116, %v3298, %v3300
          %v3317 = vsel %vm1116, %v3302, %v3304
          %v3318 = vsel %vm1116, %v3304, %v3306
          %v3319 = vsel %vm1116, %v3308, %v3310
          %v3320 = vsel %vm1116, %v3310, %v3312
          %v3333 = vadd.f32 %v3217, %v3313
          %v3334 = vadd.f32 %v3218, %v3314
          %v3335 = vadd.f32 %v3219, %v3294
          %v3336 = vadd.f32 %v3220, %v3315
          %v3337 = vadd.f32 %v3221, %v3316
          %v3338 = vadd.f32 %v3222, %v3300
          %v3339 = vadd.f32 %v3223, %v3317
          %v3340 = vadd.f32 %v3224, %v3318
          %v3341 = vadd.f32 %v3225, %v3306
          %v3342 = vadd.f32 %v3226, %v3319
          %v3343 = vadd.f32 %v3227, %v3320
          %v3344 = vadd.f32 %v3228, %v3312
          %v3345 = vld [vmem:[%s175] sm:$0xff]
          %v3346 = vld [vmem:[%s175 + $0x8] sm:$0xff]
          %v3347 = vld [vmem:[%s175 + $0x10] sm:$0xff]
          %v3348 = vld [vmem:[%s175 + $0x18] sm:$0xff]
          %v3349 = vld [vmem:[%s175 + $0x20] sm:$0xff]
          %v3350 = vld [vmem:[%s175 + $0x28] sm:$0xff]
          %v3351 = vld [vmem:[%s175 + $0x30] sm:$0xff]
          %v3352 = vld [vmem:[%s175 + $0x38] sm:$0xff]
          %v3353 = vld [vmem:[%s175 + $0x40] sm:$0xff]
          %v3354 = vld [vmem:[%s175 + $0x48] sm:$0xff]
          %v3355 = vld [vmem:[%s175 + $0x50] sm:$0xff]
          %v3356 = vld [vmem:[%s175 + $0x58] sm:$0xff]
          %s3357 = sld [smem:[#allocation5 + %s583]]
          %v3358 = vstv %s3357
          %v3359 = vmul.f32 %v3333, %v3358
          %v3360 = vmul.f32 %v3334, %v3358
          %v3361 = vmul.f32 %v3335, %v3358
          %v3362 = vmul.f32 %v3336, %v3358
          %v3363 = vmul.f32 %v3337, %v3358
          %v3364 = vmul.f32 %v3338, %v3358
          %v3365 = vmul.f32 %v3339, %v3358
          %v3366 = vmul.f32 %v3340, %v3358
          %v3367 = vmul.f32 %v3341, %v3358
          %v3368 = vmul.f32 %v3342, %v3358
          %v3369 = vmul.f32 %v3343, %v3358
          %v3370 = vmul.f32 %v3344, %v3358
          %v3371 = vadd.f32 %v3345, %v3359
          %v3372 = vadd.f32 %v3346, %v3360
          %v3373 = vadd.f32 %v3347, %v3361
          %v3374 = vadd.f32 %v3348, %v3362
          %v3375 = vadd.f32 %v3349, %v3363
          %v3376 = vadd.f32 %v3350, %v3364
          %v3377 = vadd.f32 %v3351, %v3365
          %v3378 = vadd.f32 %v3352, %v3366
          %v3379 = vadd.f32 %v3353, %v3367
          %v3380 = vadd.f32 %v3354, %v3368
          %v3381 = vadd.f32 %v3355, %v3369
          %v3382 = vadd.f32 %v3356, %v3370
          %3383 = vst [vmem:[%s175] sm:$0xff] %v3371
          %3384 = vst [vmem:[%s175 + $0x8] sm:$0xff] %v3372
          %3385 = vst.msk [vmem:[%s175 + $0x10] sm:$0xff] %vm482, %v3373
          %3386 = vst [vmem:[%s175 + $0x18] sm:$0xff] %v3374
          %3387 = vst [vmem:[%s175 + $0x20] sm:$0xff] %v3375
          %3388 = vst.msk [vmem:[%s175 + $0x28] sm:$0xff] %vm482, %v3376
          %3389 = vst [vmem:[%s175 + $0x30] sm:$0xff] %v3377
          %3390 = vst [vmem:[%s175 + $0x38] sm:$0xff] %v3378
          %3391 = vst.msk [vmem:[%s175 + $0x40] sm:$0xff] %vm482, %v3379
          %3392 = vst [vmem:[%s175 + $0x48] sm:$0xff] %v3380
          %3393 = vst [vmem:[%s175 + $0x50] sm:$0xff] %v3381
          %3394 = vst.msk [vmem:[%s175 + $0x58] sm:$0xff] %vm482, %v3382
          %s3395 = scalar_lea.vmem %s175, 96 [#allocation6]
          %v3396 = vld [vmem:[%s3395] sm:$0xff]
          %v3397 = vld [vmem:[%s3395 + $0x8] sm:$0xff]
          %v3398 = vld [vmem:[%s3395 + $0x10] sm:$0xff]
          %v3399 = vld [vmem:[%s3395 + $0x18] sm:$0xff]
          %v3400 = vld [vmem:[%s3395 + $0x20] sm:$0xff]
          %v3401 = vld [vmem:[%s3395 + $0x28] sm:$0xff]
          %v3402 = vld [vmem:[%s3395 + $0x30] sm:$0xff]
          %v3403 = vld [vmem:[%s3395 + $0x38] sm:$0xff]
          %v3404 = vld [vmem:[%s3395 + $0x40] sm:$0xff]
          %v3405 = vld [vmem:[%s3395 + $0x48] sm:$0xff]
          %v3406 = vld [vmem:[%s3395 + $0x50] sm:$0xff]
          %v3407 = vld [vmem:[%s3395 + $0x58] sm:$0xff]
          %s3408 = sadd.s32 %s583, 4
          %s3409 = sld [smem:[#allocation5 + %s3408]]
          %v3410 = vstv %s3409
          %v3411 = vmul.f32 %v3333, %v3410
          %v3412 = vmul.f32 %v3334, %v3410
          %v3413 = vmul.f32 %v3335, %v3410
          %v3414 = vmul.f32 %v3336, %v3410
          %v3415 = vmul.f32 %v3337, %v3410
          %v3416 = vmul.f32 %v3338, %v3410
          %v3417 = vmul.f32 %v3339, %v3410
          %v3418 = vmul.f32 %v3340, %v3410
          %v3419 = vmul.f32 %v3341, %v3410
          %v3420 = vmul.f32 %v3342, %v3410
          %v3421 = vmul.f32 %v3343, %v3410
          %v3422 = vmul.f32 %v3344, %v3410
          %v3423 = vadd.f32 %v3396, %v3411
          %v3424 = vadd.f32 %v3397, %v3412
          %v3425 = vadd.f32 %v3398, %v3413
          %v3426 = vadd.f32 %v3399, %v3414
          %v3427 = vadd.f32 %v3400, %v3415
          %v3428 = vadd.f32 %v3401, %v3416
          %v3429 = vadd.f32 %v3402, %v3417
          %v3430 = vadd.f32 %v3403, %v3418
          %v3431 = vadd.f32 %v3404, %v3419
          %v3432 = vadd.f32 %v3405, %v3420
          %v3433 = vadd.f32 %v3406, %v3421
          %v3434 = vadd.f32 %v3407, %v3422
          %3435 = vst [vmem:[%s3395] sm:$0xff] %v3423
          %3436 = vst [vmem:[%s3395 + $0x8] sm:$0xff] %v3424
          %3437 = vst.msk [vmem:[%s3395 + $0x10] sm:$0xff] %vm482, %v3425
          %3438 = vst [vmem:[%s3395 + $0x18] sm:$0xff] %v3426
          %3439 = vst [vmem:[%s3395 + $0x20] sm:$0xff] %v3427
          %3440 = vst.msk [vmem:[%s3395 + $0x28] sm:$0xff] %vm482, %v3428
          %3441 = vst [vmem:[%s3395 + $0x30] sm:$0xff] %v3429
          %3442 = vst [vmem:[%s3395 + $0x38] sm:$0xff] %v3430
          %3443 = vst.msk [vmem:[%s3395 + $0x40] sm:$0xff] %vm482, %v3431
          %3444 = vst [vmem:[%s3395 + $0x48] sm:$0xff] %v3432
          %3445 = vst [vmem:[%s3395 + $0x50] sm:$0xff] %v3433
          %3446 = vst.msk [vmem:[%s3395 + $0x58] sm:$0xff] %vm482, %v3434
          %s3447 = scalar_lea.vmem %s175, 192 [#allocation6]
          %v3448 = vld [vmem:[%s3447] sm:$0xff]
          %v3449 = vld [vmem:[%s3447 + $0x8] sm:$0xff]
          %v3450 = vld [vmem:[%s3447 + $0x10] sm:$0xff]
          %v3451 = vld [vmem:[%s3447 + $0x18] sm:$0xff]
          %v3452 = vld [vmem:[%s3447 + $0x20] sm:$0xff]
          %v3453 = vld [vmem:[%s3447 + $0x28] sm:$0xff]
          %v3454 = vld [vmem:[%s3447 + $0x30] sm:$0xff]
          %v3455 = vld [vmem:[%s3447 + $0x38] sm:$0xff]
          %v3456 = vld [vmem:[%s3447 + $0x40] sm:$0xff]
          %v3457 = vld [vmem:[%s3447 + $0x48] sm:$0xff]
          %v3458 = vld [vmem:[%s3447 + $0x50] sm:$0xff]
          %v3459 = vld [vmem:[%s3447 + $0x58] sm:$0xff]
          %s3460 = sadd.s32 %s583, 8
          %s3461 = sld [smem:[#allocation5 + %s3460]]
          %v3462 = vstv %s3461
          %v3463 = vmul.f32 %v3333, %v3462
          %v3464 = vmul.f32 %v3334, %v3462
          %v3465 = vmul.f32 %v3335, %v3462
          %v3466 = vmul.f32 %v3336, %v3462
          %v3467 = vmul.f32 %v3337, %v3462
          %v3468 = vmul.f32 %v3338, %v3462
          %v3469 = vmul.f32 %v3339, %v3462
          %v3470 = vmul.f32 %v3340, %v3462
          %v3471 = vmul.f32 %v3341, %v3462
          %v3472 = vmul.f32 %v3342, %v3462
          %v3473 = vmul.f32 %v3343, %v3462
          %v3474 = vmul.f32 %v3344, %v3462
          %v3475 = vadd.f32 %v3448, %v3463
          %v3476 = vadd.f32 %v3449, %v3464
          %v3477 = vadd.f32 %v3450, %v3465
          %v3478 = vadd.f32 %v3451, %v3466
          %v3479 = vadd.f32 %v3452, %v3467
          %v3480 = vadd.f32 %v3453, %v3468
          %v3481 = vadd.f32 %v3454, %v3469
          %v3482 = vadd.f32 %v3455, %v3470
          %v3483 = vadd.f32 %v3456, %v3471
          %v3484 = vadd.f32 %v3457, %v3472
          %v3485 = vadd.f32 %v3458, %v3473
          %v3486 = vadd.f32 %v3459, %v3474
          %3487 = vst [vmem:[%s3447] sm:$0xff] %v3475
          %3488 = vst [vmem:[%s3447 + $0x8] sm:$0xff] %v3476
          %3489 = vst.msk [vmem:[%s3447 + $0x10] sm:$0xff] %vm482, %v3477
          %3490 = vst [vmem:[%s3447 + $0x18] sm:$0xff] %v3478
          %3491 = vst [vmem:[%s3447 + $0x20] sm:$0xff] %v3479
          %3492 = vst.msk [vmem:[%s3447 + $0x28] sm:$0xff] %vm482, %v3480
          %3493 = vst [vmem:[%s3447 + $0x30] sm:$0xff] %v3481
          %3494 = vst [vmem:[%s3447 + $0x38] sm:$0xff] %v3482
          %3495 = vst.msk [vmem:[%s3447 + $0x40] sm:$0xff] %vm482, %v3483
          %3496 = vst [vmem:[%s3447 + $0x48] sm:$0xff] %v3484
          %3497 = vst [vmem:[%s3447 + $0x50] sm:$0xff] %v3485
          %3498 = vst.msk [vmem:[%s3447 + $0x58] sm:$0xff] %vm482, %v3486
          %s3499 = scalar_lea.vmem %s175, 288 [#allocation6]
          %v3500 = vld [vmem:[%s3499] sm:$0xff]
          %v3501 = vld [vmem:[%s3499 + $0x8] sm:$0xff]
          %v3502 = vld [vmem:[%s3499 + $0x10] sm:$0xff]
          %v3503 = vld [vmem:[%s3499 + $0x18] sm:$0xff]
          %v3504 = vld [vmem:[%s3499 + $0x20] sm:$0xff]
          %v3505 = vld [vmem:[%s3499 + $0x28] sm:$0xff]
          %v3506 = vld [vmem:[%s3499 + $0x30] sm:$0xff]
          %v3507 = vld [vmem:[%s3499 + $0x38] sm:$0xff]
          %v3508 = vld [vmem:[%s3499 + $0x40] sm:$0xff]
          %v3509 = vld [vmem:[%s3499 + $0x48] sm:$0xff]
          %v3510 = vld [vmem:[%s3499 + $0x50] sm:$0xff]
          %v3511 = vld [vmem:[%s3499 + $0x58] sm:$0xff]
          %s3512 = sadd.s32 %s583, 12
          %s3513 = sld [smem:[#allocation5 + %s3512]]
          %v3514 = vstv %s3513
          %v3515 = vmul.f32 %v3333, %v3514
          %v3516 = vmul.f32 %v3334, %v3514
          %v3517 = vmul.f32 %v3335, %v3514
          %v3518 = vmul.f32 %v3336, %v3514
          %v3519 = vmul.f32 %v3337, %v3514
          %v3520 = vmul.f32 %v3338, %v3514
          %v3521 = vmul.f32 %v3339, %v3514
          %v3522 = vmul.f32 %v3340, %v3514
          %v3523 = vmul.f32 %v3341, %v3514
          %v3524 = vmul.f32 %v3342, %v3514
          %v3525 = vmul.f32 %v3343, %v3514
          %v3526 = vmul.f32 %v3344, %v3514
          %v3527 = vadd.f32 %v3500, %v3515
          %v3528 = vadd.f32 %v3501, %v3516
          %v3529 = vadd.f32 %v3502, %v3517
          %v3530 = vadd.f32 %v3503, %v3518
          %v3531 = vadd.f32 %v3504, %v3519
          %v3532 = vadd.f32 %v3505, %v3520
          %v3533 = vadd.f32 %v3506, %v3521
          %v3534 = vadd.f32 %v3507, %v3522
          %v3535 = vadd.f32 %v3508, %v3523
          %v3536 = vadd.f32 %v3509, %v3524
          %v3537 = vadd.f32 %v3510, %v3525
          %v3538 = vadd.f32 %v3511, %v3526
          %3539 = vst [vmem:[%s3499] sm:$0xff] %v3527
          %3540 = vst [vmem:[%s3499 + $0x8] sm:$0xff] %v3528
          %3541 = vst.msk [vmem:[%s3499 + $0x10] sm:$0xff] %vm482, %v3529
          %3542 = vst [vmem:[%s3499 + $0x18] sm:$0xff] %v3530
          %3543 = vst [vmem:[%s3499 + $0x20] sm:$0xff] %v3531
          %3544 = vst.msk [vmem:[%s3499 + $0x28] sm:$0xff] %vm482, %v3532
          %3545 = vst [vmem:[%s3499 + $0x30] sm:$0xff] %v3533
          %3546 = vst [vmem:[%s3499 + $0x38] sm:$0xff] %v3534
          %3547 = vst.msk [vmem:[%s3499 + $0x40] sm:$0xff] %vm482, %v3535
          %3548 = vst [vmem:[%s3499 + $0x48] sm:$0xff] %v3536
          %3549 = vst [vmem:[%s3499 + $0x50] sm:$0xff] %v3537
          %3550 = vst.msk [vmem:[%s3499 + $0x58] sm:$0xff] %vm482, %v3538
          %s3551 = scalar_lea.vmem %s175, 384 [#allocation6]
          %v3552 = vld [vmem:[%s3551] sm:$0xff]
          %v3553 = vld [vmem:[%s3551 + $0x8] sm:$0xff]
          %v3554 = vld [vmem:[%s3551 + $0x10] sm:$0xff]
          %v3555 = vld [vmem:[%s3551 + $0x18] sm:$0xff]
          %v3556 = vld [vmem:[%s3551 + $0x20] sm:$0xff]
          %v3557 = vld [vmem:[%s3551 + $0x28] sm:$0xff]
          %v3558 = vld [vmem:[%s3551 + $0x30] sm:$0xff]
          %v3559 = vld [vmem:[%s3551 + $0x38] sm:$0xff]
          %v3560 = vld [vmem:[%s3551 + $0x40] sm:$0xff]
          %v3561 = vld [vmem:[%s3551 + $0x48] sm:$0xff]
          %v3562 = vld [vmem:[%s3551 + $0x50] sm:$0xff]
          %v3563 = vld [vmem:[%s3551 + $0x58] sm:$0xff]
          %s3564 = sadd.s32 %s583, 16
          %s3565 = sld [smem:[#allocation5 + %s3564]]
          %v3566 = vstv %s3565
          %v3567 = vmul.f32 %v3333, %v3566
          %v3568 = vmul.f32 %v3334, %v3566
          %v3569 = vmul.f32 %v3335, %v3566
          %v3570 = vmul.f32 %v3336, %v3566
          %v3571 = vmul.f32 %v3337, %v3566
          %v3572 = vmul.f32 %v3338, %v3566
          %v3573 = vmul.f32 %v3339, %v3566
          %v3574 = vmul.f32 %v3340, %v3566
          %v3575 = vmul.f32 %v3341, %v3566
          %v3576 = vmul.f32 %v3342, %v3566
          %v3577 = vmul.f32 %v3343, %v3566
          %v3578 = vmul.f32 %v3344, %v3566
          %v3579 = vadd.f32 %v3552, %v3567
          %v3580 = vadd.f32 %v3553, %v3568
          %v3581 = vadd.f32 %v3554, %v3569
          %v3582 = vadd.f32 %v3555, %v3570
          %v3583 = vadd.f32 %v3556, %v3571
          %v3584 = vadd.f32 %v3557, %v3572
          %v3585 = vadd.f32 %v3558, %v3573
          %v3586 = vadd.f32 %v3559, %v3574
          %v3587 = vadd.f32 %v3560, %v3575
          %v3588 = vadd.f32 %v3561, %v3576
          %v3589 = vadd.f32 %v3562, %v3577
          %v3590 = vadd.f32 %v3563, %v3578
          %3591 = vst [vmem:[%s3551] sm:$0xff] %v3579
          %3592 = vst [vmem:[%s3551 + $0x8] sm:$0xff] %v3580
          %3593 = vst.msk [vmem:[%s3551 + $0x10] sm:$0xff] %vm482, %v3581
          %3594 = vst [vmem:[%s3551 + $0x18] sm:$0xff] %v3582
          %3595 = vst [vmem:[%s3551 + $0x20] sm:$0xff] %v3583
          %3596 = vst.msk [vmem:[%s3551 + $0x28] sm:$0xff] %vm482, %v3584
          %3597 = vst [vmem:[%s3551 + $0x30] sm:$0xff] %v3585
          %3598 = vst [vmem:[%s3551 + $0x38] sm:$0xff] %v3586
          %3599 = vst.msk [vmem:[%s3551 + $0x40] sm:$0xff] %vm482, %v3587
          %3600 = vst [vmem:[%s3551 + $0x48] sm:$0xff] %v3588
          %3601 = vst [vmem:[%s3551 + $0x50] sm:$0xff] %v3589
          %3602 = vst.msk [vmem:[%s3551 + $0x58] sm:$0xff] %vm482, %v3590
          %s3603 = scalar_lea.vmem %s175, 480 [#allocation6]
          %v3604 = vld [vmem:[%s3603] sm:$0xff]
          %v3605 = vld [vmem:[%s3603 + $0x8] sm:$0xff]
          %v3606 = vld [vmem:[%s3603 + $0x10] sm:$0xff]
          %v3607 = vld [vmem:[%s3603 + $0x18] sm:$0xff]
          %v3608 = vld [vmem:[%s3603 + $0x20] sm:$0xff]
          %v3609 = vld [vmem:[%s3603 + $0x28] sm:$0xff]
          %v3610 = vld [vmem:[%s3603 + $0x30] sm:$0xff]
          %v3611 = vld [vmem:[%s3603 + $0x38] sm:$0xff]
          %v3612 = vld [vmem:[%s3603 + $0x40] sm:$0xff]
          %v3613 = vld [vmem:[%s3603 + $0x48] sm:$0xff]
          %v3614 = vld [vmem:[%s3603 + $0x50] sm:$0xff]
          %v3615 = vld [vmem:[%s3603 + $0x58] sm:$0xff]
          %s3616 = sadd.s32 %s583, 20
          %s3617 = sld [smem:[#allocation5 + %s3616]]
          %v3618 = vstv %s3617
          %v3619 = vmul.f32 %v3333, %v3618
          %v3620 = vmul.f32 %v3334, %v3618
          %v3621 = vmul.f32 %v3335, %v3618
          %v3622 = vmul.f32 %v3336, %v3618
          %v3623 = vmul.f32 %v3337, %v3618
          %v3624 = vmul.f32 %v3338, %v3618
          %v3625 = vmul.f32 %v3339, %v3618
          %v3626 = vmul.f32 %v3340, %v3618
          %v3627 = vmul.f32 %v3341, %v3618
          %v3628 = vmul.f32 %v3342, %v3618
          %v3629 = vmul.f32 %v3343, %v3618
          %v3630 = vmul.f32 %v3344, %v3618
          %v3631 = vadd.f32 %v3604, %v3619
          %v3632 = vadd.f32 %v3605, %v3620
          %v3633 = vadd.f32 %v3606, %v3621
          %v3634 = vadd.f32 %v3607, %v3622
          %v3635 = vadd.f32 %v3608, %v3623
          %v3636 = vadd.f32 %v3609, %v3624
          %v3637 = vadd.f32 %v3610, %v3625
          %v3638 = vadd.f32 %v3611, %v3626
          %v3639 = vadd.f32 %v3612, %v3627
          %v3640 = vadd.f32 %v3613, %v3628
          %v3641 = vadd.f32 %v3614, %v3629
          %v3642 = vadd.f32 %v3615, %v3630
          %3643 = vst [vmem:[%s3603] sm:$0xff] %v3631
          %3644 = vst [vmem:[%s3603 + $0x8] sm:$0xff] %v3632
          %3645 = vst.msk [vmem:[%s3603 + $0x10] sm:$0xff] %vm482, %v3633
          %3646 = vst [vmem:[%s3603 + $0x18] sm:$0xff] %v3634
          %3647 = vst [vmem:[%s3603 + $0x20] sm:$0xff] %v3635
          %3648 = vst.msk [vmem:[%s3603 + $0x28] sm:$0xff] %vm482, %v3636
          %3649 = vst [vmem:[%s3603 + $0x30] sm:$0xff] %v3637
          %3650 = vst [vmem:[%s3603 + $0x38] sm:$0xff] %v3638
          %3651 = vst.msk [vmem:[%s3603 + $0x40] sm:$0xff] %vm482, %v3639
          %3652 = vst [vmem:[%s3603 + $0x48] sm:$0xff] %v3640
          %3653 = vst [vmem:[%s3603 + $0x50] sm:$0xff] %v3641
          %3654 = vst.msk [vmem:[%s3603 + $0x58] sm:$0xff] %vm482, %v3642
          %s3655 = scalar_lea.vmem %s175, 576 [#allocation6]
          %v3656 = vld [vmem:[%s3655] sm:$0xff]
          %v3657 = vld [vmem:[%s3655 + $0x8] sm:$0xff]
          %v3658 = vld [vmem:[%s3655 + $0x10] sm:$0xff]
          %v3659 = vld [vmem:[%s3655 + $0x18] sm:$0xff]
          %v3660 = vld [vmem:[%s3655 + $0x20] sm:$0xff]
          %v3661 = vld [vmem:[%s3655 + $0x28] sm:$0xff]
          %v3662 = vld [vmem:[%s3655 + $0x30] sm:$0xff]
          %v3663 = vld [vmem:[%s3655 + $0x38] sm:$0xff]
          %v3664 = vld [vmem:[%s3655 + $0x40] sm:$0xff]
          %v3665 = vld [vmem:[%s3655 + $0x48] sm:$0xff]
          %v3666 = vld [vmem:[%s3655 + $0x50] sm:$0xff]
          %v3667 = vld [vmem:[%s3655 + $0x58] sm:$0xff]
          %s3668 = sadd.s32 %s583, 24
          %s3669 = sld [smem:[#allocation5 + %s3668]]
          %v3670 = vstv %s3669
          %v3671 = vmul.f32 %v3333, %v3670
          %v3672 = vmul.f32 %v3334, %v3670
          %v3673 = vmul.f32 %v3335, %v3670
          %v3674 = vmul.f32 %v3336, %v3670
          %v3675 = vmul.f32 %v3337, %v3670
          %v3676 = vmul.f32 %v3338, %v3670
          %v3677 = vmul.f32 %v3339, %v3670
          %v3678 = vmul.f32 %v3340, %v3670
          %v3679 = vmul.f32 %v3341, %v3670
          %v3680 = vmul.f32 %v3342, %v3670
          %v3681 = vmul.f32 %v3343, %v3670
          %v3682 = vmul.f32 %v3344, %v3670
          %v3683 = vadd.f32 %v3656, %v3671
          %v3684 = vadd.f32 %v3657, %v3672
          %v3685 = vadd.f32 %v3658, %v3673
          %v3686 = vadd.f32 %v3659, %v3674
          %v3687 = vadd.f32 %v3660, %v3675
          %v3688 = vadd.f32 %v3661, %v3676
          %v3689 = vadd.f32 %v3662, %v3677
          %v3690 = vadd.f32 %v3663, %v3678
          %v3691 = vadd.f32 %v3664, %v3679
          %v3692 = vadd.f32 %v3665, %v3680
          %v3693 = vadd.f32 %v3666, %v3681
          %v3694 = vadd.f32 %v3667, %v3682
          %3695 = vst [vmem:[%s3655] sm:$0xff] %v3683
          %3696 = vst [vmem:[%s3655 + $0x8] sm:$0xff] %v3684
          %3697 = vst.msk [vmem:[%s3655 + $0x10] sm:$0xff] %vm482, %v3685
          %3698 = vst [vmem:[%s3655 + $0x18] sm:$0xff] %v3686
          %3699 = vst [vmem:[%s3655 + $0x20] sm:$0xff] %v3687
          %3700 = vst.msk [vmem:[%s3655 + $0x28] sm:$0xff] %vm482, %v3688
          %3701 = vst [vmem:[%s3655 + $0x30] sm:$0xff] %v3689
          %3702 = vst [vmem:[%s3655 + $0x38] sm:$0xff] %v3690
          %3703 = vst.msk [vmem:[%s3655 + $0x40] sm:$0xff] %vm482, %v3691
          %3704 = vst [vmem:[%s3655 + $0x48] sm:$0xff] %v3692
          %3705 = vst [vmem:[%s3655 + $0x50] sm:$0xff] %v3693
          %3706 = vst.msk [vmem:[%s3655 + $0x58] sm:$0xff] %vm482, %v3694
          %s3707 = scalar_lea.vmem %s175, 672 [#allocation6]
          %v3708 = vld [vmem:[%s3707] sm:$0xff]
          %v3709 = vld [vmem:[%s3707 + $0x8] sm:$0xff]
          %v3710 = vld [vmem:[%s3707 + $0x10] sm:$0xff]
          %v3711 = vld [vmem:[%s3707 + $0x18] sm:$0xff]
          %v3712 = vld [vmem:[%s3707 + $0x20] sm:$0xff]
          %v3713 = vld [vmem:[%s3707 + $0x28] sm:$0xff]
          %v3714 = vld [vmem:[%s3707 + $0x30] sm:$0xff]
          %v3715 = vld [vmem:[%s3707 + $0x38] sm:$0xff]
          %v3716 = vld [vmem:[%s3707 + $0x40] sm:$0xff]
          %v3717 = vld [vmem:[%s3707 + $0x48] sm:$0xff]
          %v3718 = vld [vmem:[%s3707 + $0x50] sm:$0xff]
          %v3719 = vld [vmem:[%s3707 + $0x58] sm:$0xff]
          %s3720 = sadd.s32 %s583, 28
          %s3721 = sld [smem:[#allocation5 + %s3720]]
          %v3722 = vstv %s3721
          %v3723 = vmul.f32 %v3333, %v3722
          %v3724 = vmul.f32 %v3334, %v3722
          %v3725 = vmul.f32 %v3335, %v3722
          %v3726 = vmul.f32 %v3336, %v3722
          %v3727 = vmul.f32 %v3337, %v3722
          %v3728 = vmul.f32 %v3338, %v3722
          %v3729 = vmul.f32 %v3339, %v3722
          %v3730 = vmul.f32 %v3340, %v3722
          %v3731 = vmul.f32 %v3341, %v3722
          %v3732 = vmul.f32 %v3342, %v3722
          %v3733 = vmul.f32 %v3343, %v3722
          %v3734 = vmul.f32 %v3344, %v3722
          %v3735 = vadd.f32 %v3708, %v3723
          %v3736 = vadd.f32 %v3709, %v3724
          %v3737 = vadd.f32 %v3710, %v3725
          %v3738 = vadd.f32 %v3711, %v3726
          %v3739 = vadd.f32 %v3712, %v3727
          %v3740 = vadd.f32 %v3713, %v3728
          %v3741 = vadd.f32 %v3714, %v3729
          %v3742 = vadd.f32 %v3715, %v3730
          %v3743 = vadd.f32 %v3716, %v3731
          %v3744 = vadd.f32 %v3717, %v3732
          %v3745 = vadd.f32 %v3718, %v3733
          %v3746 = vadd.f32 %v3719, %v3734
          %3747 = vst [vmem:[%s3707] sm:$0xff] %v3735
          %3748 = vst [vmem:[%s3707 + $0x8] sm:$0xff] %v3736
          %3749 = vst.msk [vmem:[%s3707 + $0x10] sm:$0xff] %vm482, %v3737
          %3750 = vst [vmem:[%s3707 + $0x18] sm:$0xff] %v3738
          %3751 = vst [vmem:[%s3707 + $0x20] sm:$0xff] %v3739
          %3752 = vst.msk [vmem:[%s3707 + $0x28] sm:$0xff] %vm482, %v3740
          %3753 = vst [vmem:[%s3707 + $0x30] sm:$0xff] %v3741
          %3754 = vst [vmem:[%s3707 + $0x38] sm:$0xff] %v3742
          %3755 = vst.msk [vmem:[%s3707 + $0x40] sm:$0xff] %vm482, %v3743
          %3756 = vst [vmem:[%s3707 + $0x48] sm:$0xff] %v3744
          %3757 = vst [vmem:[%s3707 + $0x50] sm:$0xff] %v3745
          %3758 = vst.msk [vmem:[%s3707 + $0x58] sm:$0xff] %vm482, %v3746
        $region37: #{tpu_custom_call.1} parent=31 // loop_footer
          %s587 = sadd.s32 1, %s583
        $region38: #{tpu_custom_call.1} parent=31 // loop_footer_branch
          %582 = sbr.rel target = $region34
        $region39: #{tpu_custom_call.1} parent=31 // loop_exit
          _
        %s3759 = sand.u32 %s105, 1
        %s3760 = scalar_lea.sflag [#allocation7], %s3759
        %s3761 = sand.u32 %s105, 1
        %s3762 = smul.addr %s3761, 768
        %s3763 = scalar_lea.vmem [#allocation6], %s3762
        // Predicated region
        $region40: #{tpu_custom_call.1} parent=31 // pred_check
          %p3764 = pneg %p115
        $region41: #{tpu_custom_call.1} parent=31 // pred_check_branch
          %3766 = sbr.rel (%p3764) target = $region43
        $region42: #{tpu_custom_call.1} parent=31 // pred_region
          %s3768 = ssub.s32 12288, 12288
          %3769 = vsyncadd %s3760, %s3768
          %s3770 = smul.addr %s29, 96
          %s3771 = smul.addr %s3770, 128
          %s3772 = scalar_lea.hbm %s5, %s3771
          %s3773 = sshll.u32 %s3763, 4
          %s3774 = int_to_ptr.vmem [resolvable:$true] %s3773
          %3779 = dma.vmem_to_hbm [thread:$0]  %s3774, 12288, %s3772, %s3760, 384, 384, 24
        $region43: #{tpu_custom_call.1} parent=31 // pred_fallthru
          _
      $region32: #{tpu_custom_call.1} parent=5 // pred_fallthru
        _
      %p3780 = scmp.le.s32.totalorder 2, %s24
      // Predicated region
      $region44: #{tpu_custom_call.1} parent=5 // pred_check
        %p3781 = pneg %p3780
      $region45: #{tpu_custom_call.1} parent=5 // pred_check_branch
        %3783 = sbr.rel (%p3781) target = $region47
      $region46: #{tpu_custom_call.1} parent=5 // pred_region
        %s3784 = ssub.s32 %s24, 2
        // Predicated region
        $region48: #{tpu_custom_call.1} parent=46 // pred_check
          %p3785 = pneg %p121
        $region49: #{tpu_custom_call.1} parent=46 // pred_check_branch
          %3787 = sbr.rel (%p3785) target = $region51
        $region50: #{tpu_custom_call.1} parent=46 // pred_region
          %s3788 = sand.u32 %s106, 1
          %s3789 = scalar_lea.sflag [#allocation7], %s3788
          %s3790 = sand.u32 %s106, 1
          %s3791 = smul.addr %s3790, 768
          %s3792 = scalar_lea.vmem [#allocation6], %s3791
          %3793 = dma.done %s3789, 12288
        $region51: #{tpu_custom_call.1} parent=46 // pred_fallthru
          _
      $region47: #{tpu_custom_call.1} parent=5 // pred_fallthru
        _
    $region6: #{tpu_custom_call.1} parent=1 // loop_footer
      %s28 = sadd.s32 1, %s24
    $region7: #{tpu_custom_call.1} parent=1 // loop_footer_branch
      %23 = sbr.rel target = $region3
    $region8: #{tpu_custom_call.1} parent=1 // loop_exit
      _
    %3794 = vsyncpa [#allocation7], 1
    %s3795 = scalar_lea.sflag [#allocation7], 1
    %3796 = vsyncpa %s3795, 1

</llo_original>
